<compile_context>
chip_gen: v5e
topology: v5e:2x2
jax: 0.10.0
libtpu: 0.0.40
codegen_flags: <defaults>
</compile_context>

<pallas_src>
import math
import jax
import jax.numpy as jnp
from jax import lax
from jax.experimental import pallas as pl
from jax.experimental.pallas import tpu as pltpu

# ---- model dims (defaults of the torch module) ------------------------------
NUM_ENC_XYZ = 6
NUM_ENC_DIR = 4
DIM_XYZ = 3 + 2 * 3 * NUM_ENC_XYZ          # 39
DIM_DIR = 3 + 2 * 3 * NUM_ENC_DIR          # 27
DIM_IN = DIM_XYZ + 2 * DIM_DIR             # 93
HIDDEN = 128
HIDDEN_HALF = HIDDEN // 2                  # 64
DIM_DIRCAT = HIDDEN + 2 * DIM_DIR          # 182
NUM_LAYERS = 4                             # -> 3 layers_xyz, no skip connections


def _round_up(x, m):
    return ((x + m - 1) // m) * m


# ------------------------------ kernel ---------------------------------------
def _mlp_kernel(xin_ref,
                win_ref, b1_ref,
                wx0_ref, bx0_ref, wx1_ref, bx1_ref, wx2_ref, bx2_ref,
                wf_ref, bf_ref,
                wdf_ref, bd_ref,
                wbr_ref, bb_ref,
                out_ref):
    # (tm, 93) fp32 tile -> bf16 once; weights already bf16; accumulate in fp32.
    xin = xin_ref[...].astype(jnp.bfloat16)

    # Fused MXU pass: [layer1 | view/light half of layers_dir[0]] -> (tm, 192).
    xc = jnp.dot(xin, win_ref[...], preferred_element_type=jnp.float32)
    # layer1 output (NO relu, matching the torch forward); slice is on a 128-lane
    # boundary so it is free.
    x = (xc[:, :HIDDEN] + b1_ref[...]).astype(jnp.bfloat16)          # (tm, 128) bf16
    h_vl = xc[:, HIDDEN:]                                            # (tm, 64) f32

    def lin_relu(a_bf16, w_ref, b_ref):
        y = jnp.dot(a_bf16, w_ref[...], preferred_element_type=jnp.float32) + b_ref[...]
        return jnp.maximum(y, 0.0).astype(jnp.bfloat16)   # only bf16 kept between layers

    # layers_xyz (3 layers, relu each; skip-connect never fires for num_layers=4)
    x = lin_relu(x, wx0_ref, bx0_ref)
    x = lin_relu(x, wx1_ref, bx1_ref)
    x = lin_relu(x, wx2_ref, bx2_ref)

    # fc_feat + relu
    feat = lin_relu(x, wf_ref, bf_ref)

    # layers_dir[0]: cat(feat, view, light) @ Wd == feat @ Wd_feat + (xin @ Wd_vl)
    h = jnp.dot(feat, wdf_ref[...], preferred_element_type=jnp.float32)
    h = jnp.maximum(h + h_vl + bd_ref[...], 0.0).astype(jnp.bfloat16)   # (tm, 64) bf16

    # fc_brdf + sigmoid, emitted lane-dense: (1,64) . (tm,64)^T -> (1, tm),
    # bf16 operands with f32 accumulation (no f32-emulation on the MXU).
    brdf = lax.dot_general(wbr_ref[...], h, (((1,), (1,)), ((), ())),
                           preferred_element_type=jnp.float32) + bb_ref[...]
    out_ref[...] = jax.nn.sigmoid(brdf)


# ------------------------- parameter re-packing ------------------------------
def pack_params(params):
    """Convert torch-style params [(W[in,out], b[1,out]) x7] into kernel layout:
    bf16 matmul weights, fp32 biases. layer1 and the view/light half of the dir
    layer are zero-padded over the full 93-feature input and fused column-wise
    into a single (93, 192) weight; fc_brdf is stored as a bf16 row."""
    (w1, b1), (wx0, bx0), (wx1, bx1), (wx2, bx2), (wf, bf_), (wd, bd), (wb, bb) = params
    f32, bf16 = jnp.float32, jnp.bfloat16

    w1_pad = jnp.zeros((DIM_IN, HIDDEN), f32).at[:DIM_XYZ].set(w1)            # (93,128)
    wdv_pad = jnp.zeros((DIM_IN, HIDDEN_HALF), f32).at[DIM_XYZ:].set(wd[HIDDEN:])  # (93,64)
    w_in = jnp.concatenate([w1_pad, wdv_pad], axis=1).astype(bf16)            # (93,192)
    wd_feat = wd[:HIDDEN].astype(bf16)                                        # (128,64)
    wb_row = wb.reshape(1, HIDDEN_HALF).astype(bf16)                          # (1,64)

    return [
        w_in, b1.astype(f32),
        wx0.astype(bf16), bx0.astype(f32),
        wx1.astype(bf16), bx1.astype(f32),
        wx2.astype(bf16), bx2.astype(f32),
        wf.astype(bf16), bf_.astype(f32),
        wd_feat, bd.astype(f32),
        wb_row, bb.reshape(1, 1).astype(f32),
    ]


# ------------------------------ wrapper ---------------------------------------
def flexible_ir_reflectance_forward(xin, params, *, tm=2048):
    """xin: (N, 93) float32. params: list of 7 (W, b), W as [in, out], b as [1, out].
    tm is the row tile (multiple of 128; default 2048 amortizes per-step overhead)."""
    N, F = xin.shape
    assert F == DIM_IN, f"expected {DIM_IN} input features, got {F}"

    n128 = _round_up(N, 128)
    # Lane-aligned row tile; don't tile wider than the (padded) batch.
    tm = max(128, min(_round_up(tm, 128), n128))
    # Keep the grid >= 2 steps whenever N allows so the "parallel" axis can be
    # spread over both TensorCores on v7x (a 1-step grid idles one core).
    if n128 >= 256:
        tm = min(tm, _round_up(pl.cdiv(N, 2), 128))
    num_tiles = pl.cdiv(N, tm)
    n_pad = num_tiles * tm
    if n_pad != N:
        xin = jnp.pad(xin, ((0, n_pad - N), (0, 0)))   # padded rows are dropped below

    kparams = pack_params(params)

    in_specs = [pl.BlockSpec((tm, DIM_IN), lambda i: (i, 0))]
    # Constant index maps -> weights are DMA'd into VMEM once and reused each step.
    in_specs += [pl.BlockSpec(p.shape, lambda i: (0, 0)) for p in kparams]

    param_bytes = sum(int(p.size) * p.dtype.itemsize for p in kparams)
    flops = 2 * n_pad * (DIM_IN * (HIDDEN + HIDDEN_HALF) + 4 * HIDDEN * HIDDEN
                         + HIDDEN * HIDDEN_HALF + HIDDEN_HALF)
    cost = pl.CostEstimate(
        flops=flops,
        transcendentals=n_pad,                                   # one exp per sigmoid
        bytes_accessed=n_pad * DIM_IN * 4 + n_pad * 4 + param_bytes)

    # Scoped-VMEM sized for the tile: double-buffered input + f32/bf16 intermediates.
    # Covers v5e's 16 MiB default, stays within v7x's 64 MiB physical VMEM.
    vmem_est = 8 * (1 << 20) + 12 * tm * HIDDEN * 4
    vmem_limit = int(min(64 * (1 << 20), max(32 * (1 << 20), vmem_est)))

    out = pl.pallas_call(
        _mlp_kernel,
        out_shape=jax.ShapeDtypeStruct((1, n_pad), jnp.float32),   # lane-dense output slab
        grid_spec=pltpu.PrefetchScalarGridSpec(
            num_scalar_prefetch=0,
            grid=(num_tiles,),
            in_specs=in_specs,
            out_specs=pl.BlockSpec((1, tm), lambda i: (0, i)),
        ),
        compiler_params=pltpu.CompilerParams(
            dimension_semantics=("parallel",),
            vmem_limit_bytes=vmem_limit),
        cost_estimate=cost,
    )(xin, *kparams)

    return out.reshape(n_pad, 1)[:N]


# ---- deterministic parameter init (mimics torch.nn.Linear default init) -----
def _init_linear(key, fan_in, fan_out):
    kw, kb = jax.random.split(key)
    bound = 1.0 / math.sqrt(fan_in)
    w = jax.random.uniform(kw, (fan_in, fan_out), jnp.float32, -bound, bound)
    b = jax.random.uniform(kb, (1, fan_out), jnp.float32, -bound, bound)
    return w, b


def make_params(key):
    keys = jax.random.split(key, 7)
    return [
        _init_linear(keys[0], DIM_XYZ, HIDDEN),          # layer1
        _init_linear(keys[1], HIDDEN, HIDDEN),           # layers_xyz[0]
        _init_linear(keys[2], HIDDEN, HIDDEN),           # layers_xyz[1]
        _init_linear(keys[3], HIDDEN, HIDDEN),           # layers_xyz[2]
        _init_linear(keys[4], HIDDEN, HIDDEN),           # fc_feat
        _init_linear(keys[5], DIM_DIRCAT, HIDDEN_HALF),  # layers_dir[0]
        _init_linear(keys[6], HIDDEN_HALF, 1),           # fc_brdf
    ]


# ------------------------------ references ------------------------------------
def reference_forward(xin, params):
    """Pure fp32 reference with the exact torch forward semantics."""
    (w1, b1), (wx0, bx0), (wx1, bx1), (wx2, bx2), (wf, bf_), (wd, bd), (wb, bb) = params
    xyz = xin[:, :DIM_XYZ]
    viewlight = xin[:, DIM_XYZ:]
    x = xyz @ w1 + b1
    x = jnp.maximum(x @ wx0 + bx0, 0.0)
    x = jnp.maximum(x @ wx1 + bx1, 0.0)
    x = jnp.maximum(x @ wx2 + bx2, 0.0)
    feat = jnp.maximum(x @ wf + bf_, 0.0)
    h = jnp.concatenate([feat, viewlight], axis=-1)
    h = jnp.maximum(h @ wd + bd, 0.0)
    return jax.nn.sigmoid(h @ wb + bb)


def reference_forward_bf16(xin, params):
    """Reference using the same fused-weight / bf16-activation / fp32-accumulate
    recipe as the kernel."""
    (w_in, b1, wx0, bx0, wx1, bx1, wx2, bx2,
     wf, bf_, wdf, bd, wbr, bb) = pack_params(params)
    xb = xin.astype(jnp.bfloat16)

    xc = jnp.dot(xb, w_in, preferred_element_type=jnp.float32)
    x = (xc[:, :HIDDEN] + b1).astype(jnp.bfloat16)
    h_vl = xc[:, HIDDEN:]

    def lin_relu(a, w, b):
        y = jnp.dot(a, w, preferred_element_type=jnp.float32) + b
        return jnp.maximum(y, 0.0).astype(jnp.bfloat16)

    x = lin_relu(x, wx0, bx0)
    x = lin_relu(x, wx1, bx1)
    x = lin_relu(x, wx2, bx2)
    feat = lin_relu(x, wf, bf_)
    h = jnp.dot(feat, wdf, preferred_element_type=jnp.float32)
    h = jnp.maximum(h + h_vl + bd, 0.0).astype(jnp.bfloat16)
    brdf = jnp.dot(h, wbr.T, preferred_element_type=jnp.float32) + bb
    return jax.nn.sigmoid(brdf)


if __name__ == "__main__":
    key = jax.random.PRNGKey(0)
    k_params, k_x = jax.random.split(key)

    params = make_params(k_params)
    N = 1000                                   # deliberately ragged (exercises cdiv + padding)
    xin = jax.random.normal(k_x, (N, DIM_IN), dtype=jnp.float32)

    # default tm=2048 gets clamped to 512 here (>=2 grid steps) -> 2 grid steps.
    out = flexible_ir_reflectance_forward(xin, params)
    out = jax.block_until_ready(out)
    assert out.shape == (N, 1)

    ref_bf16 = reference_forward_bf16(xin, params)   # same precision recipe as the kernel
    ref_f32 = reference_forward(xin, params)         # pure fp32 torch-semantics reference
    assert jnp.allclose(out, ref_bf16, atol=2e-3), "mismatch vs bf16-emulating reference"
    assert jnp.allclose(out, ref_f32, atol=5e-2), "mismatch vs fp32 reference"

    print("KERNEL_OK")
</pallas_src>

<mosaic_0001>
module attributes {stable_mosaic.version = 11 : i64} {
  func.func @_mlp_kernel(%arg0: i32, %arg1: memref<512x93xf32, #tpu.memory_space<vmem>>, %arg2: memref<93x192xbf16, #tpu.memory_space<vmem>>, %arg3: memref<1x128xf32, #tpu.memory_space<vmem>>, %arg4: memref<128x128xbf16, #tpu.memory_space<vmem>>, %arg5: memref<1x128xf32, #tpu.memory_space<vmem>>, %arg6: memref<128x128xbf16, #tpu.memory_space<vmem>>, %arg7: memref<1x128xf32, #tpu.memory_space<vmem>>, %arg8: memref<128x128xbf16, #tpu.memory_space<vmem>>, %arg9: memref<1x128xf32, #tpu.memory_space<vmem>>, %arg10: memref<128x128xbf16, #tpu.memory_space<vmem>>, %arg11: memref<1x128xf32, #tpu.memory_space<vmem>>, %arg12: memref<128x64xbf16, #tpu.memory_space<vmem>>, %arg13: memref<1x64xf32, #tpu.memory_space<vmem>>, %arg14: memref<1x64xbf16, #tpu.memory_space<vmem>>, %arg15: memref<1x1xf32, #tpu.memory_space<vmem>>, %arg16: memref<1x512xf32, #tpu.memory_space<vmem>>) attributes {dimension_semantics = [#tpu.dimension_semantics<parallel>], iteration_bounds = array<i64: 2>, scalar_prefetch = 0 : i64, scratch_operands = 0 : i64, tpu.core_type = #tpu.core_type<tc>, window_params = [{transform_indices = @transform_0, window_bounds = array<i64: 512, 93>}, {pipeline_mode = #tpu.pipeline_mode<synchronous>, transform_indices = @transform_1, window_bounds = array<i64: 93, 192>}, {pipeline_mode = #tpu.pipeline_mode<synchronous>, transform_indices = @transform_2, window_bounds = array<i64: 1, 128>}, {pipeline_mode = #tpu.pipeline_mode<synchronous>, transform_indices = @transform_3, window_bounds = array<i64: 128, 128>}, {pipeline_mode = #tpu.pipeline_mode<synchronous>, transform_indices = @transform_4, window_bounds = array<i64: 1, 128>}, {pipeline_mode = #tpu.pipeline_mode<synchronous>, transform_indices = @transform_5, window_bounds = array<i64: 128, 128>}, {pipeline_mode = #tpu.pipeline_mode<synchronous>, transform_indices = @transform_6, window_bounds = array<i64: 1, 128>}, {pipeline_mode = #tpu.pipeline_mode<synchronous>, transform_indices = @transform_7, window_bounds = array<i64: 128, 128>}, {pipeline_mode = #tpu.pipeline_mode<synchronous>, transform_indices = @transform_8, window_bounds = array<i64: 1, 128>}, {pipeline_mode = #tpu.pipeline_mode<synchronous>, transform_indices = @transform_9, window_bounds = array<i64: 128, 128>}, {pipeline_mode = #tpu.pipeline_mode<synchronous>, transform_indices = @transform_10, window_bounds = array<i64: 1, 128>}, {pipeline_mode = #tpu.pipeline_mode<synchronous>, transform_indices = @transform_11, window_bounds = array<i64: 128, 64>}, {pipeline_mode = #tpu.pipeline_mode<synchronous>, transform_indices = @transform_12, window_bounds = array<i64: 1, 64>}, {pipeline_mode = #tpu.pipeline_mode<synchronous>, transform_indices = @transform_13, window_bounds = array<i64: 1, 64>}, {pipeline_mode = #tpu.pipeline_mode<synchronous>, transform_indices = @transform_14, window_bounds = array<i64: 1, 1>}, {transform_indices = @transform_15, window_bounds = array<i64: 1, 512>}]} {
    %c0 = arith.constant 0 : index
    %c0_0 = arith.constant 0 : index
    %0 = vector.load %arg1[%c0, %c0_0] : memref<512x93xf32, #tpu.memory_space<vmem>>, vector<512x93xf32>
    %1 = arith.truncf %0 : vector<512x93xf32> to vector<512x93xbf16>
    %c0_1 = arith.constant 0 : index
    %c0_2 = arith.constant 0 : index
    %2 = vector.load %arg2[%c0_1, %c0_2] : memref<93x192xbf16, #tpu.memory_space<vmem>>, vector<93x192xbf16>
    %cst = arith.constant dense<0.000000e+00> : vector<512x192xf32>
    %3 = tpu.matmul %1, %2, %cst {dimension_numbers = #tpu.dot_dimension_numbers<[1], [0], [0], [1], [0, 0, 1, 1], [], []>} : vector<512x93xbf16>, vector<93x192xbf16>, vector<512x192xf32> -> vector<512x192xf32>
    %4 = vector.extract_strided_slice %3 {offsets = [0, 0], sizes = [512, 128], strides = [1, 1]} : vector<512x192xf32> to vector<512x128xf32>
    %c0_3 = arith.constant 0 : index
    %c0_4 = arith.constant 0 : index
    %5 = vector.load %arg3[%c0_3, %c0_4] : memref<1x128xf32, #tpu.memory_space<vmem>>, vector<1x128xf32>
    %6 = vector.broadcast %5 : vector<1x128xf32> to vector<512x128xf32>
    %7 = arith.addf %4, %6 : vector<512x128xf32>
    %8 = arith.truncf %7 : vector<512x128xf32> to vector<512x128xbf16>
    %9 = vector.extract_strided_slice %3 {offsets = [0, 128], sizes = [512, 64], strides = [1, 1]} : vector<512x192xf32> to vector<512x64xf32>
    %c0_5 = arith.constant 0 : index
    %c0_6 = arith.constant 0 : index
    %10 = vector.load %arg4[%c0_5, %c0_6] : memref<128x128xbf16, #tpu.memory_space<vmem>>, vector<128x128xbf16>
    %cst_7 = arith.constant dense<0.000000e+00> : vector<512x128xf32>
    %11 = tpu.matmul %8, %10, %cst_7 {dimension_numbers = #tpu.dot_dimension_numbers<[1], [0], [0], [1], [0, 0, 1, 1], [], []>} : vector<512x128xbf16>, vector<128x128xbf16>, vector<512x128xf32> -> vector<512x128xf32>
    %c0_8 = arith.constant 0 : index
    %c0_9 = arith.constant 0 : index
    %12 = vector.load %arg5[%c0_8, %c0_9] : memref<1x128xf32, #tpu.memory_space<vmem>>, vector<1x128xf32>
    %13 = vector.broadcast %12 : vector<1x128xf32> to vector<512x128xf32>
    %14 = arith.addf %11, %13 : vector<512x128xf32>
    %cst_10 = arith.constant 0.000000e+00 : f32
    %15 = vector.broadcast %cst_10 : f32 to vector<512x128xf32>
    %16 = arith.maximumf %14, %15 : vector<512x128xf32>
    %17 = arith.truncf %16 : vector<512x128xf32> to vector<512x128xbf16>
    %c0_11 = arith.constant 0 : index
    %c0_12 = arith.constant 0 : index
    %18 = vector.load %arg6[%c0_11, %c0_12] : memref<128x128xbf16, #tpu.memory_space<vmem>>, vector<128x128xbf16>
    %cst_13 = arith.constant dense<0.000000e+00> : vector<512x128xf32>
    %19 = tpu.matmul %17, %18, %cst_13 {dimension_numbers = #tpu.dot_dimension_numbers<[1], [0], [0], [1], [0, 0, 1, 1], [], []>} : vector<512x128xbf16>, vector<128x128xbf16>, vector<512x128xf32> -> vector<512x128xf32>
    %c0_14 = arith.constant 0 : index
    %c0_15 = arith.constant 0 : index
    %20 = vector.load %arg7[%c0_14, %c0_15] : memref<1x128xf32, #tpu.memory_space<vmem>>, vector<1x128xf32>
    %21 = vector.broadcast %20 : vector<1x128xf32> to vector<512x128xf32>
    %22 = arith.addf %19, %21 : vector<512x128xf32>
    %cst_16 = arith.constant 0.000000e+00 : f32
    %23 = vector.broadcast %cst_16 : f32 to vector<512x128xf32>
    %24 = arith.maximumf %22, %23 : vector<512x128xf32>
    %25 = arith.truncf %24 : vector<512x128xf32> to vector<512x128xbf16>
    %c0_17 = arith.constant 0 : index
    %c0_18 = arith.constant 0 : index
    %26 = vector.load %arg8[%c0_17, %c0_18] : memref<128x128xbf16, #tpu.memory_space<vmem>>, vector<128x128xbf16>
    %cst_19 = arith.constant dense<0.000000e+00> : vector<512x128xf32>
    %27 = tpu.matmul %25, %26, %cst_19 {dimension_numbers = #tpu.dot_dimension_numbers<[1], [0], [0], [1], [0, 0, 1, 1], [], []>} : vector<512x128xbf16>, vector<128x128xbf16>, vector<512x128xf32> -> vector<512x128xf32>
    %c0_20 = arith.constant 0 : index
    %c0_21 = arith.constant 0 : index
    %28 = vector.load %arg9[%c0_20, %c0_21] : memref<1x128xf32, #tpu.memory_space<vmem>>, vector<1x128xf32>
    %29 = vector.broadcast %28 : vector<1x128xf32> to vector<512x128xf32>
    %30 = arith.addf %27, %29 : vector<512x128xf32>
    %cst_22 = arith.constant 0.000000e+00 : f32
    %31 = vector.broadcast %cst_22 : f32 to vector<512x128xf32>
    %32 = arith.maximumf %30, %31 : vector<512x128xf32>
    %33 = arith.truncf %32 : vector<512x128xf32> to vector<512x128xbf16>
    %c0_23 = arith.constant 0 : index
    %c0_24 = arith.constant 0 : index
    %34 = vector.load %arg10[%c0_23, %c0_24] : memref<128x128xbf16, #tpu.memory_space<vmem>>, vector<128x128xbf16>
    %cst_25 = arith.constant dense<0.000000e+00> : vector<512x128xf32>
    %35 = tpu.matmul %33, %34, %cst_25 {dimension_numbers = #tpu.dot_dimension_numbers<[1], [0], [0], [1], [0, 0, 1, 1], [], []>} : vector<512x128xbf16>, vector<128x128xbf16>, vector<512x128xf32> -> vector<512x128xf32>
    %c0_26 = arith.constant 0 : index
    %c0_27 = arith.constant 0 : index
    %36 = vector.load %arg11[%c0_26, %c0_27] : memref<1x128xf32, #tpu.memory_space<vmem>>, vector<1x128xf32>
    %37 = vector.broadcast %36 : vector<1x128xf32> to vector<512x128xf32>
    %38 = arith.addf %35, %37 : vector<512x128xf32>
    %cst_28 = arith.constant 0.000000e+00 : f32
    %39 = vector.broadcast %cst_28 : f32 to vector<512x128xf32>
    %40 = arith.maximumf %38, %39 : vector<512x128xf32>
    %41 = arith.truncf %40 : vector<512x128xf32> to vector<512x128xbf16>
    %c0_29 = arith.constant 0 : index
    %c0_30 = arith.constant 0 : index
    %42 = vector.load %arg12[%c0_29, %c0_30] : memref<128x64xbf16, #tpu.memory_space<vmem>>, vector<128x64xbf16>
    %cst_31 = arith.constant dense<0.000000e+00> : vector<512x64xf32>
    %43 = tpu.matmul %41, %42, %cst_31 {dimension_numbers = #tpu.dot_dimension_numbers<[1], [0], [0], [1], [0, 0, 1, 1], [], []>} : vector<512x128xbf16>, vector<128x64xbf16>, vector<512x64xf32> -> vector<512x64xf32>
    %44 = arith.addf %43, %9 : vector<512x64xf32>
    %c0_32 = arith.constant 0 : index
    %c0_33 = arith.constant 0 : index
    %45 = vector.load %arg13[%c0_32, %c0_33] : memref<1x64xf32, #tpu.memory_space<vmem>>, vector<1x64xf32>
    %46 = vector.broadcast %45 : vector<1x64xf32> to vector<512x64xf32>
    %47 = arith.addf %44, %46 : vector<512x64xf32>
    %cst_34 = arith.constant 0.000000e+00 : f32
    %48 = vector.broadcast %cst_34 : f32 to vector<512x64xf32>
    %49 = arith.maximumf %47, %48 : vector<512x64xf32>
    %50 = arith.truncf %49 : vector<512x64xf32> to vector<512x64xbf16>
    %c0_35 = arith.constant 0 : index
    %c0_36 = arith.constant 0 : index
    %51 = vector.load %arg14[%c0_35, %c0_36] : memref<1x64xbf16, #tpu.memory_space<vmem>>, vector<1x64xbf16>
    %cst_37 = arith.constant dense<0.000000e+00> : vector<1x512xf32>
    %52 = tpu.matmul %51, %50, %cst_37 {dimension_numbers = #tpu.dot_dimension_numbers<[1], [1], [0], [0], [0, 0, 1, 0], [], []>} : vector<1x64xbf16>, vector<512x64xbf16>, vector<1x512xf32> -> vector<1x512xf32>
    %c0_38 = arith.constant 0 : index
    %c0_39 = arith.constant 0 : index
    %53 = vector.load %arg15[%c0_38, %c0_39] : memref<1x1xf32, #tpu.memory_space<vmem>>, vector<1x1xf32>
    %54 = vector.broadcast %53 : vector<1x1xf32> to vector<1x512xf32>
    %55 = arith.addf %52, %54 : vector<1x512xf32>
    %56 = arith.negf %55 : vector<1x512xf32>
    %57 = math.exp %56 : vector<1x512xf32>
    %cst_40 = arith.constant 1.000000e+00 : f32
    %58 = vector.broadcast %cst_40 : f32 to vector<1x512xf32>
    %59 = arith.addf %58, %57 : vector<1x512xf32>
    %60 = arith.divf %58, %59 : vector<1x512xf32>
    %c0_41 = arith.constant 0 : index
    %c0_42 = arith.constant 0 : index
    %61 = vector.load %arg16[%c0_41, %c0_42] : memref<1x512xf32, #tpu.memory_space<vmem>>, vector<1x512xf32>
    tpu.vector_store %arg16[%c0_41, %c0_42], %60 {strides = array<i32>} : memref<1x512xf32, #tpu.memory_space<vmem>>, vector<1x512xf32>,
    return
  }
  func.func @transform_0(%arg0: i32) -> (i32, i32) {
    %c0_i32 = arith.constant 0 : i32
    %c0_i32_0 = arith.constant 0 : i32
    return %arg0, %c0_i32 : i32, i32
  }
  func.func @transform_1(%arg0: i32) -> (i32, i32) {
    %c0_i32 = arith.constant 0 : i32
    %c0_i32_0 = arith.constant 0 : i32
    %c0_i32_1 = arith.constant 0 : i32
    return %c0_i32, %c0_i32_0 : i32, i32
  }
  func.func @transform_2(%arg0: i32) -> (i32, i32) {
    %c0_i32 = arith.constant 0 : i32
    %c0_i32_0 = arith.constant 0 : i32
    %c0_i32_1 = arith.constant 0 : i32
    return %c0_i32, %c0_i32_0 : i32, i32
  }
  func.func @transform_3(%arg0: i32) -> (i32, i32) {
    %c0_i32 = arith.constant 0 : i32
    %c0_i32_0 = arith.constant 0 : i32
    %c0_i32_1 = arith.constant 0 : i32
    return %c0_i32, %c0_i32_0 : i32, i32
  }
  func.func @transform_4(%arg0: i32) -> (i32, i32) {
    %c0_i32 = arith.constant 0 : i32
    %c0_i32_0 = arith.constant 0 : i32
    %c0_i32_1 = arith.constant 0 : i32
    return %c0_i32, %c0_i32_0 : i32, i32
  }
  func.func @transform_5(%arg0: i32) -> (i32, i32) {
    %c0_i32 = arith.constant 0 : i32
    %c0_i32_0 = arith.constant 0 : i32
    %c0_i32_1 = arith.constant 0 : i32
    return %c0_i32, %c0_i32_0 : i32, i32
  }
  func.func @transform_6(%arg0: i32) -> (i32, i32) {
    %c0_i32 = arith.constant 0 : i32
    %c0_i32_0 = arith.constant 0 : i32
    %c0_i32_1 = arith.constant 0 : i32
    return %c0_i32, %c0_i32_0 : i32, i32
  }
  func.func @transform_7(%arg0: i32) -> (i32, i32) {
    %c0_i32 = arith.constant 0 : i32
    %c0_i32_0 = arith.constant 0 : i32
    %c0_i32_1 = arith.constant 0 : i32
    return %c0_i32, %c0_i32_0 : i32, i32
  }
  func.func @transform_8(%arg0: i32) -> (i32, i32) {
    %c0_i32 = arith.constant 0 : i32
    %c0_i32_0 = arith.constant 0 : i32
    %c0_i32_1 = arith.constant 0 : i32
    return %c0_i32, %c0_i32_0 : i32, i32
  }
  func.func @transform_9(%arg0: i32) -> (i32, i32) {
    %c0_i32 = arith.constant 0 : i32
    %c0_i32_0 = arith.constant 0 : i32
    %c0_i32_1 = arith.constant 0 : i32
    return %c0_i32, %c0_i32_0 : i32, i32
  }
  func.func @transform_10(%arg0: i32) -> (i32, i32) {
    %c0_i32 = arith.constant 0 : i32
    %c0_i32_0 = arith.constant 0 : i32
    %c0_i32_1 = arith.constant 0 : i32
    return %c0_i32, %c0_i32_0 : i32, i32
  }
  func.func @transform_11(%arg0: i32) -> (i32, i32) {
    %c0_i32 = arith.constant 0 : i32
    %c0_i32_0 = arith.constant 0 : i32
    %c0_i32_1 = arith.constant 0 : i32
    return %c0_i32, %c0_i32_0 : i32, i32
  }
  func.func @transform_12(%arg0: i32) -> (i32, i32) {
    %c0_i32 = arith.constant 0 : i32
    %c0_i32_0 = arith.constant 0 : i32
    %c0_i32_1 = arith.constant 0 : i32
    return %c0_i32, %c0_i32_0 : i32, i32
  }
  func.func @transform_13(%arg0: i32) -> (i32, i32) {
    %c0_i32 = arith.constant 0 : i32
    %c0_i32_0 = arith.constant 0 : i32
    %c0_i32_1 = arith.constant 0 : i32
    return %c0_i32, %c0_i32_0 : i32, i32
  }
  func.func @transform_14(%arg0: i32) -> (i32, i32) {
    %c0_i32 = arith.constant 0 : i32
    %c0_i32_0 = arith.constant 0 : i32
    %c0_i32_1 = arith.constant 0 : i32
    return %c0_i32, %c0_i32_0 : i32, i32
  }
  func.func @transform_15(%arg0: i32) -> (i32, i32) {
    %c0_i32 = arith.constant 0 : i32
    %c0_i32_0 = arith.constant 0 : i32
    return %c0_i32, %arg0 : i32, i32
  }
}

</mosaic_0001>

<llo_original>
// kernel: tpu_custom_call.1
$region0: #{tpu_custom_call.1}
  #allocation0 [shape = 'u32[]', space=smem, size = 0x4, offset = 0x4, fixed_abs, tag = 'smem constant byte address 0x4 - core index']
  #allocation1 [shape = 'u32[72,128]{1,0:T(1,128)}', space=vmem, size = 0x9000, scoped, tag = 'internal scratch']
  #allocation2 [shape = 'f32[1,1]{1,0:T(1,128)S(1)}', space=vmem, size = 0x200, scoped, tag = 'scoped memory for tpu_custom_call.1']
  %s0 = inlined_call_operand.vmem [shape: f32[1024,93], index: 0, kind: input, shape index: {}]
  %s1 = inlined_call_operand.vmem [shape: bf16[93,192], index: 1, kind: input, shape index: {}]
  %s2 = inlined_call_operand.vmem [shape: f32[1,128], index: 2, kind: input, shape index: {}]
  %s3 = inlined_call_operand.vmem [shape: bf16[128,128], index: 3, kind: input, shape index: {}]
  %s4 = inlined_call_operand.vmem [shape: f32[1,128], index: 4, kind: input, shape index: {}]
  %s5 = inlined_call_operand.vmem [shape: bf16[128,128], index: 5, kind: input, shape index: {}]
  %s6 = inlined_call_operand.vmem [shape: f32[1,128], index: 6, kind: input, shape index: {}]
  %s7 = inlined_call_operand.vmem [shape: bf16[128,128], index: 7, kind: input, shape index: {}]
  %s8 = inlined_call_operand.vmem [shape: f32[1,128], index: 8, kind: input, shape index: {}]
  %s9 = inlined_call_operand.vmem [shape: bf16[128,128], index: 9, kind: input, shape index: {}]
  %s10 = inlined_call_operand.vmem [shape: f32[1,128], index: 10, kind: input, shape index: {}]
  %s11 = inlined_call_operand.vmem [shape: bf16[128,64], index: 11, kind: input, shape index: {}]
  %s12 = inlined_call_operand.vmem [shape: f32[1,64], index: 12, kind: input, shape index: {}]
  %s13 = inlined_call_operand.vmem [shape: bf16[1,64], index: 13, kind: input, shape index: {}]
  %s14 = inlined_call_operand.<no memory space> [shape: f32[1,1], index: 14, kind: input, shape index: {}]
  %s15 = inlined_call_operand.hbm [shape: f32[1,1024], index: 15, kind: output, shape index: {}]
  %s16 = sld [smem:[#allocation0]]
  $region93: #{tpu_custom_call.1} parent=0
    _
  %s18 = ssub.s32 1, %s16
  %s19 = scalar_select 0, %s18, %s16
  %v20 = vstv %s14
  %21 = vst [vmem:[#allocation2] sm:$0x1] %v20
  $region1: #{tpu_custom_call.1} parent=0
    #allocation3 [shape = 'u8[4096]{0}', space=vmem, size = 0x1000, scoped, tag = 'output window, operand 0']
    #allocation4 [shape = 's32[2]{0}', space=sflag, size = 0x8, scoped, tag = 'scoped memory for tpu_custom_call.1']
    %22 = vsyncpa [#allocation4], 0
    %s23 = scalar_lea.sflag [#allocation4], 1
    %24 = vsyncpa %s23, 0
    loop: start=0, step=1, limit=4
    $region2: #{tpu_custom_call.1} parent=1 // loop_pre_header
      _
    $region3: #{tpu_custom_call.1} parent=1 // loop_header
      %s26 = sphi 0, %s30
      %p27 = scmp.ge.s32.totalorder %s26, 4
      %s36 = sphi 0, %s38
      %s39 = sphi 0, %s36
      %s40 = sphi 0, %s39
      %s56 = sphi 0, %s40
      %s60 = sphi 0, %s60
      %s62 = sphi 0, %s60
      %s63 = sphi 0, %s62
      %s77 = sphi 0, %s63
      %s81 = sphi 0, %s81
      %s83 = sphi 0, %s81
      %s84 = sphi 0, %s83
      %s98 = sphi 0, %s84
      %s102 = sphi 0, %s102
      %s104 = sphi 0, %s102
      %s105 = sphi 0, %s104
      %s119 = sphi 0, %s105
      %s123 = sphi 0, %s123
      %s125 = sphi 0, %s123
      %s126 = sphi 0, %s125
      %s140 = sphi 0, %s126
      %s144 = sphi 0, %s144
      %s146 = sphi 0, %s144
      %s147 = sphi 0, %s146
      %s161 = sphi 0, %s147
      %s165 = sphi 0, %s165
      %s167 = sphi 0, %s165
      %s168 = sphi 0, %s167
      %s182 = sphi 0, %s168
      %s186 = sphi 0, %s186
      %s188 = sphi 0, %s186
      %s189 = sphi 0, %s188
      %s203 = sphi 0, %s189
      %s207 = sphi 0, %s207
      %s209 = sphi 0, %s207
      %s210 = sphi 0, %s209
      %s224 = sphi 0, %s210
      %s228 = sphi 0, %s228
      %s230 = sphi 0, %s228
      %s231 = sphi 0, %s230
      %s245 = sphi 0, %s231
      %s249 = sphi 0, %s249
      %s251 = sphi 0, %s249
      %s252 = sphi 0, %s251
      %s266 = sphi 0, %s252
      %s270 = sphi 0, %s270
      %s272 = sphi 0, %s270
      %s273 = sphi 0, %s272
      %s287 = sphi 0, %s273
      %s291 = sphi 0, %s291
      %s293 = sphi 0, %s291
      %s294 = sphi 0, %s293
      %s308 = sphi 0, %s294
      %s312 = sphi 0, %s312
      %s314 = sphi 0, %s312
      %s315 = sphi 0, %s314
      %s329 = sphi 0, %s315
      %s333 = sphi 0, %s333
      %s335 = sphi 0, %s333
      %s336 = sphi 0, %s335
      %s350 = sphi 0, %s336
      %s356 = sphi 0, %s358
      %s359 = sphi 0, %s356
      %s360 = sphi 0, %s359
      %s376 = sphi 0, %s360
    $region4: #{tpu_custom_call.1} parent=1 // loop_header_branch
      %29 = sbr.rel (%p27) target = $region8
    $region5: #{tpu_custom_call.1} parent=1 // loop_body
      %s31 = ssub.s32 %s26, 1
      %s32 = ssub.s32 %s26, 2
      %s33 = sadd.s32 %s26, 1
      %s34 = ssub.s32 %s26, %s33
      %p35 = scmp.eq.s32.totalorder %s34, 0
      %s37 = sadd.s32 %s36, 1
      %s38 = scalar_select %p35, %s36, %s37
      %p41 = pneg %p35
      %p42 = scmp.eq.s32.totalorder %s26, 1
      %p43 = por %p41, %p42
      %p44 = scmp.ne.s32.totalorder %s36, %s39
      %p45 = scmp.eq.s32.totalorder %s26, 0
      %p46 = por %p44, %p45
      %p47 = scmp.ne.s32.totalorder %s36, %s39
      %p48 = scmp.eq.s32.totalorder %s31, 1
      %p49 = por %p47, %p48
      %p50 = scmp.ne.s32.totalorder %s39, %s40
      %p51 = scmp.eq.s32.totalorder %s31, 0
      %p52 = por %p50, %p51
      %p53 = scmp.ne.s32.totalorder %s39, %s40
      %p54 = scmp.eq.s32.totalorder %s32, 1
      %p55 = por %p53, %p54
      %p57 = scmp.ne.s32.totalorder %s40, %s56
      %p58 = scmp.eq.s32.totalorder %s32, 0
      %p59 = por %p57, %p58
      %s61 = sadd.s32 %s60, 1
      %p64 = scmp.eq.s32.totalorder %s26, 1
      %p65 = scmp.ne.s32.totalorder %s60, %s62
      %p66 = scmp.eq.s32.totalorder %s26, 0
      %p67 = por %p65, %p66
      %p68 = scmp.ne.s32.totalorder %s60, %s62
      %p69 = scmp.eq.s32.totalorder %s31, 1
      %p70 = por %p68, %p69
      %p71 = scmp.ne.s32.totalorder %s62, %s63
      %p72 = scmp.eq.s32.totalorder %s31, 0
      %p73 = por %p71, %p72
      %p74 = scmp.ne.s32.totalorder %s62, %s63
      %p75 = scmp.eq.s32.totalorder %s32, 1
      %p76 = por %p74, %p75
      %p78 = scmp.ne.s32.totalorder %s63, %s77
      %p79 = scmp.eq.s32.totalorder %s32, 0
      %p80 = por %p78, %p79
      %s82 = sadd.s32 %s81, 1
      %p85 = scmp.eq.s32.totalorder %s26, 1
      %p86 = scmp.ne.s32.totalorder %s81, %s83
      %p87 = scmp.eq.s32.totalorder %s26, 0
      %p88 = por %p86, %p87
      %p89 = scmp.ne.s32.totalorder %s81, %s83
      %p90 = scmp.eq.s32.totalorder %s31, 1
      %p91 = por %p89, %p90
      %p92 = scmp.ne.s32.totalorder %s83, %s84
      %p93 = scmp.eq.s32.totalorder %s31, 0
      %p94 = por %p92, %p93
      %p95 = scmp.ne.s32.totalorder %s83, %s84
      %p96 = scmp.eq.s32.totalorder %s32, 1
      %p97 = por %p95, %p96
      %p99 = scmp.ne.s32.totalorder %s84, %s98
      %p100 = scmp.eq.s32.totalorder %s32, 0
      %p101 = por %p99, %p100
      %s103 = sadd.s32 %s102, 1
      %p106 = scmp.eq.s32.totalorder %s26, 1
      %p107 = scmp.ne.s32.totalorder %s102, %s104
      %p108 = scmp.eq.s32.totalorder %s26, 0
      %p109 = por %p107, %p108
      %p110 = scmp.ne.s32.totalorder %s102, %s104
      %p111 = scmp.eq.s32.totalorder %s31, 1
      %p112 = por %p110, %p111
      %p113 = scmp.ne.s32.totalorder %s104, %s105
      %p114 = scmp.eq.s32.totalorder %s31, 0
      %p115 = por %p113, %p114
      %p116 = scmp.ne.s32.totalorder %s104, %s105
      %p117 = scmp.eq.s32.totalorder %s32, 1
      %p118 = por %p116, %p117
      %p120 = scmp.ne.s32.totalorder %s105, %s119
      %p121 = scmp.eq.s32.totalorder %s32, 0
      %p122 = por %p120, %p121
      %s124 = sadd.s32 %s123, 1
      %p127 = scmp.eq.s32.totalorder %s26, 1
      %p128 = scmp.ne.s32.totalorder %s123, %s125
      %p129 = scmp.eq.s32.totalorder %s26, 0
      %p130 = por %p128, %p129
      %p131 = scmp.ne.s32.totalorder %s123, %s125
      %p132 = scmp.eq.s32.totalorder %s31, 1
      %p133 = por %p131, %p132
      %p134 = scmp.ne.s32.totalorder %s125, %s126
      %p135 = scmp.eq.s32.totalorder %s31, 0
      %p136 = por %p134, %p135
      %p137 = scmp.ne.s32.totalorder %s125, %s126
      %p138 = scmp.eq.s32.totalorder %s32, 1
      %p139 = por %p137, %p138
      %p141 = scmp.ne.s32.totalorder %s126, %s140
      %p142 = scmp.eq.s32.totalorder %s32, 0
      %p143 = por %p141, %p142
      %s145 = sadd.s32 %s144, 1
      %p148 = scmp.eq.s32.totalorder %s26, 1
      %p149 = scmp.ne.s32.totalorder %s144, %s146
      %p150 = scmp.eq.s32.totalorder %s26, 0
      %p151 = por %p149, %p150
      %p152 = scmp.ne.s32.totalorder %s144, %s146
      %p153 = scmp.eq.s32.totalorder %s31, 1
      %p154 = por %p152, %p153
      %p155 = scmp.ne.s32.totalorder %s146, %s147
      %p156 = scmp.eq.s32.totalorder %s31, 0
      %p157 = por %p155, %p156
      %p158 = scmp.ne.s32.totalorder %s146, %s147
      %p159 = scmp.eq.s32.totalorder %s32, 1
      %p160 = por %p158, %p159
      %p162 = scmp.ne.s32.totalorder %s147, %s161
      %p163 = scmp.eq.s32.totalorder %s32, 0
      %p164 = por %p162, %p163
      %s166 = sadd.s32 %s165, 1
      %p169 = scmp.eq.s32.totalorder %s26, 1
      %p170 = scmp.ne.s32.totalorder %s165, %s167
      %p171 = scmp.eq.s32.totalorder %s26, 0
      %p172 = por %p170, %p171
      %p173 = scmp.ne.s32.totalorder %s165, %s167
      %p174 = scmp.eq.s32.totalorder %s31, 1
      %p175 = por %p173, %p174
      %p176 = scmp.ne.s32.totalorder %s167, %s168
      %p177 = scmp.eq.s32.totalorder %s31, 0
      %p178 = por %p176, %p177
      %p179 = scmp.ne.s32.totalorder %s167, %s168
      %p180 = scmp.eq.s32.totalorder %s32, 1
      %p181 = por %p179, %p180
      %p183 = scmp.ne.s32.totalorder %s168, %s182
      %p184 = scmp.eq.s32.totalorder %s32, 0
      %p185 = por %p183, %p184
      %s187 = sadd.s32 %s186, 1
      %p190 = scmp.eq.s32.totalorder %s26, 1
      %p191 = scmp.ne.s32.totalorder %s186, %s188
      %p192 = scmp.eq.s32.totalorder %s26, 0
      %p193 = por %p191, %p192
      %p194 = scmp.ne.s32.totalorder %s186, %s188
      %p195 = scmp.eq.s32.totalorder %s31, 1
      %p196 = por %p194, %p195
      %p197 = scmp.ne.s32.totalorder %s188, %s189
      %p198 = scmp.eq.s32.totalorder %s31, 0
      %p199 = por %p197, %p198
      %p200 = scmp.ne.s32.totalorder %s188, %s189
      %p201 = scmp.eq.s32.totalorder %s32, 1
      %p202 = por %p200, %p201
      %p204 = scmp.ne.s32.totalorder %s189, %s203
      %p205 = scmp.eq.s32.totalorder %s32, 0
      %p206 = por %p204, %p205
      %s208 = sadd.s32 %s207, 1
      %p211 = scmp.eq.s32.totalorder %s26, 1
      %p212 = scmp.ne.s32.totalorder %s207, %s209
      %p213 = scmp.eq.s32.totalorder %s26, 0
      %p214 = por %p212, %p213
      %p215 = scmp.ne.s32.totalorder %s207, %s209
      %p216 = scmp.eq.s32.totalorder %s31, 1
      %p217 = por %p215, %p216
      %p218 = scmp.ne.s32.totalorder %s209, %s210
      %p219 = scmp.eq.s32.totalorder %s31, 0
      %p220 = por %p218, %p219
      %p221 = scmp.ne.s32.totalorder %s209, %s210
      %p222 = scmp.eq.s32.totalorder %s32, 1
      %p223 = por %p221, %p222
      %p225 = scmp.ne.s32.totalorder %s210, %s224
      %p226 = scmp.eq.s32.totalorder %s32, 0
      %p227 = por %p225, %p226
      %s229 = sadd.s32 %s228, 1
      %p232 = scmp.eq.s32.totalorder %s26, 1
      %p233 = scmp.ne.s32.totalorder %s228, %s230
      %p234 = scmp.eq.s32.totalorder %s26, 0
      %p235 = por %p233, %p234
      %p236 = scmp.ne.s32.totalorder %s228, %s230
      %p237 = scmp.eq.s32.totalorder %s31, 1
      %p238 = por %p236, %p237
      %p239 = scmp.ne.s32.totalorder %s230, %s231
      %p240 = scmp.eq.s32.totalorder %s31, 0
      %p241 = por %p239, %p240
      %p242 = scmp.ne.s32.totalorder %s230, %s231
      %p243 = scmp.eq.s32.totalorder %s32, 1
      %p244 = por %p242, %p243
      %p246 = scmp.ne.s32.totalorder %s231, %s245
      %p247 = scmp.eq.s32.totalorder %s32, 0
      %p248 = por %p246, %p247
      %s250 = sadd.s32 %s249, 1
      %p253 = scmp.eq.s32.totalorder %s26, 1
      %p254 = scmp.ne.s32.totalorder %s249, %s251
      %p255 = scmp.eq.s32.totalorder %s26, 0
      %p256 = por %p254, %p255
      %p257 = scmp.ne.s32.totalorder %s249, %s251
      %p258 = scmp.eq.s32.totalorder %s31, 1
      %p259 = por %p257, %p258
      %p260 = scmp.ne.s32.totalorder %s251, %s252
      %p261 = scmp.eq.s32.totalorder %s31, 0
      %p262 = por %p260, %p261
      %p263 = scmp.ne.s32.totalorder %s251, %s252
      %p264 = scmp.eq.s32.totalorder %s32, 1
      %p265 = por %p263, %p264
      %p267 = scmp.ne.s32.totalorder %s252, %s266
      %p268 = scmp.eq.s32.totalorder %s32, 0
      %p269 = por %p267, %p268
      %s271 = sadd.s32 %s270, 1
      %p274 = scmp.eq.s32.totalorder %s26, 1
      %p275 = scmp.ne.s32.totalorder %s270, %s272
      %p276 = scmp.eq.s32.totalorder %s26, 0
      %p277 = por %p275, %p276
      %p278 = scmp.ne.s32.totalorder %s270, %s272
      %p279 = scmp.eq.s32.totalorder %s31, 1
      %p280 = por %p278, %p279
      %p281 = scmp.ne.s32.totalorder %s272, %s273
      %p282 = scmp.eq.s32.totalorder %s31, 0
      %p283 = por %p281, %p282
      %p284 = scmp.ne.s32.totalorder %s272, %s273
      %p285 = scmp.eq.s32.totalorder %s32, 1
      %p286 = por %p284, %p285
      %p288 = scmp.ne.s32.totalorder %s273, %s287
      %p289 = scmp.eq.s32.totalorder %s32, 0
      %p290 = por %p288, %p289
      %s292 = sadd.s32 %s291, 1
      %p295 = scmp.eq.s32.totalorder %s26, 1
      %p296 = scmp.ne.s32.totalorder %s291, %s293
      %p297 = scmp.eq.s32.totalorder %s26, 0
      %p298 = por %p296, %p297
      %p299 = scmp.ne.s32.totalorder %s291, %s293
      %p300 = scmp.eq.s32.totalorder %s31, 1
      %p301 = por %p299, %p300
      %p302 = scmp.ne.s32.totalorder %s293, %s294
      %p303 = scmp.eq.s32.totalorder %s31, 0
      %p304 = por %p302, %p303
      %p305 = scmp.ne.s32.totalorder %s293, %s294
      %p306 = scmp.eq.s32.totalorder %s32, 1
      %p307 = por %p305, %p306
      %p309 = scmp.ne.s32.totalorder %s294, %s308
      %p310 = scmp.eq.s32.totalorder %s32, 0
      %p311 = por %p309, %p310
      %s313 = sadd.s32 %s312, 1
      %p316 = scmp.eq.s32.totalorder %s26, 1
      %p317 = scmp.ne.s32.totalorder %s312, %s314
      %p318 = scmp.eq.s32.totalorder %s26, 0
      %p319 = por %p317, %p318
      %p320 = scmp.ne.s32.totalorder %s312, %s314
      %p321 = scmp.eq.s32.totalorder %s31, 1
      %p322 = por %p320, %p321
      %p323 = scmp.ne.s32.totalorder %s314, %s315
      %p324 = scmp.eq.s32.totalorder %s31, 0
      %p325 = por %p323, %p324
      %p326 = scmp.ne.s32.totalorder %s314, %s315
      %p327 = scmp.eq.s32.totalorder %s32, 1
      %p328 = por %p326, %p327
      %p330 = scmp.ne.s32.totalorder %s315, %s329
      %p331 = scmp.eq.s32.totalorder %s32, 0
      %p332 = por %p330, %p331
      %s334 = sadd.s32 %s333, 1
      %p337 = scmp.eq.s32.totalorder %s26, 1
      %p338 = scmp.ne.s32.totalorder %s333, %s335
      %p339 = scmp.eq.s32.totalorder %s26, 0
      %p340 = por %p338, %p339
      %p341 = scmp.ne.s32.totalorder %s333, %s335
      %p342 = scmp.eq.s32.totalorder %s31, 1
      %p343 = por %p341, %p342
      %p344 = scmp.ne.s32.totalorder %s335, %s336
      %p345 = scmp.eq.s32.totalorder %s31, 0
      %p346 = por %p344, %p345
      %p347 = scmp.ne.s32.totalorder %s335, %s336
      %p348 = scmp.eq.s32.totalorder %s32, 1
      %p349 = por %p347, %p348
      %p351 = scmp.ne.s32.totalorder %s336, %s350
      %p352 = scmp.eq.s32.totalorder %s32, 0
      %p353 = por %p351, %p352
      %s354 = ssub.s32 %s26, %s33
      %p355 = scmp.eq.s32.totalorder %s354, 0
      %s357 = sadd.s32 %s356, 1
      %s358 = scalar_select %p355, %s356, %s357
      %p361 = pneg %p355
      %p362 = scmp.eq.s32.totalorder %s26, 1
      %p363 = por %p361, %p362
      %p364 = scmp.ne.s32.totalorder %s356, %s359
      %p365 = scmp.eq.s32.totalorder %s26, 0
      %p366 = por %p364, %p365
      %p367 = scmp.ne.s32.totalorder %s356, %s359
      %p368 = scmp.eq.s32.totalorder %s31, 1
      %p369 = por %p367, %p368
      %p370 = scmp.ne.s32.totalorder %s359, %s360
      %p371 = scmp.eq.s32.totalorder %s31, 0
      %p372 = por %p370, %p371
      %p373 = scmp.ne.s32.totalorder %s359, %s360
      %p374 = scmp.eq.s32.totalorder %s32, 1
      %p375 = por %p373, %p374
      %p377 = scmp.ne.s32.totalorder %s360, %s376
      %p378 = scmp.eq.s32.totalorder %s32, 0
      %p379 = por %p377, %p378
      %p380 = scmp.le.s32.totalorder 1, %s26
      %p381 = scmp.lt.s32.totalorder %s26, 3
      %p382 = pnand %p380, %p381
      %p383 = pneg %p382
      // Predicated region
      $region9: #{tpu_custom_call.1} parent=5 // pred_check
        _
      $region10: #{tpu_custom_call.1} parent=5 // pred_check_branch
        %385 = sbr.rel (%p382) target = $region12
      $region11: #{tpu_custom_call.1} parent=5 // pred_region
        %s386 = ssub.s32 %s26, 1
        // Predicated region
        $region13: #{tpu_custom_call.1} parent=11 // pred_check
          %p387 = pneg %p73
        $region14: #{tpu_custom_call.1} parent=11 // pred_check_branch
          %389 = sbr.rel (%p387) target = $region16
        $region15: #{tpu_custom_call.1} parent=11 // pred_region
          _
        $region16: #{tpu_custom_call.1} parent=11 // pred_fallthru
          _
        // Predicated region
        $region17: #{tpu_custom_call.1} parent=11 // pred_check
          %p390 = pneg %p94
        $region18: #{tpu_custom_call.1} parent=11 // pred_check_branch
          %392 = sbr.rel (%p390) target = $region20
        $region19: #{tpu_custom_call.1} parent=11 // pred_region
          _
        $region20: #{tpu_custom_call.1} parent=11 // pred_fallthru
          _
        // Predicated region
        $region21: #{tpu_custom_call.1} parent=11 // pred_check
          %p393 = pneg %p115
        $region22: #{tpu_custom_call.1} parent=11 // pred_check_branch
          %395 = sbr.rel (%p393) target = $region24
        $region23: #{tpu_custom_call.1} parent=11 // pred_region
          _
        $region24: #{tpu_custom_call.1} parent=11 // pred_fallthru
          _
        // Predicated region
        $region25: #{tpu_custom_call.1} parent=11 // pred_check
          %p396 = pneg %p136
        $region26: #{tpu_custom_call.1} parent=11 // pred_check_branch
          %398 = sbr.rel (%p396) target = $region28
        $region27: #{tpu_custom_call.1} parent=11 // pred_region
          _
        $region28: #{tpu_custom_call.1} parent=11 // pred_fallthru
          _
        // Predicated region
        $region29: #{tpu_custom_call.1} parent=11 // pred_check
          %p399 = pneg %p157
        $region30: #{tpu_custom_call.1} parent=11 // pred_check_branch
          %401 = sbr.rel (%p399) target = $region32
        $region31: #{tpu_custom_call.1} parent=11 // pred_region
          _
        $region32: #{tpu_custom_call.1} parent=11 // pred_fallthru
          _
        // Predicated region
        $region33: #{tpu_custom_call.1} parent=11 // pred_check
          %p402 = pneg %p178
        $region34: #{tpu_custom_call.1} parent=11 // pred_check_branch
          %404 = sbr.rel (%p402) target = $region36
        $region35: #{tpu_custom_call.1} parent=11 // pred_region
          _
        $region36: #{tpu_custom_call.1} parent=11 // pred_fallthru
          _
        // Predicated region
        $region37: #{tpu_custom_call.1} parent=11 // pred_check
          %p405 = pneg %p199
        $region38: #{tpu_custom_call.1} parent=11 // pred_check_branch
          %407 = sbr.rel (%p405) target = $region40
        $region39: #{tpu_custom_call.1} parent=11 // pred_region
          _
        $region40: #{tpu_custom_call.1} parent=11 // pred_fallthru
          _
        // Predicated region
        $region41: #{tpu_custom_call.1} parent=11 // pred_check
          %p408 = pneg %p220
        $region42: #{tpu_custom_call.1} parent=11 // pred_check_branch
          %410 = sbr.rel (%p408) target = $region44
        $region43: #{tpu_custom_call.1} parent=11 // pred_region
          _
        $region44: #{tpu_custom_call.1} parent=11 // pred_fallthru
          _
        // Predicated region
        $region45: #{tpu_custom_call.1} parent=11 // pred_check
          %p411 = pneg %p241
        $region46: #{tpu_custom_call.1} parent=11 // pred_check_branch
          %413 = sbr.rel (%p411) target = $region48
        $region47: #{tpu_custom_call.1} parent=11 // pred_region
          _
        $region48: #{tpu_custom_call.1} parent=11 // pred_fallthru
          _
        // Predicated region
        $region49: #{tpu_custom_call.1} parent=11 // pred_check
          %p414 = pneg %p262
        $region50: #{tpu_custom_call.1} parent=11 // pred_check_branch
          %416 = sbr.rel (%p414) target = $region52
        $region51: #{tpu_custom_call.1} parent=11 // pred_region
          _
        $region52: #{tpu_custom_call.1} parent=11 // pred_fallthru
          _
        // Predicated region
        $region53: #{tpu_custom_call.1} parent=11 // pred_check
          %p417 = pneg %p283
        $region54: #{tpu_custom_call.1} parent=11 // pred_check_branch
          %419 = sbr.rel (%p417) target = $region56
        $region55: #{tpu_custom_call.1} parent=11 // pred_region
          _
        $region56: #{tpu_custom_call.1} parent=11 // pred_fallthru
          _
        // Predicated region
        $region57: #{tpu_custom_call.1} parent=11 // pred_check
          %p420 = pneg %p304
        $region58: #{tpu_custom_call.1} parent=11 // pred_check_branch
          %422 = sbr.rel (%p420) target = $region60
        $region59: #{tpu_custom_call.1} parent=11 // pred_region
          _
        $region60: #{tpu_custom_call.1} parent=11 // pred_fallthru
          _
        // Predicated region
        $region61: #{tpu_custom_call.1} parent=11 // pred_check
          %p423 = pneg %p325
        $region62: #{tpu_custom_call.1} parent=11 // pred_check_branch
          %425 = sbr.rel (%p423) target = $region64
        $region63: #{tpu_custom_call.1} parent=11 // pred_region
          _
        $region64: #{tpu_custom_call.1} parent=11 // pred_fallthru
          _
        // Predicated region
        $region65: #{tpu_custom_call.1} parent=11 // pred_check
          %p426 = pneg %p346
        $region66: #{tpu_custom_call.1} parent=11 // pred_check_branch
          %428 = sbr.rel (%p426) target = $region68
        $region67: #{tpu_custom_call.1} parent=11 // pred_region
          _
        $region68: #{tpu_custom_call.1} parent=11 // pred_fallthru
          _
      $region12: #{tpu_custom_call.1} parent=5 // pred_fallthru
        _
      %p429 = scmp.lt.s32.totalorder %s26, 2
      // Predicated region
      $region69: #{tpu_custom_call.1} parent=5 // pred_check
        %p430 = pneg %p429
      $region70: #{tpu_custom_call.1} parent=5 // pred_check_branch
        %432 = sbr.rel (%p430) target = $region72
      $region71: #{tpu_custom_call.1} parent=5 // pred_region
        // Predicated region
        $region73: #{tpu_custom_call.1} parent=71 // pred_check
          %p433 = pneg %p46
        $region74: #{tpu_custom_call.1} parent=71 // pred_check_branch
          %435 = sbr.rel (%p433) target = $region76
        $region75: #{tpu_custom_call.1} parent=71 // pred_region
          %s436 = smul.u32 64, %s26
          %p437 = scmp.lt.s32.totalorder %s436, 127
          %s438 = scalar_select %p437, %s436, 127
          %s439 = smul.addr %s438, 8
          %s440 = scalar_lea.vmem %s0, %s439
          %s441 = smul.u32 64, %s26
        $region76: #{tpu_custom_call.1} parent=71 // pred_fallthru
          _
      $region72: #{tpu_custom_call.1} parent=5 // pred_fallthru
        _
      %p442 = scmp.le.s32.totalorder 1, %s26
      %p443 = scmp.lt.s32.totalorder %s26, 3
      %p444 = pnand %p442, %p443
      %p445 = pneg %p444
      // Predicated region
      $region77: #{tpu_custom_call.1} parent=5 // pred_check
        _
      $region78: #{tpu_custom_call.1} parent=5 // pred_check_branch
        %447 = sbr.rel (%p444) target = $region80
      $region79: #{tpu_custom_call.1} parent=5 // pred_region
        %s448 = ssub.s32 %s26, 1
        %s449 = smul.u32 64, %s31
        %p450 = scmp.lt.s32.totalorder %s449, 127
        %s451 = scalar_select %p450, %s449, 127
        %s452 = smul.addr %s451, 8
        %s453 = scalar_lea.vmem %s0, %s452
        %p454 = pneg %p52
        %p455 = pneg %p49
        %p456 = pneg %p73
        %p457 = pneg %p70
        %p458 = pneg %p94
        %p459 = pneg %p91
        %p460 = pneg %p115
        %p461 = pneg %p112
        %p462 = pneg %p136
        %p463 = pneg %p133
        %p464 = pneg %p157
        %p465 = pneg %p154
        %p466 = pneg %p178
        %p467 = pneg %p175
        %p468 = pneg %p199
        %p469 = pneg %p196
        %p470 = pneg %p220
        %p471 = pneg %p217
        %p472 = pneg %p241
        %p473 = pneg %p238
        %p474 = pneg %p262
        %p475 = pneg %p259
        %p476 = pneg %p283
        %p477 = pneg %p280
        %p478 = pneg %p304
        %p479 = pneg %p301
        %p480 = pneg %p325
        %p481 = pneg %p322
        %p482 = pneg %p346
        %p483 = pneg %p343
        %p484 = pneg %p372
        %p485 = pneg %p369
        %s486 = sand.u32 %s359, 1
        %s487 = scalar_lea.sflag [#allocation4], %s486
        %s488 = sand.u32 %s359, 1
        %s489 = smul.addr %s488, 4
        %s490 = scalar_lea.vmem [#allocation3], %s489
        %s491 = smul.u32 64, %s31
        %p492 = scmp.lt.s32.totalorder %s491, 127
        %s493 = scalar_select %p492, %s491, 127
        %s494 = smul.addr %s493, 8
        %s495 = scalar_lea.vmem %s0, %s494
        %s496 = smul.u32 64, %s31
        %s497 = smul.u32 4, %s31
        %v499 = vld [vmem:[%s495] sm:$0xff]
        %v500 = vld [vmem:[%s495 + $0x8] sm:$0xff]
        %v501 = vld [vmem:[%s495 + $0x10] sm:$0xff]
        %v502 = vld [vmem:[%s495 + $0x18] sm:$0xff]
        %v503 = vld [vmem:[%s495 + $0x20] sm:$0xff]
        %v504 = vld [vmem:[%s495 + $0x28] sm:$0xff]
        %v505 = vld [vmem:[%s495 + $0x30] sm:$0xff]
        %v506 = vld [vmem:[%s495 + $0x38] sm:$0xff]
        %v507 = vld [vmem:[%s495 + $0x40] sm:$0xff]
        %v508 = vld [vmem:[%s495 + $0x48] sm:$0xff]
        %v509 = vld [vmem:[%s495 + $0x50] sm:$0xff]
        %v510 = vld [vmem:[%s495 + $0x58] sm:$0xff]
        %v511 = vld [vmem:[%s495 + $0x60] sm:$0xff]
        %v512 = vld [vmem:[%s495 + $0x68] sm:$0xff]
        %v513 = vld [vmem:[%s495 + $0x70] sm:$0xff]
        %v514 = vld [vmem:[%s495 + $0x78] sm:$0xff]
        %v515 = vld [vmem:[%s495 + $0x80] sm:$0xff]
        %v516 = vld [vmem:[%s495 + $0x88] sm:$0xff]
        %v517 = vld [vmem:[%s495 + $0x90] sm:$0xff]
        %v518 = vld [vmem:[%s495 + $0x98] sm:$0xff]
        %v519 = vld [vmem:[%s495 + $0xa0] sm:$0xff]
        %v520 = vld [vmem:[%s495 + $0xa8] sm:$0xff]
        %v521 = vld [vmem:[%s495 + $0xb0] sm:$0xff]
        %v522 = vld [vmem:[%s495 + $0xb8] sm:$0xff]
        %v523 = vld [vmem:[%s495 + $0xc0] sm:$0xff]
        %v524 = vld [vmem:[%s495 + $0xc8] sm:$0xff]
        %v525 = vld [vmem:[%s495 + $0xd0] sm:$0xff]
        %v526 = vld [vmem:[%s495 + $0xd8] sm:$0xff]
        %v527 = vld [vmem:[%s495 + $0xe0] sm:$0xff]
        %v528 = vld [vmem:[%s495 + $0xe8] sm:$0xff]
        %v529 = vld [vmem:[%s495 + $0xf0] sm:$0xff]
        %v530 = vld [vmem:[%s495 + $0xf8] sm:$0xff]
        %v531 = vld [vmem:[%s495 + $0x100] sm:$0xff]
        %v532 = vld [vmem:[%s495 + $0x108] sm:$0xff]
        %v533 = vld [vmem:[%s495 + $0x110] sm:$0xff]
        %v534 = vld [vmem:[%s495 + $0x118] sm:$0xff]
        %v535 = vld [vmem:[%s495 + $0x120] sm:$0xff]
        %v536 = vld [vmem:[%s495 + $0x128] sm:$0xff]
        %v537 = vld [vmem:[%s495 + $0x130] sm:$0xff]
        %v538 = vld [vmem:[%s495 + $0x138] sm:$0xff]
        %v539 = vld [vmem:[%s495 + $0x140] sm:$0xff]
        %v540 = vld [vmem:[%s495 + $0x148] sm:$0xff]
        %v541 = vld [vmem:[%s495 + $0x150] sm:$0xff]
        %v542 = vld [vmem:[%s495 + $0x158] sm:$0xff]
        %v543 = vld [vmem:[%s495 + $0x160] sm:$0xff]
        %v544 = vld [vmem:[%s495 + $0x168] sm:$0xff]
        %v545 = vld [vmem:[%s495 + $0x170] sm:$0xff]
        %v546 = vld [vmem:[%s495 + $0x178] sm:$0xff]
        %v547 = vld [vmem:[%s495 + $0x180] sm:$0xff]
        %v548 = vld [vmem:[%s495 + $0x188] sm:$0xff]
        %v549 = vld [vmem:[%s495 + $0x190] sm:$0xff]
        %v550 = vld [vmem:[%s495 + $0x198] sm:$0xff]
        %v551 = vld [vmem:[%s495 + $0x1a0] sm:$0xff]
        %v552 = vld [vmem:[%s495 + $0x1a8] sm:$0xff]
        %v553 = vld [vmem:[%s495 + $0x1b0] sm:$0xff]
        %v554 = vld [vmem:[%s495 + $0x1b8] sm:$0xff]
        %v555 = vld [vmem:[%s495 + $0x1c0] sm:$0xff]
        %v556 = vld [vmem:[%s495 + $0x1c8] sm:$0xff]
        %v557 = vld [vmem:[%s495 + $0x1d0] sm:$0xff]
        %v558 = vld [vmem:[%s495 + $0x1d8] sm:$0xff]
        %v559 = vld [vmem:[%s495 + $0x1e0] sm:$0xff]
        %v560 = vld [vmem:[%s495 + $0x1e8] sm:$0xff]
        %v561 = vld [vmem:[%s495 + $0x1f0] sm:$0xff]
        %v562 = vld [vmem:[%s495 + $0x1f8] sm:$0xff]
        %v563 = vpack.c.bf16 %v500, %v499
        %v564 = vpack.c.bf16 %v502, %v501
        %v565 = vpack.c.bf16 %v504, %v503
        %v566 = vpack.c.bf16 %v506, %v505
        %v567 = vpack.c.bf16 %v508, %v507
        %v568 = vpack.c.bf16 %v510, %v509
        %v569 = vpack.c.bf16 %v512, %v511
        %v570 = vpack.c.bf16 %v514, %v513
        %v571 = vpack.c.bf16 %v516, %v515
        %v572 = vpack.c.bf16 %v518, %v517
        %v573 = vpack.c.bf16 %v520, %v519
        %v574 = vpack.c.bf16 %v522, %v521
        %v575 = vpack.c.bf16 %v524, %v523
        %v576 = vpack.c.bf16 %v526, %v525
        %v577 = vpack.c.bf16 %v528, %v527
        %v578 = vpack.c.bf16 %v530, %v529
        %v579 = vpack.c.bf16 %v532, %v531
        %v580 = vpack.c.bf16 %v534, %v533
        %v581 = vpack.c.bf16 %v536, %v535
        %v582 = vpack.c.bf16 %v538, %v537
        %v583 = vpack.c.bf16 %v540, %v539
        %v584 = vpack.c.bf16 %v542, %v541
        %v585 = vpack.c.bf16 %v544, %v543
        %v586 = vpack.c.bf16 %v546, %v545
        %v587 = vpack.c.bf16 %v548, %v547
        %v588 = vpack.c.bf16 %v550, %v549
        %v589 = vpack.c.bf16 %v552, %v551
        %v590 = vpack.c.bf16 %v554, %v553
        %v591 = vpack.c.bf16 %v556, %v555
        %v592 = vpack.c.bf16 %v558, %v557
        %v593 = vpack.c.bf16 %v560, %v559
        %v594 = vpack.c.bf16 %v562, %v561
        %v595 = vld [vmem:[%s1] sm:$0xff]
        %v596 = vld [vmem:[%s1 + $0x8] sm:$0xff]
        %v597 = vld [vmem:[%s1 + $0x10] sm:$0xff]
        %v598 = vld [vmem:[%s1 + $0x18] sm:$0xff]
        %v599 = vld [vmem:[%s1 + $0x20] sm:$0xff]
        %v600 = vld [vmem:[%s1 + $0x28] sm:$0xff]
        %v601 = vld [vmem:[%s1 + $0x30] sm:$0xff]
        %v602 = vld [vmem:[%s1 + $0x38] sm:$0xff]
        %v603 = vld [vmem:[%s1 + $0x40] sm:$0xff]
        %v604 = vld [vmem:[%s1 + $0x48] sm:$0xff]
        %v605 = vld [vmem:[%s1 + $0x50] sm:$0xff]
        %v606 = vld [vmem:[%s1 + $0x58] sm:$0x77]
        %v619 = vunpack.c.l.b16 %v595
        %v620 = vunpack.c.h.b16 %v595
        %v621 = vunpack.c.l.b16 %v596
        %v622 = vunpack.c.h.b16 %v596
        %v623 = vunpack.c.l.b16 %v597
        %v624 = vunpack.c.h.b16 %v597
        %v625 = vunpack.c.l.b16 %v598
        %v626 = vunpack.c.h.b16 %v598
        %v627 = vunpack.c.l.b16 %v599
        %v628 = vunpack.c.h.b16 %v599
        %v629 = vunpack.c.l.b16 %v600
        %v630 = vunpack.c.h.b16 %v600
        %v631 = vunpack.c.l.b16 %v601
        %v632 = vunpack.c.h.b16 %v601
        %v633 = vunpack.c.l.b16 %v602
        %v634 = vunpack.c.h.b16 %v602
        %v635 = vunpack.c.l.b16 %v603
        %v636 = vunpack.c.h.b16 %v603
        %v637 = vunpack.c.l.b16 %v604
        %v638 = vunpack.c.h.b16 %v604
        %v639 = vunpack.c.l.b16 %v605
        %v640 = vunpack.c.h.b16 %v605
        %v641 = vunpack.c.l.b16 %v606
        %v642 = vunpack.c.h.b16 %v606
        %v643 = vpack.c.b16 %v621, %v619
        %v644 = vpack.c.b16 %v622, %v620
        %v645 = vpack.c.b16 %v625, %v623
        %v646 = vpack.c.b16 %v626, %v624
        %v647 = vpack.c.b16 %v629, %v627
        %v648 = vpack.c.b16 %v630, %v628
        %v649 = vpack.c.b16 %v633, %v631
        %v650 = vpack.c.b16 %v634, %v632
        %v651 = vpack.c.b16 %v637, %v635
        %v652 = vpack.c.b16 %v638, %v636
        %v653 = vpack.c.b16 %v641, %v639
        %v654 = vpack.c.b16 %v642, %v640
        %vm665 = vcmask 760832
        %v667 = vsel %vm665, %v563, 0
        %v670 = vsel %vm665, %v564, 0
        %v673 = vsel %vm665, %v565, 0
        %v676 = vsel %vm665, %v566, 0
        %v679 = vsel %vm665, %v567, 0
        %v682 = vsel %vm665, %v568, 0
        %v685 = vsel %vm665, %v569, 0
        %v688 = vsel %vm665, %v570, 0
        %v691 = vsel %vm665, %v571, 0
        %v694 = vsel %vm665, %v572, 0
        %v697 = vsel %vm665, %v573, 0
        %v700 = vsel %vm665, %v574, 0
        %v703 = vsel %vm665, %v575, 0
        %v706 = vsel %vm665, %v576, 0
        %v709 = vsel %vm665, %v577, 0
        %v712 = vsel %vm665, %v578, 0
        %v715 = vsel %vm665, %v579, 0
        %v718 = vsel %vm665, %v580, 0
        %v721 = vsel %vm665, %v581, 0
        %v724 = vsel %vm665, %v582, 0
        %v727 = vsel %vm665, %v583, 0
        %v730 = vsel %vm665, %v584, 0
        %v733 = vsel %vm665, %v585, 0
        %v736 = vsel %vm665, %v586, 0
        %v739 = vsel %vm665, %v587, 0
        %v742 = vsel %vm665, %v588, 0
        %v745 = vsel %vm665, %v589, 0
        %v748 = vsel %vm665, %v590, 0
        %v751 = vsel %vm665, %v591, 0
        %v754 = vsel %vm665, %v592, 0
        %v757 = vsel %vm665, %v593, 0
        %v760 = vsel %vm665, %v594, 0
        %vm762 = vcmask 1045504
        %vm763 = vcmask 1046528
        %v764 = vsel %vm762, 4294967295, 65535
        %v765 = vsel %vm763, %v764, 0
        %v767 = vand.u32 %v653, %v765
        %v770 = vand.u32 %v654, %v765
        %772 = vmatpush.bf16.msra.mxu0 0
        %773 = vmatpush.bf16.msra.mxu0 0
        %774 = vmatpush.bf16.msra.mxu0 %v767
        %775 = vmatpush.bf16.msra.mxu0 %v651
        %776 = vmatpush.bf16.msra.mxu0 %v649
        %777 = vmatpush.bf16.msra.mxu0 %v647
        %778 = vmatpush.bf16.msra.mxu0 %v645
        %779 = vmatpush.bf16.msra.mxu0 %v643
        %780 = vmatmul.bf16.gmra.mxu0 %v667
        %v781 = vpop.f32.mrf.mxu0
        %v782 = vadd.f32 0.0, %v781
        %v783 = vpop.f32.mrf.mxu0
        %v784 = vadd.f32 0.0, %v783
        %785 = vmatmul.bf16.gmra.mxu0 %v670
        %v786 = vpop.f32.mrf.mxu0
        %v787 = vadd.f32 0.0, %v786
        %v788 = vpop.f32.mrf.mxu0
        %v789 = vadd.f32 0.0, %v788
        %790 = vmatmul.bf16.gmra.mxu0 %v673
        %v791 = vpop.f32.mrf.mxu0
        %v792 = vadd.f32 0.0, %v791
        %v793 = vpop.f32.mrf.mxu0
        %v794 = vadd.f32 0.0, %v793
        %795 = vmatmul.bf16.gmra.mxu0 %v676
        %v796 = vpop.f32.mrf.mxu0
        %v797 = vadd.f32 0.0, %v796
        %v798 = vpop.f32.mrf.mxu0
        %v799 = vadd.f32 0.0, %v798
        %800 = vmatmul.bf16.gmra.mxu0 %v679
        %v801 = vpop.f32.mrf.mxu0
        %v802 = vadd.f32 0.0, %v801
        %v803 = vpop.f32.mrf.mxu0
        %v804 = vadd.f32 0.0, %v803
        %805 = vmatmul.bf16.gmra.mxu0 %v682
        %v806 = vpop.f32.mrf.mxu0
        %v807 = vadd.f32 0.0, %v806
        %v808 = vpop.f32.mrf.mxu0
        %v809 = vadd.f32 0.0, %v808
        %810 = vmatmul.bf16.gmra.mxu0 %v685
        %v811 = vpop.f32.mrf.mxu0
        %v812 = vadd.f32 0.0, %v811
        %v813 = vpop.f32.mrf.mxu0
        %v814 = vadd.f32 0.0, %v813
        %815 = vmatmul.bf16.gmra.mxu0 %v688
        %v816 = vpop.f32.mrf.mxu0
        %v817 = vadd.f32 0.0, %v816
        %v818 = vpop.f32.mrf.mxu0
        %v819 = vadd.f32 0.0, %v818
        %820 = vmatmul.bf16.gmra.mxu0 %v691
        %v821 = vpop.f32.mrf.mxu0
        %v822 = vadd.f32 0.0, %v821
        %v823 = vpop.f32.mrf.mxu0
        %v824 = vadd.f32 0.0, %v823
        %825 = vmatmul.bf16.gmra.mxu0 %v694
        %v826 = vpop.f32.mrf.mxu0
        %v827 = vadd.f32 0.0, %v826
        %v828 = vpop.f32.mrf.mxu0
        %v829 = vadd.f32 0.0, %v828
        %830 = vmatmul.bf16.gmra.mxu0 %v697
        %v831 = vpop.f32.mrf.mxu0
        %v832 = vadd.f32 0.0, %v831
        %v833 = vpop.f32.mrf.mxu0
        %v834 = vadd.f32 0.0, %v833
        %835 = vmatmul.bf16.gmra.mxu0 %v700
        %v836 = vpop.f32.mrf.mxu0
        %v837 = vadd.f32 0.0, %v836
        %v838 = vpop.f32.mrf.mxu0
        %v839 = vadd.f32 0.0, %v838
        %840 = vmatmul.bf16.gmra.mxu0 %v703
        %v841 = vpop.f32.mrf.mxu0
        %v842 = vadd.f32 0.0, %v841
        %v843 = vpop.f32.mrf.mxu0
        %v844 = vadd.f32 0.0, %v843
        %845 = vmatmul.bf16.gmra.mxu0 %v706
        %v846 = vpop.f32.mrf.mxu0
        %v847 = vadd.f32 0.0, %v846
        %v848 = vpop.f32.mrf.mxu0
        %v849 = vadd.f32 0.0, %v848
        %850 = vmatmul.bf16.gmra.mxu0 %v709
        %v851 = vpop.f32.mrf.mxu0
        %v852 = vadd.f32 0.0, %v851
        %v853 = vpop.f32.mrf.mxu0
        %v854 = vadd.f32 0.0, %v853
        %855 = vmatmul.bf16.gmra.mxu0 %v712
        %v856 = vpop.f32.mrf.mxu0
        %v857 = vadd.f32 0.0, %v856
        %v858 = vpop.f32.mrf.mxu0
        %v859 = vadd.f32 0.0, %v858
        %860 = vmatmul.bf16.gmra.mxu0 %v715
        %v861 = vpop.f32.mrf.mxu0
        %v862 = vadd.f32 0.0, %v861
        %v863 = vpop.f32.mrf.mxu0
        %v864 = vadd.f32 0.0, %v863
        %865 = vmatmul.bf16.gmra.mxu0 %v718
        %v866 = vpop.f32.mrf.mxu0
        %v867 = vadd.f32 0.0, %v866
        %v868 = vpop.f32.mrf.mxu0
        %v869 = vadd.f32 0.0, %v868
        %870 = vmatmul.bf16.gmra.mxu0 %v721
        %v871 = vpop.f32.mrf.mxu0
        %v872 = vadd.f32 0.0, %v871
        %v873 = vpop.f32.mrf.mxu0
        %v874 = vadd.f32 0.0, %v873
        %875 = vmatmul.bf16.gmra.mxu0 %v724
        %v876 = vpop.f32.mrf.mxu0
        %v877 = vadd.f32 0.0, %v876
        %v878 = vpop.f32.mrf.mxu0
        %v879 = vadd.f32 0.0, %v878
        %880 = vmatmul.bf16.gmra.mxu0 %v727
        %v881 = vpop.f32.mrf.mxu0
        %v882 = vadd.f32 0.0, %v881
        %v883 = vpop.f32.mrf.mxu0
        %v884 = vadd.f32 0.0, %v883
        %885 = vmatmul.bf16.gmra.mxu0 %v730
        %v886 = vpop.f32.mrf.mxu0
        %v887 = vadd.f32 0.0, %v886
        %v888 = vpop.f32.mrf.mxu0
        %v889 = vadd.f32 0.0, %v888
        %890 = vmatmul.bf16.gmra.mxu0 %v733
        %v891 = vpop.f32.mrf.mxu0
        %v892 = vadd.f32 0.0, %v891
        %v893 = vpop.f32.mrf.mxu0
        %v894 = vadd.f32 0.0, %v893
        %895 = vmatmul.bf16.gmra.mxu0 %v736
        %v896 = vpop.f32.mrf.mxu0
        %v897 = vadd.f32 0.0, %v896
        %v898 = vpop.f32.mrf.mxu0
        %v899 = vadd.f32 0.0, %v898
        %900 = vmatmul.bf16.gmra.mxu0 %v739
        %v901 = vpop.f32.mrf.mxu0
        %v902 = vadd.f32 0.0, %v901
        %v903 = vpop.f32.mrf.mxu0
        %v904 = vadd.f32 0.0, %v903
        %905 = vmatmul.bf16.gmra.mxu0 %v742
        %v906 = vpop.f32.mrf.mxu0
        %v907 = vadd.f32 0.0, %v906
        %v908 = vpop.f32.mrf.mxu0
        %v909 = vadd.f32 0.0, %v908
        %910 = vmatmul.bf16.gmra.mxu0 %v745
        %v911 = vpop.f32.mrf.mxu0
        %v912 = vadd.f32 0.0, %v911
        %v913 = vpop.f32.mrf.mxu0
        %v914 = vadd.f32 0.0, %v913
        %915 = vmatmul.bf16.gmra.mxu0 %v748
        %v916 = vpop.f32.mrf.mxu0
        %v917 = vadd.f32 0.0, %v916
        %v918 = vpop.f32.mrf.mxu0
        %v919 = vadd.f32 0.0, %v918
        %920 = vmatmul.bf16.gmra.mxu0 %v751
        %v921 = vpop.f32.mrf.mxu0
        %v922 = vadd.f32 0.0, %v921
        %v923 = vpop.f32.mrf.mxu0
        %v924 = vadd.f32 0.0, %v923
        %925 = vmatmul.bf16.gmra.mxu0 %v754
        %v926 = vpop.f32.mrf.mxu0
        %v927 = vadd.f32 0.0, %v926
        %v928 = vpop.f32.mrf.mxu0
        %v929 = vadd.f32 0.0, %v928
        %930 = vmatmul.bf16.gmra.mxu0 %v757
        %v931 = vpop.f32.mrf.mxu0
        %v932 = vadd.f32 0.0, %v931
        %v933 = vpop.f32.mrf.mxu0
        %v934 = vadd.f32 0.0, %v933
        %935 = vmatmul.bf16.gmra.mxu0 %v760
        %v936 = vpop.f32.mrf.mxu0
        %v937 = vadd.f32 0.0, %v936
        %v938 = vpop.f32.mrf.mxu0
        %v939 = vadd.f32 0.0, %v938
        %940 = vdwg.mxu0
        %941 = vmatpush.bf16.msra.mxu0 0
        %942 = vmatpush.bf16.msra.mxu0 0
        %943 = vmatpush.bf16.msra.mxu0 %v770
        %944 = vmatpush.bf16.msra.mxu0 %v652
        %945 = vmatpush.bf16.msra.mxu0 %v650
        %946 = vmatpush.bf16.msra.mxu0 %v648
        %947 = vmatpush.bf16.msra.mxu0 %v646
        %948 = vmatpush.bf16.msra.mxu0 %v644
        %949 = vmatmul.bf16.gmra.mxu0 %v667
        %v950 = vpop.f32.mrf.mxu0
        %v951 = vadd.f32 0.0, %v950
        %v952 = vpop.f32.mrf.mxu0
        %v953 = vadd.f32 0.0, %v952
        %954 = vmatmul.bf16.gmra.mxu0 %v670
        %v955 = vpop.f32.mrf.mxu0
        %v956 = vadd.f32 0.0, %v955
        %v957 = vpop.f32.mrf.mxu0
        %v958 = vadd.f32 0.0, %v957
        %959 = vmatmul.bf16.gmra.mxu0 %v673
        %v960 = vpop.f32.mrf.mxu0
        %v961 = vadd.f32 0.0, %v960
        %v962 = vpop.f32.mrf.mxu0
        %v963 = vadd.f32 0.0, %v962
        %964 = vmatmul.bf16.gmra.mxu0 %v676
        %v965 = vpop.f32.mrf.mxu0
        %v966 = vadd.f32 0.0, %v965
        %v967 = vpop.f32.mrf.mxu0
        %v968 = vadd.f32 0.0, %v967
        %969 = vmatmul.bf16.gmra.mxu0 %v679
        %v970 = vpop.f32.mrf.mxu0
        %v971 = vadd.f32 0.0, %v970
        %v972 = vpop.f32.mrf.mxu0
        %v973 = vadd.f32 0.0, %v972
        %974 = vmatmul.bf16.gmra.mxu0 %v682
        %v975 = vpop.f32.mrf.mxu0
        %v976 = vadd.f32 0.0, %v975
        %v977 = vpop.f32.mrf.mxu0
        %v978 = vadd.f32 0.0, %v977
        %979 = vmatmul.bf16.gmra.mxu0 %v685
        %v980 = vpop.f32.mrf.mxu0
        %v981 = vadd.f32 0.0, %v980
        %v982 = vpop.f32.mrf.mxu0
        %v983 = vadd.f32 0.0, %v982
        %984 = vmatmul.bf16.gmra.mxu0 %v688
        %v985 = vpop.f32.mrf.mxu0
        %v986 = vadd.f32 0.0, %v985
        %v987 = vpop.f32.mrf.mxu0
        %v988 = vadd.f32 0.0, %v987
        %989 = vmatmul.bf16.gmra.mxu0 %v691
        %v990 = vpop.f32.mrf.mxu0
        %v991 = vadd.f32 0.0, %v990
        %v992 = vpop.f32.mrf.mxu0
        %v993 = vadd.f32 0.0, %v992
        %994 = vmatmul.bf16.gmra.mxu0 %v694
        %v995 = vpop.f32.mrf.mxu0
        %v996 = vadd.f32 0.0, %v995
        %v997 = vpop.f32.mrf.mxu0
        %v998 = vadd.f32 0.0, %v997
        %999 = vmatmul.bf16.gmra.mxu0 %v697
        %v1000 = vpop.f32.mrf.mxu0
        %v1001 = vadd.f32 0.0, %v1000
        %v1002 = vpop.f32.mrf.mxu0
        %v1003 = vadd.f32 0.0, %v1002
        %1004 = vmatmul.bf16.gmra.mxu0 %v700
        %v1005 = vpop.f32.mrf.mxu0
        %v1006 = vadd.f32 0.0, %v1005
        %v1007 = vpop.f32.mrf.mxu0
        %v1008 = vadd.f32 0.0, %v1007
        %1009 = vmatmul.bf16.gmra.mxu0 %v703
        %v1010 = vpop.f32.mrf.mxu0
        %v1011 = vadd.f32 0.0, %v1010
        %v1012 = vpop.f32.mrf.mxu0
        %v1013 = vadd.f32 0.0, %v1012
        %1014 = vmatmul.bf16.gmra.mxu0 %v706
        %v1015 = vpop.f32.mrf.mxu0
        %v1016 = vadd.f32 0.0, %v1015
        %v1017 = vpop.f32.mrf.mxu0
        %v1018 = vadd.f32 0.0, %v1017
        %1019 = vmatmul.bf16.gmra.mxu0 %v709
        %v1020 = vpop.f32.mrf.mxu0
        %v1021 = vadd.f32 0.0, %v1020
        %v1022 = vpop.f32.mrf.mxu0
        %v1023 = vadd.f32 0.0, %v1022
        %1024 = vmatmul.bf16.gmra.mxu0 %v712
        %v1025 = vpop.f32.mrf.mxu0
        %v1026 = vadd.f32 0.0, %v1025
        %v1027 = vpop.f32.mrf.mxu0
        %v1028 = vadd.f32 0.0, %v1027
        %1029 = vmatmul.bf16.gmra.mxu0 %v715
        %v1030 = vpop.f32.mrf.mxu0
        %v1031 = vadd.f32 0.0, %v1030
        %v1032 = vpop.f32.mrf.mxu0
        %v1033 = vadd.f32 0.0, %v1032
        %1034 = vmatmul.bf16.gmra.mxu0 %v718
        %v1035 = vpop.f32.mrf.mxu0
        %v1036 = vadd.f32 0.0, %v1035
        %v1037 = vpop.f32.mrf.mxu0
        %v1038 = vadd.f32 0.0, %v1037
        %1039 = vmatmul.bf16.gmra.mxu0 %v721
        %v1040 = vpop.f32.mrf.mxu0
        %v1041 = vadd.f32 0.0, %v1040
        %v1042 = vpop.f32.mrf.mxu0
        %v1043 = vadd.f32 0.0, %v1042
        %1044 = vmatmul.bf16.gmra.mxu0 %v724
        %v1045 = vpop.f32.mrf.mxu0
        %v1046 = vadd.f32 0.0, %v1045
        %v1047 = vpop.f32.mrf.mxu0
        %v1048 = vadd.f32 0.0, %v1047
        %1049 = vmatmul.bf16.gmra.mxu0 %v727
        %v1050 = vpop.f32.mrf.mxu0
        %v1051 = vadd.f32 0.0, %v1050
        %v1052 = vpop.f32.mrf.mxu0
        %v1053 = vadd.f32 0.0, %v1052
        %1054 = vmatmul.bf16.gmra.mxu0 %v730
        %v1055 = vpop.f32.mrf.mxu0
        %v1056 = vadd.f32 0.0, %v1055
        %v1057 = vpop.f32.mrf.mxu0
        %v1058 = vadd.f32 0.0, %v1057
        %1059 = vmatmul.bf16.gmra.mxu0 %v733
        %v1060 = vpop.f32.mrf.mxu0
        %v1061 = vadd.f32 0.0, %v1060
        %v1062 = vpop.f32.mrf.mxu0
        %v1063 = vadd.f32 0.0, %v1062
        %1064 = vmatmul.bf16.gmra.mxu0 %v736
        %v1065 = vpop.f32.mrf.mxu0
        %v1066 = vadd.f32 0.0, %v1065
        %v1067 = vpop.f32.mrf.mxu0
        %v1068 = vadd.f32 0.0, %v1067
        %1069 = vmatmul.bf16.gmra.mxu0 %v739
        %v1070 = vpop.f32.mrf.mxu0
        %v1071 = vadd.f32 0.0, %v1070
        %v1072 = vpop.f32.mrf.mxu0
        %v1073 = vadd.f32 0.0, %v1072
        %1074 = vmatmul.bf16.gmra.mxu0 %v742
        %v1075 = vpop.f32.mrf.mxu0
        %v1076 = vadd.f32 0.0, %v1075
        %v1077 = vpop.f32.mrf.mxu0
        %v1078 = vadd.f32 0.0, %v1077
        %1079 = vmatmul.bf16.gmra.mxu0 %v745
        %v1080 = vpop.f32.mrf.mxu0
        %v1081 = vadd.f32 0.0, %v1080
        %v1082 = vpop.f32.mrf.mxu0
        %v1083 = vadd.f32 0.0, %v1082
        %1084 = vmatmul.bf16.gmra.mxu0 %v748
        %v1085 = vpop.f32.mrf.mxu0
        %v1086 = vadd.f32 0.0, %v1085
        %v1087 = vpop.f32.mrf.mxu0
        %v1088 = vadd.f32 0.0, %v1087
        %1089 = vmatmul.bf16.gmra.mxu0 %v751
        %v1090 = vpop.f32.mrf.mxu0
        %v1091 = vadd.f32 0.0, %v1090
        %v1092 = vpop.f32.mrf.mxu0
        %v1093 = vadd.f32 0.0, %v1092
        %1094 = vmatmul.bf16.gmra.mxu0 %v754
        %v1095 = vpop.f32.mrf.mxu0
        %v1096 = vadd.f32 0.0, %v1095
        %v1097 = vpop.f32.mrf.mxu0
        %v1098 = vadd.f32 0.0, %v1097
        %1099 = vmatmul.bf16.gmra.mxu0 %v757
        %v1100 = vpop.f32.mrf.mxu0
        %v1101 = vadd.f32 0.0, %v1100
        %v1102 = vpop.f32.mrf.mxu0
        %v1103 = vadd.f32 0.0, %v1102
        %1104 = vmatmul.bf16.gmra.mxu0 %v760
        %v1105 = vpop.f32.mrf.mxu0
        %v1106 = vadd.f32 0.0, %v1105
        %v1107 = vpop.f32.mrf.mxu0
        %v1108 = vadd.f32 0.0, %v1107
        %1109 = vdwg.mxu0
        %v1110 = vld [vmem:[%s2] sm:$0x1]
        %v1112 = vperm.slane %v1110, 0
        %v1114 = vadd.f32 %v782, %v1112
        %v1115 = vadd.f32 %v784, %v1112
        %v1116 = vadd.f32 %v787, %v1112
        %v1117 = vadd.f32 %v789, %v1112
        %v1118 = vadd.f32 %v792, %v1112
        %v1119 = vadd.f32 %v794, %v1112
        %v1120 = vadd.f32 %v797, %v1112
        %v1121 = vadd.f32 %v799, %v1112
        %v1122 = vadd.f32 %v802, %v1112
        %v1123 = vadd.f32 %v804, %v1112
        %v1124 = vadd.f32 %v807, %v1112
        %v1125 = vadd.f32 %v809, %v1112
        %v1126 = vadd.f32 %v812, %v1112
        %v1127 = vadd.f32 %v814, %v1112
        %v1128 = vadd.f32 %v817, %v1112
        %v1129 = vadd.f32 %v819, %v1112
        %v1130 = vadd.f32 %v822, %v1112
        %v1131 = vadd.f32 %v824, %v1112
        %v1132 = vadd.f32 %v827, %v1112
        %v1133 = vadd.f32 %v829, %v1112
        %v1134 = vadd.f32 %v832, %v1112
        %v1135 = vadd.f32 %v834, %v1112
        %v1136 = vadd.f32 %v837, %v1112
        %v1137 = vadd.f32 %v839, %v1112
        %v1138 = vadd.f32 %v842, %v1112
        %v1139 = vadd.f32 %v844, %v1112
        %v1140 = vadd.f32 %v847, %v1112
        %v1141 = vadd.f32 %v849, %v1112
        %v1142 = vadd.f32 %v852, %v1112
        %v1143 = vadd.f32 %v854, %v1112
        %v1144 = vadd.f32 %v857, %v1112
        %v1145 = vadd.f32 %v859, %v1112
        %v1146 = vadd.f32 %v862, %v1112
        %v1147 = vadd.f32 %v864, %v1112
        %v1148 = vadd.f32 %v867, %v1112
        %v1149 = vadd.f32 %v869, %v1112
        %v1150 = vadd.f32 %v872, %v1112
        %v1151 = vadd.f32 %v874, %v1112
        %v1152 = vadd.f32 %v877, %v1112
        %v1153 = vadd.f32 %v879, %v1112
        %v1154 = vadd.f32 %v882, %v1112
        %v1155 = vadd.f32 %v884, %v1112
        %v1156 = vadd.f32 %v887, %v1112
        %v1157 = vadd.f32 %v889, %v1112
        %v1158 = vadd.f32 %v892, %v1112
        %v1159 = vadd.f32 %v894, %v1112
        %v1160 = vadd.f32 %v897, %v1112
        %v1161 = vadd.f32 %v899, %v1112
        %v1162 = vadd.f32 %v902, %v1112
        %v1163 = vadd.f32 %v904, %v1112
        %v1164 = vadd.f32 %v907, %v1112
        %v1165 = vadd.f32 %v909, %v1112
        %v1166 = vadd.f32 %v912, %v1112
        %v1167 = vadd.f32 %v914, %v1112
        %v1168 = vadd.f32 %v917, %v1112
        %v1169 = vadd.f32 %v919, %v1112
        %v1170 = vadd.f32 %v922, %v1112
        %v1171 = vadd.f32 %v924, %v1112
        %v1172 = vadd.f32 %v927, %v1112
        %v1173 = vadd.f32 %v929, %v1112
        %v1174 = vadd.f32 %v932, %v1112
        %v1175 = vadd.f32 %v934, %v1112
        %v1176 = vadd.f32 %v937, %v1112
        %v1177 = vadd.f32 %v939, %v1112
        %v1178 = vpack.c.bf16 %v1115, %v1114
        %v1179 = vpack.c.bf16 %v1117, %v1116
        %v1180 = vpack.c.bf16 %v1119, %v1118
        %v1181 = vpack.c.bf16 %v1121, %v1120
        %v1182 = vpack.c.bf16 %v1123, %v1122
        %v1183 = vpack.c.bf16 %v1125, %v1124
        %v1184 = vpack.c.bf16 %v1127, %v1126
        %v1185 = vpack.c.bf16 %v1129, %v1128
        %v1186 = vpack.c.bf16 %v1131, %v1130
        %v1187 = vpack.c.bf16 %v1133, %v1132
        %v1188 = vpack.c.bf16 %v1135, %v1134
        %v1189 = vpack.c.bf16 %v1137, %v1136
        %v1190 = vpack.c.bf16 %v1139, %v1138
        %v1191 = vpack.c.bf16 %v1141, %v1140
        %v1192 = vpack.c.bf16 %v1143, %v1142
        %v1193 = vpack.c.bf16 %v1145, %v1144
        %v1194 = vpack.c.bf16 %v1147, %v1146
        %v1195 = vpack.c.bf16 %v1149, %v1148
        %v1196 = vpack.c.bf16 %v1151, %v1150
        %v1197 = vpack.c.bf16 %v1153, %v1152
        %v1198 = vpack.c.bf16 %v1155, %v1154
        %v1199 = vpack.c.bf16 %v1157, %v1156
        %v1200 = vpack.c.bf16 %v1159, %v1158
        %v1201 = vpack.c.bf16 %v1161, %v1160
        %v1202 = vpack.c.bf16 %v1163, %v1162
        %v1203 = vpack.c.bf16 %v1165, %v1164
        %v1204 = vpack.c.bf16 %v1167, %v1166
        %v1205 = vpack.c.bf16 %v1169, %v1168
        %v1206 = vpack.c.bf16 %v1171, %v1170
        %v1207 = vpack.c.bf16 %v1173, %v1172
        %v1208 = vpack.c.bf16 %v1175, %v1174
        %v1209 = vpack.c.bf16 %v1177, %v1176
        %v1210 = vld [vmem:[%s3] sm:$0xf]
        %v1211 = vld [vmem:[%s3 + $0x4] sm:$0xf]
        %v1212 = vld [vmem:[%s3 + $0x8] sm:$0xf]
        %v1213 = vld [vmem:[%s3 + $0xc] sm:$0xf]
        %v1214 = vld [vmem:[%s3 + $0x10] sm:$0xf]
        %v1215 = vld [vmem:[%s3 + $0x14] sm:$0xf]
        %v1216 = vld [vmem:[%s3 + $0x18] sm:$0xf]
        %v1217 = vld [vmem:[%s3 + $0x1c] sm:$0xf]
        %v1218 = vld [vmem:[%s3 + $0x20] sm:$0xf]
        %v1219 = vld [vmem:[%s3 + $0x24] sm:$0xf]
        %v1220 = vld [vmem:[%s3 + $0x28] sm:$0xf]
        %v1221 = vld [vmem:[%s3 + $0x2c] sm:$0xf]
        %v1222 = vld [vmem:[%s3 + $0x30] sm:$0xf]
        %v1223 = vld [vmem:[%s3 + $0x34] sm:$0xf]
        %v1224 = vld [vmem:[%s3 + $0x38] sm:$0xf]
        %v1225 = vld [vmem:[%s3 + $0x3c] sm:$0xf]
        %v1226 = vld [vmem:[%s4] sm:$0x1]
        %v1228 = vperm.slane %v1226, 0
        %v1246 = vunpack.c.l.b16 %v1210
        %v1247 = vunpack.c.l.b16 %v1211
        %v1248 = vunpack.c.l.b16 %v1212
        %v1249 = vunpack.c.l.b16 %v1213
        %v1250 = vunpack.c.l.b16 %v1214
        %v1251 = vunpack.c.l.b16 %v1215
        %v1252 = vunpack.c.l.b16 %v1216
        %v1253 = vunpack.c.l.b16 %v1217
        %v1254 = vunpack.c.l.b16 %v1218
        %v1255 = vunpack.c.l.b16 %v1219
        %v1256 = vunpack.c.l.b16 %v1220
        %v1257 = vunpack.c.l.b16 %v1221
        %v1258 = vunpack.c.l.b16 %v1222
        %v1259 = vunpack.c.l.b16 %v1223
        %v1260 = vunpack.c.l.b16 %v1224
        %v1261 = vunpack.c.l.b16 %v1225
        %v1262 = vpack.c.b16 %v1247, %v1246
        %v1263 = vpack.c.b16 %v1249, %v1248
        %v1264 = vpack.c.b16 %v1251, %v1250
        %v1265 = vpack.c.b16 %v1253, %v1252
        %v1266 = vpack.c.b16 %v1255, %v1254
        %v1267 = vpack.c.b16 %v1257, %v1256
        %v1268 = vpack.c.b16 %v1259, %v1258
        %v1269 = vpack.c.b16 %v1261, %v1260
        %1278 = vmatpush.bf16.msra.mxu0 %v1269
        %1279 = vmatpush.bf16.msra.mxu0 %v1268
        %1280 = vmatpush.bf16.msra.mxu0 %v1267
        %1281 = vmatpush.bf16.msra.mxu0 %v1266
        %1282 = vmatpush.bf16.msra.mxu0 %v1265
        %1283 = vmatpush.bf16.msra.mxu0 %v1264
        %1284 = vmatpush.bf16.msra.mxu0 %v1263
        %1285 = vmatpush.bf16.msra.mxu0 %v1262
        %1286 = vmatmul.bf16.gmra.mxu0 %v1178
        %v1287 = vpop.f32.mrf.mxu0
        %v1288 = vadd.f32 %v1228, %v1287
        %v1289 = vpop.f32.mrf.mxu0
        %v1290 = vadd.f32 %v1228, %v1289
        %1291 = vmatmul.bf16.gmra.mxu0 %v1179
        %v1292 = vpop.f32.mrf.mxu0
        %v1293 = vadd.f32 %v1228, %v1292
        %v1294 = vpop.f32.mrf.mxu0
        %v1295 = vadd.f32 %v1228, %v1294
        %1296 = vmatmul.bf16.gmra.mxu0 %v1180
        %v1297 = vpop.f32.mrf.mxu0
        %v1298 = vadd.f32 %v1228, %v1297
        %v1299 = vpop.f32.mrf.mxu0
        %v1300 = vadd.f32 %v1228, %v1299
        %1301 = vmatmul.bf16.gmra.mxu0 %v1181
        %v1302 = vpop.f32.mrf.mxu0
        %v1303 = vadd.f32 %v1228, %v1302
        %v1304 = vpop.f32.mrf.mxu0
        %v1305 = vadd.f32 %v1228, %v1304
        %1306 = vmatmul.bf16.gmra.mxu0 %v1182
        %v1307 = vpop.f32.mrf.mxu0
        %v1308 = vadd.f32 %v1228, %v1307
        %v1309 = vpop.f32.mrf.mxu0
        %v1310 = vadd.f32 %v1228, %v1309
        %1311 = vmatmul.bf16.gmra.mxu0 %v1183
        %v1312 = vpop.f32.mrf.mxu0
        %v1313 = vadd.f32 %v1228, %v1312
        %v1314 = vpop.f32.mrf.mxu0
        %v1315 = vadd.f32 %v1228, %v1314
        %1316 = vmatmul.bf16.gmra.mxu0 %v1184
        %v1317 = vpop.f32.mrf.mxu0
        %v1318 = vadd.f32 %v1228, %v1317
        %v1319 = vpop.f32.mrf.mxu0
        %v1320 = vadd.f32 %v1228, %v1319
        %1321 = vmatmul.bf16.gmra.mxu0 %v1185
        %v1322 = vpop.f32.mrf.mxu0
        %v1323 = vadd.f32 %v1228, %v1322
        %v1324 = vpop.f32.mrf.mxu0
        %v1325 = vadd.f32 %v1228, %v1324
        %1326 = vmatmul.bf16.gmra.mxu0 %v1186
        %v1327 = vpop.f32.mrf.mxu0
        %v1328 = vadd.f32 %v1228, %v1327
        %v1329 = vpop.f32.mrf.mxu0
        %v1330 = vadd.f32 %v1228, %v1329
        %1331 = vmatmul.bf16.gmra.mxu0 %v1187
        %v1332 = vpop.f32.mrf.mxu0
        %v1333 = vadd.f32 %v1228, %v1332
        %v1334 = vpop.f32.mrf.mxu0
        %v1335 = vadd.f32 %v1228, %v1334
        %1336 = vmatmul.bf16.gmra.mxu0 %v1188
        %v1337 = vpop.f32.mrf.mxu0
        %v1338 = vadd.f32 %v1228, %v1337
        %v1339 = vpop.f32.mrf.mxu0
        %v1340 = vadd.f32 %v1228, %v1339
        %1341 = vmatmul.bf16.gmra.mxu0 %v1189
        %v1342 = vpop.f32.mrf.mxu0
        %v1343 = vadd.f32 %v1228, %v1342
        %v1344 = vpop.f32.mrf.mxu0
        %v1345 = vadd.f32 %v1228, %v1344
        %1346 = vmatmul.bf16.gmra.mxu0 %v1190
        %v1347 = vpop.f32.mrf.mxu0
        %v1348 = vadd.f32 %v1228, %v1347
        %v1349 = vpop.f32.mrf.mxu0
        %v1350 = vadd.f32 %v1228, %v1349
        %1351 = vmatmul.bf16.gmra.mxu0 %v1191
        %v1352 = vpop.f32.mrf.mxu0
        %v1353 = vadd.f32 %v1228, %v1352
        %v1354 = vpop.f32.mrf.mxu0
        %v1355 = vadd.f32 %v1228, %v1354
        %1356 = vmatmul.bf16.gmra.mxu0 %v1192
        %v1357 = vpop.f32.mrf.mxu0
        %v1358 = vadd.f32 %v1228, %v1357
        %v1359 = vpop.f32.mrf.mxu0
        %v1360 = vadd.f32 %v1228, %v1359
        %1361 = vmatmul.bf16.gmra.mxu0 %v1193
        %v1362 = vpop.f32.mrf.mxu0
        %v1363 = vadd.f32 %v1228, %v1362
        %v1364 = vpop.f32.mrf.mxu0
        %v1365 = vadd.f32 %v1228, %v1364
        %1366 = vmatmul.bf16.gmra.mxu0 %v1194
        %v1367 = vpop.f32.mrf.mxu0
        %v1368 = vadd.f32 %v1228, %v1367
        %v1369 = vpop.f32.mrf.mxu0
        %v1370 = vadd.f32 %v1228, %v1369
        %1371 = vmatmul.bf16.gmra.mxu0 %v1195
        %v1372 = vpop.f32.mrf.mxu0
        %v1373 = vadd.f32 %v1228, %v1372
        %v1374 = vpop.f32.mrf.mxu0
        %v1375 = vadd.f32 %v1228, %v1374
        %1376 = vmatmul.bf16.gmra.mxu0 %v1196
        %v1377 = vpop.f32.mrf.mxu0
        %v1378 = vadd.f32 %v1228, %v1377
        %v1379 = vpop.f32.mrf.mxu0
        %v1380 = vadd.f32 %v1228, %v1379
        %1381 = vmatmul.bf16.gmra.mxu0 %v1197
        %v1382 = vpop.f32.mrf.mxu0
        %v1383 = vadd.f32 %v1228, %v1382
        %v1384 = vpop.f32.mrf.mxu0
        %v1385 = vadd.f32 %v1228, %v1384
        %1386 = vmatmul.bf16.gmra.mxu0 %v1198
        %v1387 = vpop.f32.mrf.mxu0
        %v1388 = vadd.f32 %v1228, %v1387
        %v1389 = vpop.f32.mrf.mxu0
        %v1390 = vadd.f32 %v1228, %v1389
        %1391 = vmatmul.bf16.gmra.mxu0 %v1199
        %v1392 = vpop.f32.mrf.mxu0
        %v1393 = vadd.f32 %v1228, %v1392
        %v1394 = vpop.f32.mrf.mxu0
        %v1395 = vadd.f32 %v1228, %v1394
        %1396 = vmatmul.bf16.gmra.mxu0 %v1200
        %v1397 = vpop.f32.mrf.mxu0
        %v1398 = vadd.f32 %v1228, %v1397
        %v1399 = vpop.f32.mrf.mxu0
        %v1400 = vadd.f32 %v1228, %v1399
        %1401 = vmatmul.bf16.gmra.mxu0 %v1201
        %v1402 = vpop.f32.mrf.mxu0
        %v1403 = vadd.f32 %v1228, %v1402
        %v1404 = vpop.f32.mrf.mxu0
        %v1405 = vadd.f32 %v1228, %v1404
        %1406 = vmatmul.bf16.gmra.mxu0 %v1202
        %v1407 = vpop.f32.mrf.mxu0
        %v1408 = vadd.f32 %v1228, %v1407
        %v1409 = vpop.f32.mrf.mxu0
        %v1410 = vadd.f32 %v1228, %v1409
        %1411 = vmatmul.bf16.gmra.mxu0 %v1203
        %v1412 = vpop.f32.mrf.mxu0
        %v1413 = vadd.f32 %v1228, %v1412
        %v1414 = vpop.f32.mrf.mxu0
        %v1415 = vadd.f32 %v1228, %v1414
        %1416 = vmatmul.bf16.gmra.mxu0 %v1204
        %v1417 = vpop.f32.mrf.mxu0
        %v1418 = vadd.f32 %v1228, %v1417
        %v1419 = vpop.f32.mrf.mxu0
        %v1420 = vadd.f32 %v1228, %v1419
        %1421 = vmatmul.bf16.gmra.mxu0 %v1205
        %v1422 = vpop.f32.mrf.mxu0
        %v1423 = vadd.f32 %v1228, %v1422
        %v1424 = vpop.f32.mrf.mxu0
        %v1425 = vadd.f32 %v1228, %v1424
        %1426 = vmatmul.bf16.gmra.mxu0 %v1206
        %v1427 = vpop.f32.mrf.mxu0
        %v1428 = vadd.f32 %v1228, %v1427
        %v1429 = vpop.f32.mrf.mxu0
        %v1430 = vadd.f32 %v1228, %v1429
        %1431 = vmatmul.bf16.gmra.mxu0 %v1207
        %v1432 = vpop.f32.mrf.mxu0
        %v1433 = vadd.f32 %v1228, %v1432
        %v1434 = vpop.f32.mrf.mxu0
        %v1435 = vadd.f32 %v1228, %v1434
        %1436 = vmatmul.bf16.gmra.mxu0 %v1208
        %v1437 = vpop.f32.mrf.mxu0
        %v1438 = vadd.f32 %v1228, %v1437
        %v1439 = vpop.f32.mrf.mxu0
        %v1440 = vadd.f32 %v1228, %v1439
        %1441 = vmatmul.bf16.gmra.mxu0 %v1209
        %v1442 = vpop.f32.mrf.mxu0
        %v1443 = vadd.f32 %v1228, %v1442
        %v1444 = vpop.f32.mrf.mxu0
        %v1445 = vadd.f32 %v1228, %v1444
        %1446 = vdwg.mxu0
        %v1447 = vmax.f32 %v1288, 0.0
        %v1448 = vmax.f32 %v1290, 0.0
        %v1449 = vmax.f32 %v1293, 0.0
        %v1450 = vmax.f32 %v1295, 0.0
        %v1451 = vmax.f32 %v1298, 0.0
        %v1452 = vmax.f32 %v1300, 0.0
        %v1453 = vmax.f32 %v1303, 0.0
        %v1454 = vmax.f32 %v1305, 0.0
        %v1455 = vmax.f32 %v1308, 0.0
        %v1456 = vmax.f32 %v1310, 0.0
        %v1457 = vmax.f32 %v1313, 0.0
        %v1458 = vmax.f32 %v1315, 0.0
        %v1459 = vmax.f32 %v1318, 0.0
        %v1460 = vmax.f32 %v1320, 0.0
        %v1461 = vmax.f32 %v1323, 0.0
        %v1462 = vmax.f32 %v1325, 0.0
        %v1463 = vmax.f32 %v1328, 0.0
        %v1464 = vmax.f32 %v1330, 0.0
        %v1465 = vmax.f32 %v1333, 0.0
        %v1466 = vmax.f32 %v1335, 0.0
        %v1467 = vmax.f32 %v1338, 0.0
        %v1468 = vmax.f32 %v1340, 0.0
        %v1469 = vmax.f32 %v1343, 0.0
        %v1470 = vmax.f32 %v1345, 0.0
        %v1471 = vmax.f32 %v1348, 0.0
        %v1472 = vmax.f32 %v1350, 0.0
        %v1473 = vmax.f32 %v1353, 0.0
        %v1474 = vmax.f32 %v1355, 0.0
        %v1475 = vmax.f32 %v1358, 0.0
        %v1476 = vmax.f32 %v1360, 0.0
        %v1477 = vmax.f32 %v1363, 0.0
        %v1478 = vmax.f32 %v1365, 0.0
        %v1479 = vmax.f32 %v1368, 0.0
        %v1480 = vmax.f32 %v1370, 0.0
        %v1481 = vmax.f32 %v1373, 0.0
        %v1482 = vmax.f32 %v1375, 0.0
        %v1483 = vmax.f32 %v1378, 0.0
        %v1484 = vmax.f32 %v1380, 0.0
        %v1485 = vmax.f32 %v1383, 0.0
        %v1486 = vmax.f32 %v1385, 0.0
        %v1487 = vmax.f32 %v1388, 0.0
        %v1488 = vmax.f32 %v1390, 0.0
        %v1489 = vmax.f32 %v1393, 0.0
        %v1490 = vmax.f32 %v1395, 0.0
        %v1491 = vmax.f32 %v1398, 0.0
        %v1492 = vmax.f32 %v1400, 0.0
        %v1493 = vmax.f32 %v1403, 0.0
        %v1494 = vmax.f32 %v1405, 0.0
        %v1495 = vmax.f32 %v1408, 0.0
        %v1496 = vmax.f32 %v1410, 0.0
        %v1497 = vmax.f32 %v1413, 0.0
        %v1498 = vmax.f32 %v1415, 0.0
        %v1499 = vmax.f32 %v1418, 0.0
        %v1500 = vmax.f32 %v1420, 0.0
        %v1501 = vmax.f32 %v1423, 0.0
        %v1502 = vmax.f32 %v1425, 0.0
        %v1503 = vmax.f32 %v1428, 0.0
        %v1504 = vmax.f32 %v1430, 0.0
        %v1505 = vmax.f32 %v1433, 0.0
        %v1506 = vmax.f32 %v1435, 0.0
        %v1507 = vmax.f32 %v1438, 0.0
        %v1508 = vmax.f32 %v1440, 0.0
        %v1509 = vmax.f32 %v1443, 0.0
        %v1510 = vmax.f32 %v1445, 0.0
        %v1511 = vpack.c.bf16 %v1448, %v1447
        %v1512 = vpack.c.bf16 %v1450, %v1449
        %v1513 = vpack.c.bf16 %v1452, %v1451
        %v1514 = vpack.c.bf16 %v1454, %v1453
        %v1515 = vpack.c.bf16 %v1456, %v1455
        %v1516 = vpack.c.bf16 %v1458, %v1457
        %v1517 = vpack.c.bf16 %v1460, %v1459
        %v1518 = vpack.c.bf16 %v1462, %v1461
        %v1519 = vpack.c.bf16 %v1464, %v1463
        %v1520 = vpack.c.bf16 %v1466, %v1465
        %v1521 = vpack.c.bf16 %v1468, %v1467
        %v1522 = vpack.c.bf16 %v1470, %v1469
        %v1523 = vpack.c.bf16 %v1472, %v1471
        %v1524 = vpack.c.bf16 %v1474, %v1473
        %v1525 = vpack.c.bf16 %v1476, %v1475
        %v1526 = vpack.c.bf16 %v1478, %v1477
        %v1527 = vpack.c.bf16 %v1480, %v1479
        %v1528 = vpack.c.bf16 %v1482, %v1481
        %v1529 = vpack.c.bf16 %v1484, %v1483
        %v1530 = vpack.c.bf16 %v1486, %v1485
        %v1531 = vpack.c.bf16 %v1488, %v1487
        %v1532 = vpack.c.bf16 %v1490, %v1489
        %v1533 = vpack.c.bf16 %v1492, %v1491
        %v1534 = vpack.c.bf16 %v1494, %v1493
        %v1535 = vpack.c.bf16 %v1496, %v1495
        %v1536 = vpack.c.bf16 %v1498, %v1497
        %v1537 = vpack.c.bf16 %v1500, %v1499
        %v1538 = vpack.c.bf16 %v1502, %v1501
        %v1539 = vpack.c.bf16 %v1504, %v1503
        %v1540 = vpack.c.bf16 %v1506, %v1505
        %v1541 = vpack.c.bf16 %v1508, %v1507
        %v1542 = vpack.c.bf16 %v1510, %v1509
        %v1543 = vld [vmem:[%s5] sm:$0xf]
        %v1544 = vld [vmem:[%s5 + $0x4] sm:$0xf]
        %v1545 = vld [vmem:[%s5 + $0x8] sm:$0xf]
        %v1546 = vld [vmem:[%s5 + $0xc] sm:$0xf]
        %v1547 = vld [vmem:[%s5 + $0x10] sm:$0xf]
        %v1548 = vld [vmem:[%s5 + $0x14] sm:$0xf]
        %v1549 = vld [vmem:[%s5 + $0x18] sm:$0xf]
        %v1550 = vld [vmem:[%s5 + $0x1c] sm:$0xf]
        %v1551 = vld [vmem:[%s5 + $0x20] sm:$0xf]
        %v1552 = vld [vmem:[%s5 + $0x24] sm:$0xf]
        %v1553 = vld [vmem:[%s5 + $0x28] sm:$0xf]
        %v1554 = vld [vmem:[%s5 + $0x2c] sm:$0xf]
        %v1555 = vld [vmem:[%s5 + $0x30] sm:$0xf]
        %v1556 = vld [vmem:[%s5 + $0x34] sm:$0xf]
        %v1557 = vld [vmem:[%s5 + $0x38] sm:$0xf]
        %v1558 = vld [vmem:[%s5 + $0x3c] sm:$0xf]
        %v1559 = vld [vmem:[%s6] sm:$0x1]
        %v1561 = vperm.slane %v1559, 0
        %v1579 = vunpack.c.l.b16 %v1543
        %v1580 = vunpack.c.l.b16 %v1544
        %v1581 = vunpack.c.l.b16 %v1545
        %v1582 = vunpack.c.l.b16 %v1546
        %v1583 = vunpack.c.l.b16 %v1547
        %v1584 = vunpack.c.l.b16 %v1548
        %v1585 = vunpack.c.l.b16 %v1549
        %v1586 = vunpack.c.l.b16 %v1550
        %v1587 = vunpack.c.l.b16 %v1551
        %v1588 = vunpack.c.l.b16 %v1552
        %v1589 = vunpack.c.l.b16 %v1553
        %v1590 = vunpack.c.l.b16 %v1554
        %v1591 = vunpack.c.l.b16 %v1555
        %v1592 = vunpack.c.l.b16 %v1556
        %v1593 = vunpack.c.l.b16 %v1557
        %v1594 = vunpack.c.l.b16 %v1558
        %v1595 = vpack.c.b16 %v1580, %v1579
        %v1596 = vpack.c.b16 %v1582, %v1581
        %v1597 = vpack.c.b16 %v1584, %v1583
        %v1598 = vpack.c.b16 %v1586, %v1585
        %v1599 = vpack.c.b16 %v1588, %v1587
        %v1600 = vpack.c.b16 %v1590, %v1589
        %v1601 = vpack.c.b16 %v1592, %v1591
        %v1602 = vpack.c.b16 %v1594, %v1593
        %1611 = vmatpush.bf16.msra.mxu0 %v1602
        %1612 = vmatpush.bf16.msra.mxu0 %v1601
        %1613 = vmatpush.bf16.msra.mxu0 %v1600
        %1614 = vmatpush.bf16.msra.mxu0 %v1599
        %1615 = vmatpush.bf16.msra.mxu0 %v1598
        %1616 = vmatpush.bf16.msra.mxu0 %v1597
        %1617 = vmatpush.bf16.msra.mxu0 %v1596
        %1618 = vmatpush.bf16.msra.mxu0 %v1595
        %1619 = vmatmul.bf16.gmra.mxu0 %v1511
        %v1620 = vpop.f32.mrf.mxu0
        %v1621 = vadd.f32 %v1561, %v1620
        %v1622 = vpop.f32.mrf.mxu0
        %v1623 = vadd.f32 %v1561, %v1622
        %1624 = vmatmul.bf16.gmra.mxu0 %v1512
        %v1625 = vpop.f32.mrf.mxu0
        %v1626 = vadd.f32 %v1561, %v1625
        %v1627 = vpop.f32.mrf.mxu0
        %v1628 = vadd.f32 %v1561, %v1627
        %1629 = vmatmul.bf16.gmra.mxu0 %v1513
        %v1630 = vpop.f32.mrf.mxu0
        %v1631 = vadd.f32 %v1561, %v1630
        %v1632 = vpop.f32.mrf.mxu0
        %v1633 = vadd.f32 %v1561, %v1632
        %1634 = vmatmul.bf16.gmra.mxu0 %v1514
        %v1635 = vpop.f32.mrf.mxu0
        %v1636 = vadd.f32 %v1561, %v1635
        %v1637 = vpop.f32.mrf.mxu0
        %v1638 = vadd.f32 %v1561, %v1637
        %1639 = vmatmul.bf16.gmra.mxu0 %v1515
        %v1640 = vpop.f32.mrf.mxu0
        %v1641 = vadd.f32 %v1561, %v1640
        %v1642 = vpop.f32.mrf.mxu0
        %v1643 = vadd.f32 %v1561, %v1642
        %1644 = vmatmul.bf16.gmra.mxu0 %v1516
        %v1645 = vpop.f32.mrf.mxu0
        %v1646 = vadd.f32 %v1561, %v1645
        %v1647 = vpop.f32.mrf.mxu0
        %v1648 = vadd.f32 %v1561, %v1647
        %1649 = vmatmul.bf16.gmra.mxu0 %v1517
        %v1650 = vpop.f32.mrf.mxu0
        %v1651 = vadd.f32 %v1561, %v1650
        %v1652 = vpop.f32.mrf.mxu0
        %v1653 = vadd.f32 %v1561, %v1652
        %1654 = vmatmul.bf16.gmra.mxu0 %v1518
        %v1655 = vpop.f32.mrf.mxu0
        %v1656 = vadd.f32 %v1561, %v1655
        %v1657 = vpop.f32.mrf.mxu0
        %v1658 = vadd.f32 %v1561, %v1657
        %1659 = vmatmul.bf16.gmra.mxu0 %v1519
        %v1660 = vpop.f32.mrf.mxu0
        %v1661 = vadd.f32 %v1561, %v1660
        %v1662 = vpop.f32.mrf.mxu0
        %v1663 = vadd.f32 %v1561, %v1662
        %1664 = vmatmul.bf16.gmra.mxu0 %v1520
        %v1665 = vpop.f32.mrf.mxu0
        %v1666 = vadd.f32 %v1561, %v1665
        %v1667 = vpop.f32.mrf.mxu0
        %v1668 = vadd.f32 %v1561, %v1667
        %1669 = vmatmul.bf16.gmra.mxu0 %v1521
        %v1670 = vpop.f32.mrf.mxu0
        %v1671 = vadd.f32 %v1561, %v1670
        %v1672 = vpop.f32.mrf.mxu0
        %v1673 = vadd.f32 %v1561, %v1672
        %1674 = vmatmul.bf16.gmra.mxu0 %v1522
        %v1675 = vpop.f32.mrf.mxu0
        %v1676 = vadd.f32 %v1561, %v1675
        %v1677 = vpop.f32.mrf.mxu0
        %v1678 = vadd.f32 %v1561, %v1677
        %1679 = vmatmul.bf16.gmra.mxu0 %v1523
        %v1680 = vpop.f32.mrf.mxu0
        %v1681 = vadd.f32 %v1561, %v1680
        %v1682 = vpop.f32.mrf.mxu0
        %v1683 = vadd.f32 %v1561, %v1682
        %1684 = vmatmul.bf16.gmra.mxu0 %v1524
        %v1685 = vpop.f32.mrf.mxu0
        %v1686 = vadd.f32 %v1561, %v1685
        %v1687 = vpop.f32.mrf.mxu0
        %v1688 = vadd.f32 %v1561, %v1687
        %1689 = vmatmul.bf16.gmra.mxu0 %v1525
        %v1690 = vpop.f32.mrf.mxu0
        %v1691 = vadd.f32 %v1561, %v1690
        %v1692 = vpop.f32.mrf.mxu0
        %v1693 = vadd.f32 %v1561, %v1692
        %1694 = vmatmul.bf16.gmra.mxu0 %v1526
        %v1695 = vpop.f32.mrf.mxu0
        %v1696 = vadd.f32 %v1561, %v1695
        %v1697 = vpop.f32.mrf.mxu0
        %v1698 = vadd.f32 %v1561, %v1697
        %1699 = vmatmul.bf16.gmra.mxu0 %v1527
        %v1700 = vpop.f32.mrf.mxu0
        %v1701 = vadd.f32 %v1561, %v1700
        %v1702 = vpop.f32.mrf.mxu0
        %v1703 = vadd.f32 %v1561, %v1702
        %1704 = vmatmul.bf16.gmra.mxu0 %v1528
        %v1705 = vpop.f32.mrf.mxu0
        %v1706 = vadd.f32 %v1561, %v1705
        %v1707 = vpop.f32.mrf.mxu0
        %v1708 = vadd.f32 %v1561, %v1707
        %1709 = vmatmul.bf16.gmra.mxu0 %v1529
        %v1710 = vpop.f32.mrf.mxu0
        %v1711 = vadd.f32 %v1561, %v1710
        %v1712 = vpop.f32.mrf.mxu0
        %v1713 = vadd.f32 %v1561, %v1712
        %1714 = vmatmul.bf16.gmra.mxu0 %v1530
        %v1715 = vpop.f32.mrf.mxu0
        %v1716 = vadd.f32 %v1561, %v1715
        %v1717 = vpop.f32.mrf.mxu0
        %v1718 = vadd.f32 %v1561, %v1717
        %1719 = vmatmul.bf16.gmra.mxu0 %v1531
        %v1720 = vpop.f32.mrf.mxu0
        %v1721 = vadd.f32 %v1561, %v1720
        %v1722 = vpop.f32.mrf.mxu0
        %v1723 = vadd.f32 %v1561, %v1722
        %1724 = vmatmul.bf16.gmra.mxu0 %v1532
        %v1725 = vpop.f32.mrf.mxu0
        %v1726 = vadd.f32 %v1561, %v1725
        %v1727 = vpop.f32.mrf.mxu0
        %v1728 = vadd.f32 %v1561, %v1727
        %1729 = vmatmul.bf16.gmra.mxu0 %v1533
        %v1730 = vpop.f32.mrf.mxu0
        %v1731 = vadd.f32 %v1561, %v1730
        %v1732 = vpop.f32.mrf.mxu0
        %v1733 = vadd.f32 %v1561, %v1732
        %1734 = vmatmul.bf16.gmra.mxu0 %v1534
        %v1735 = vpop.f32.mrf.mxu0
        %v1736 = vadd.f32 %v1561, %v1735
        %v1737 = vpop.f32.mrf.mxu0
        %v1738 = vadd.f32 %v1561, %v1737
        %1739 = vmatmul.bf16.gmra.mxu0 %v1535
        %v1740 = vpop.f32.mrf.mxu0
        %v1741 = vadd.f32 %v1561, %v1740
        %v1742 = vpop.f32.mrf.mxu0
        %v1743 = vadd.f32 %v1561, %v1742
        %1744 = vmatmul.bf16.gmra.mxu0 %v1536
        %v1745 = vpop.f32.mrf.mxu0
        %v1746 = vadd.f32 %v1561, %v1745
        %v1747 = vpop.f32.mrf.mxu0
        %v1748 = vadd.f32 %v1561, %v1747
        %1749 = vmatmul.bf16.gmra.mxu0 %v1537
        %v1750 = vpop.f32.mrf.mxu0
        %v1751 = vadd.f32 %v1561, %v1750
        %v1752 = vpop.f32.mrf.mxu0
        %v1753 = vadd.f32 %v1561, %v1752
        %1754 = vmatmul.bf16.gmra.mxu0 %v1538
        %v1755 = vpop.f32.mrf.mxu0
        %v1756 = vadd.f32 %v1561, %v1755
        %v1757 = vpop.f32.mrf.mxu0
        %v1758 = vadd.f32 %v1561, %v1757
        %1759 = vmatmul.bf16.gmra.mxu0 %v1539
        %v1760 = vpop.f32.mrf.mxu0
        %v1761 = vadd.f32 %v1561, %v1760
        %v1762 = vpop.f32.mrf.mxu0
        %v1763 = vadd.f32 %v1561, %v1762
        %1764 = vmatmul.bf16.gmra.mxu0 %v1540
        %v1765 = vpop.f32.mrf.mxu0
        %v1766 = vadd.f32 %v1561, %v1765
        %v1767 = vpop.f32.mrf.mxu0
        %v1768 = vadd.f32 %v1561, %v1767
        %1769 = vmatmul.bf16.gmra.mxu0 %v1541
        %v1770 = vpop.f32.mrf.mxu0
        %v1771 = vadd.f32 %v1561, %v1770
        %v1772 = vpop.f32.mrf.mxu0
        %v1773 = vadd.f32 %v1561, %v1772
        %1774 = vmatmul.bf16.gmra.mxu0 %v1542
        %v1775 = vpop.f32.mrf.mxu0
        %v1776 = vadd.f32 %v1561, %v1775
        %v1777 = vpop.f32.mrf.mxu0
        %v1778 = vadd.f32 %v1561, %v1777
        %1779 = vdwg.mxu0
        %v1780 = vmax.f32 %v1621, 0.0
        %v1781 = vmax.f32 %v1623, 0.0
        %v1782 = vmax.f32 %v1626, 0.0
        %v1783 = vmax.f32 %v1628, 0.0
        %v1784 = vmax.f32 %v1631, 0.0
        %v1785 = vmax.f32 %v1633, 0.0
        %v1786 = vmax.f32 %v1636, 0.0
        %v1787 = vmax.f32 %v1638, 0.0
        %v1788 = vmax.f32 %v1641, 0.0
        %v1789 = vmax.f32 %v1643, 0.0
        %v1790 = vmax.f32 %v1646, 0.0
        %v1791 = vmax.f32 %v1648, 0.0
        %v1792 = vmax.f32 %v1651, 0.0
        %v1793 = vmax.f32 %v1653, 0.0
        %v1794 = vmax.f32 %v1656, 0.0
        %v1795 = vmax.f32 %v1658, 0.0
        %v1796 = vmax.f32 %v1661, 0.0
        %v1797 = vmax.f32 %v1663, 0.0
        %v1798 = vmax.f32 %v1666, 0.0
        %v1799 = vmax.f32 %v1668, 0.0
        %v1800 = vmax.f32 %v1671, 0.0
        %v1801 = vmax.f32 %v1673, 0.0
        %v1802 = vmax.f32 %v1676, 0.0
        %v1803 = vmax.f32 %v1678, 0.0
        %v1804 = vmax.f32 %v1681, 0.0
        %v1805 = vmax.f32 %v1683, 0.0
        %v1806 = vmax.f32 %v1686, 0.0
        %v1807 = vmax.f32 %v1688, 0.0
        %v1808 = vmax.f32 %v1691, 0.0
        %v1809 = vmax.f32 %v1693, 0.0
        %v1810 = vmax.f32 %v1696, 0.0
        %v1811 = vmax.f32 %v1698, 0.0
        %v1812 = vmax.f32 %v1701, 0.0
        %v1813 = vmax.f32 %v1703, 0.0
        %v1814 = vmax.f32 %v1706, 0.0
        %v1815 = vmax.f32 %v1708, 0.0
        %v1816 = vmax.f32 %v1711, 0.0
        %v1817 = vmax.f32 %v1713, 0.0
        %v1818 = vmax.f32 %v1716, 0.0
        %v1819 = vmax.f32 %v1718, 0.0
        %v1820 = vmax.f32 %v1721, 0.0
        %v1821 = vmax.f32 %v1723, 0.0
        %v1822 = vmax.f32 %v1726, 0.0
        %v1823 = vmax.f32 %v1728, 0.0
        %v1824 = vmax.f32 %v1731, 0.0
        %v1825 = vmax.f32 %v1733, 0.0
        %v1826 = vmax.f32 %v1736, 0.0
        %v1827 = vmax.f32 %v1738, 0.0
        %v1828 = vmax.f32 %v1741, 0.0
        %v1829 = vmax.f32 %v1743, 0.0
        %v1830 = vmax.f32 %v1746, 0.0
        %v1831 = vmax.f32 %v1748, 0.0
        %v1832 = vmax.f32 %v1751, 0.0
        %v1833 = vmax.f32 %v1753, 0.0
        %v1834 = vmax.f32 %v1756, 0.0
        %v1835 = vmax.f32 %v1758, 0.0
        %v1836 = vmax.f32 %v1761, 0.0
        %v1837 = vmax.f32 %v1763, 0.0
        %v1838 = vmax.f32 %v1766, 0.0
        %v1839 = vmax.f32 %v1768, 0.0
        %v1840 = vmax.f32 %v1771, 0.0
        %v1841 = vmax.f32 %v1773, 0.0
        %v1842 = vmax.f32 %v1776, 0.0
        %v1843 = vmax.f32 %v1778, 0.0
        %v1844 = vpack.c.bf16 %v1781, %v1780
        %v1845 = vpack.c.bf16 %v1783, %v1782
        %v1846 = vpack.c.bf16 %v1785, %v1784
        %v1847 = vpack.c.bf16 %v1787, %v1786
        %v1848 = vpack.c.bf16 %v1789, %v1788
        %v1849 = vpack.c.bf16 %v1791, %v1790
        %v1850 = vpack.c.bf16 %v1793, %v1792
        %v1851 = vpack.c.bf16 %v1795, %v1794
        %v1852 = vpack.c.bf16 %v1797, %v1796
        %v1853 = vpack.c.bf16 %v1799, %v1798
        %v1854 = vpack.c.bf16 %v1801, %v1800
        %v1855 = vpack.c.bf16 %v1803, %v1802
        %v1856 = vpack.c.bf16 %v1805, %v1804
        %v1857 = vpack.c.bf16 %v1807, %v1806
        %v1858 = vpack.c.bf16 %v1809, %v1808
        %v1859 = vpack.c.bf16 %v1811, %v1810
        %v1860 = vpack.c.bf16 %v1813, %v1812
        %v1861 = vpack.c.bf16 %v1815, %v1814
        %v1862 = vpack.c.bf16 %v1817, %v1816
        %v1863 = vpack.c.bf16 %v1819, %v1818
        %v1864 = vpack.c.bf16 %v1821, %v1820
        %v1865 = vpack.c.bf16 %v1823, %v1822
        %v1866 = vpack.c.bf16 %v1825, %v1824
        %v1867 = vpack.c.bf16 %v1827, %v1826
        %v1868 = vpack.c.bf16 %v1829, %v1828
        %v1869 = vpack.c.bf16 %v1831, %v1830
        %v1870 = vpack.c.bf16 %v1833, %v1832
        %v1871 = vpack.c.bf16 %v1835, %v1834
        %v1872 = vpack.c.bf16 %v1837, %v1836
        %v1873 = vpack.c.bf16 %v1839, %v1838
        %v1874 = vpack.c.bf16 %v1841, %v1840
        %v1875 = vpack.c.bf16 %v1843, %v1842
        %v1876 = vld [vmem:[%s7] sm:$0xf]
        %v1877 = vld [vmem:[%s7 + $0x4] sm:$0xf]
        %v1878 = vld [vmem:[%s7 + $0x8] sm:$0xf]
        %v1879 = vld [vmem:[%s7 + $0xc] sm:$0xf]
        %v1880 = vld [vmem:[%s7 + $0x10] sm:$0xf]
        %v1881 = vld [vmem:[%s7 + $0x14] sm:$0xf]
        %v1882 = vld [vmem:[%s7 + $0x18] sm:$0xf]
        %v1883 = vld [vmem:[%s7 + $0x1c] sm:$0xf]
        %v1884 = vld [vmem:[%s7 + $0x20] sm:$0xf]
        %v1885 = vld [vmem:[%s7 + $0x24] sm:$0xf]
        %v1886 = vld [vmem:[%s7 + $0x28] sm:$0xf]
        %v1887 = vld [vmem:[%s7 + $0x2c] sm:$0xf]
        %v1888 = vld [vmem:[%s7 + $0x30] sm:$0xf]
        %v1889 = vld [vmem:[%s7 + $0x34] sm:$0xf]
        %v1890 = vld [vmem:[%s7 + $0x38] sm:$0xf]
        %v1891 = vld [vmem:[%s7 + $0x3c] sm:$0xf]
        %v1892 = vld [vmem:[%s8] sm:$0x1]
        %v1894 = vperm.slane %v1892, 0
        %v1912 = vunpack.c.l.b16 %v1876
        %v1913 = vunpack.c.l.b16 %v1877
        %v1914 = vunpack.c.l.b16 %v1878
        %v1915 = vunpack.c.l.b16 %v1879
        %v1916 = vunpack.c.l.b16 %v1880
        %v1917 = vunpack.c.l.b16 %v1881
        %v1918 = vunpack.c.l.b16 %v1882
        %v1919 = vunpack.c.l.b16 %v1883
        %v1920 = vunpack.c.l.b16 %v1884
        %v1921 = vunpack.c.l.b16 %v1885
        %v1922 = vunpack.c.l.b16 %v1886
        %v1923 = vunpack.c.l.b16 %v1887
        %v1924 = vunpack.c.l.b16 %v1888
        %v1925 = vunpack.c.l.b16 %v1889
        %v1926 = vunpack.c.l.b16 %v1890
        %v1927 = vunpack.c.l.b16 %v1891
        %v1928 = vpack.c.b16 %v1913, %v1912
        %v1929 = vpack.c.b16 %v1915, %v1914
        %v1930 = vpack.c.b16 %v1917, %v1916
        %v1931 = vpack.c.b16 %v1919, %v1918
        %v1932 = vpack.c.b16 %v1921, %v1920
        %v1933 = vpack.c.b16 %v1923, %v1922
        %v1934 = vpack.c.b16 %v1925, %v1924
        %v1935 = vpack.c.b16 %v1927, %v1926
        %1944 = vmatpush.bf16.msra.mxu0 %v1935
        %1945 = vmatpush.bf16.msra.mxu0 %v1934
        %1946 = vmatpush.bf16.msra.mxu0 %v1933
        %1947 = vmatpush.bf16.msra.mxu0 %v1932
        %1948 = vmatpush.bf16.msra.mxu0 %v1931
        %1949 = vmatpush.bf16.msra.mxu0 %v1930
        %1950 = vmatpush.bf16.msra.mxu0 %v1929
        %1951 = vmatpush.bf16.msra.mxu0 %v1928
        %1952 = vmatmul.bf16.gmra.mxu0 %v1844
        %v1953 = vpop.f32.mrf.mxu0
        %v1954 = vadd.f32 %v1894, %v1953
        %v1955 = vpop.f32.mrf.mxu0
        %v1956 = vadd.f32 %v1894, %v1955
        %1957 = vmatmul.bf16.gmra.mxu0 %v1845
        %v1958 = vpop.f32.mrf.mxu0
        %v1959 = vadd.f32 %v1894, %v1958
        %v1960 = vpop.f32.mrf.mxu0
        %v1961 = vadd.f32 %v1894, %v1960
        %1962 = vmatmul.bf16.gmra.mxu0 %v1846
        %v1963 = vpop.f32.mrf.mxu0
        %v1964 = vadd.f32 %v1894, %v1963
        %v1965 = vpop.f32.mrf.mxu0
        %v1966 = vadd.f32 %v1894, %v1965
        %1967 = vmatmul.bf16.gmra.mxu0 %v1847
        %v1968 = vpop.f32.mrf.mxu0
        %v1969 = vadd.f32 %v1894, %v1968
        %v1970 = vpop.f32.mrf.mxu0
        %v1971 = vadd.f32 %v1894, %v1970
        %1972 = vmatmul.bf16.gmra.mxu0 %v1848
        %v1973 = vpop.f32.mrf.mxu0
        %v1974 = vadd.f32 %v1894, %v1973
        %v1975 = vpop.f32.mrf.mxu0
        %v1976 = vadd.f32 %v1894, %v1975
        %1977 = vmatmul.bf16.gmra.mxu0 %v1849
        %v1978 = vpop.f32.mrf.mxu0
        %v1979 = vadd.f32 %v1894, %v1978
        %v1980 = vpop.f32.mrf.mxu0
        %v1981 = vadd.f32 %v1894, %v1980
        %1982 = vmatmul.bf16.gmra.mxu0 %v1850
        %v1983 = vpop.f32.mrf.mxu0
        %v1984 = vadd.f32 %v1894, %v1983
        %v1985 = vpop.f32.mrf.mxu0
        %v1986 = vadd.f32 %v1894, %v1985
        %1987 = vmatmul.bf16.gmra.mxu0 %v1851
        %v1988 = vpop.f32.mrf.mxu0
        %v1989 = vadd.f32 %v1894, %v1988
        %v1990 = vpop.f32.mrf.mxu0
        %v1991 = vadd.f32 %v1894, %v1990
        %1992 = vmatmul.bf16.gmra.mxu0 %v1852
        %v1993 = vpop.f32.mrf.mxu0
        %v1994 = vadd.f32 %v1894, %v1993
        %v1995 = vpop.f32.mrf.mxu0
        %v1996 = vadd.f32 %v1894, %v1995
        %1997 = vmatmul.bf16.gmra.mxu0 %v1853
        %v1998 = vpop.f32.mrf.mxu0
        %v1999 = vadd.f32 %v1894, %v1998
        %v2000 = vpop.f32.mrf.mxu0
        %v2001 = vadd.f32 %v1894, %v2000
        %2002 = vmatmul.bf16.gmra.mxu0 %v1854
        %v2003 = vpop.f32.mrf.mxu0
        %v2004 = vadd.f32 %v1894, %v2003
        %v2005 = vpop.f32.mrf.mxu0
        %v2006 = vadd.f32 %v1894, %v2005
        %2007 = vmatmul.bf16.gmra.mxu0 %v1855
        %v2008 = vpop.f32.mrf.mxu0
        %v2009 = vadd.f32 %v1894, %v2008
        %v2010 = vpop.f32.mrf.mxu0
        %v2011 = vadd.f32 %v1894, %v2010
        %2012 = vmatmul.bf16.gmra.mxu0 %v1856
        %v2013 = vpop.f32.mrf.mxu0
        %v2014 = vadd.f32 %v1894, %v2013
        %v2015 = vpop.f32.mrf.mxu0
        %v2016 = vadd.f32 %v1894, %v2015
        %2017 = vmatmul.bf16.gmra.mxu0 %v1857
        %v2018 = vpop.f32.mrf.mxu0
        %v2019 = vadd.f32 %v1894, %v2018
        %v2020 = vpop.f32.mrf.mxu0
        %v2021 = vadd.f32 %v1894, %v2020
        %2022 = vmatmul.bf16.gmra.mxu0 %v1858
        %v2023 = vpop.f32.mrf.mxu0
        %v2024 = vadd.f32 %v1894, %v2023
        %v2025 = vpop.f32.mrf.mxu0
        %v2026 = vadd.f32 %v1894, %v2025
        %2027 = vmatmul.bf16.gmra.mxu0 %v1859
        %v2028 = vpop.f32.mrf.mxu0
        %v2029 = vadd.f32 %v1894, %v2028
        %v2030 = vpop.f32.mrf.mxu0
        %v2031 = vadd.f32 %v1894, %v2030
        %2032 = vmatmul.bf16.gmra.mxu0 %v1860
        %v2033 = vpop.f32.mrf.mxu0
        %v2034 = vadd.f32 %v1894, %v2033
        %v2035 = vpop.f32.mrf.mxu0
        %v2036 = vadd.f32 %v1894, %v2035
        %2037 = vmatmul.bf16.gmra.mxu0 %v1861
        %v2038 = vpop.f32.mrf.mxu0
        %v2039 = vadd.f32 %v1894, %v2038
        %v2040 = vpop.f32.mrf.mxu0
        %v2041 = vadd.f32 %v1894, %v2040
        %2042 = vmatmul.bf16.gmra.mxu0 %v1862
        %v2043 = vpop.f32.mrf.mxu0
        %v2044 = vadd.f32 %v1894, %v2043
        %v2045 = vpop.f32.mrf.mxu0
        %v2046 = vadd.f32 %v1894, %v2045
        %2047 = vmatmul.bf16.gmra.mxu0 %v1863
        %v2048 = vpop.f32.mrf.mxu0
        %v2049 = vadd.f32 %v1894, %v2048
        %v2050 = vpop.f32.mrf.mxu0
        %v2051 = vadd.f32 %v1894, %v2050
        %2052 = vmatmul.bf16.gmra.mxu0 %v1864
        %v2053 = vpop.f32.mrf.mxu0
        %v2054 = vadd.f32 %v1894, %v2053
        %v2055 = vpop.f32.mrf.mxu0
        %v2056 = vadd.f32 %v1894, %v2055
        %2057 = vmatmul.bf16.gmra.mxu0 %v1865
        %v2058 = vpop.f32.mrf.mxu0
        %v2059 = vadd.f32 %v1894, %v2058
        %v2060 = vpop.f32.mrf.mxu0
        %v2061 = vadd.f32 %v1894, %v2060
        %2062 = vmatmul.bf16.gmra.mxu0 %v1866
        %v2063 = vpop.f32.mrf.mxu0
        %v2064 = vadd.f32 %v1894, %v2063
        %v2065 = vpop.f32.mrf.mxu0
        %v2066 = vadd.f32 %v1894, %v2065
        %2067 = vmatmul.bf16.gmra.mxu0 %v1867
        %v2068 = vpop.f32.mrf.mxu0
        %v2069 = vadd.f32 %v1894, %v2068
        %v2070 = vpop.f32.mrf.mxu0
        %v2071 = vadd.f32 %v1894, %v2070
        %2072 = vmatmul.bf16.gmra.mxu0 %v1868
        %v2073 = vpop.f32.mrf.mxu0
        %v2074 = vadd.f32 %v1894, %v2073
        %v2075 = vpop.f32.mrf.mxu0
        %v2076 = vadd.f32 %v1894, %v2075
        %2077 = vmatmul.bf16.gmra.mxu0 %v1869
        %v2078 = vpop.f32.mrf.mxu0
        %v2079 = vadd.f32 %v1894, %v2078
        %v2080 = vpop.f32.mrf.mxu0
        %v2081 = vadd.f32 %v1894, %v2080
        %2082 = vmatmul.bf16.gmra.mxu0 %v1870
        %v2083 = vpop.f32.mrf.mxu0
        %v2084 = vadd.f32 %v1894, %v2083
        %v2085 = vpop.f32.mrf.mxu0
        %v2086 = vadd.f32 %v1894, %v2085
        %2087 = vmatmul.bf16.gmra.mxu0 %v1871
        %v2088 = vpop.f32.mrf.mxu0
        %v2089 = vadd.f32 %v1894, %v2088
        %v2090 = vpop.f32.mrf.mxu0
        %v2091 = vadd.f32 %v1894, %v2090
        %2092 = vmatmul.bf16.gmra.mxu0 %v1872
        %v2093 = vpop.f32.mrf.mxu0
        %v2094 = vadd.f32 %v1894, %v2093
        %v2095 = vpop.f32.mrf.mxu0
        %v2096 = vadd.f32 %v1894, %v2095
        %2097 = vmatmul.bf16.gmra.mxu0 %v1873
        %v2098 = vpop.f32.mrf.mxu0
        %v2099 = vadd.f32 %v1894, %v2098
        %v2100 = vpop.f32.mrf.mxu0
        %v2101 = vadd.f32 %v1894, %v2100
        %2102 = vmatmul.bf16.gmra.mxu0 %v1874
        %v2103 = vpop.f32.mrf.mxu0
        %v2104 = vadd.f32 %v1894, %v2103
        %v2105 = vpop.f32.mrf.mxu0
        %v2106 = vadd.f32 %v1894, %v2105
        %2107 = vmatmul.bf16.gmra.mxu0 %v1875
        %v2108 = vpop.f32.mrf.mxu0
        %v2109 = vadd.f32 %v1894, %v2108
        %v2110 = vpop.f32.mrf.mxu0
        %v2111 = vadd.f32 %v1894, %v2110
        %2112 = vdwg.mxu0
        %v2113 = vmax.f32 %v1954, 0.0
        %v2114 = vmax.f32 %v1956, 0.0
        %v2115 = vmax.f32 %v1959, 0.0
        %v2116 = vmax.f32 %v1961, 0.0
        %v2117 = vmax.f32 %v1964, 0.0
        %v2118 = vmax.f32 %v1966, 0.0
        %v2119 = vmax.f32 %v1969, 0.0
        %v2120 = vmax.f32 %v1971, 0.0
        %v2121 = vmax.f32 %v1974, 0.0
        %v2122 = vmax.f32 %v1976, 0.0
        %v2123 = vmax.f32 %v1979, 0.0
        %v2124 = vmax.f32 %v1981, 0.0
        %v2125 = vmax.f32 %v1984, 0.0
        %v2126 = vmax.f32 %v1986, 0.0
        %v2127 = vmax.f32 %v1989, 0.0
        %v2128 = vmax.f32 %v1991, 0.0
        %v2129 = vmax.f32 %v1994, 0.0
        %v2130 = vmax.f32 %v1996, 0.0
        %v2131 = vmax.f32 %v1999, 0.0
        %v2132 = vmax.f32 %v2001, 0.0
        %v2133 = vmax.f32 %v2004, 0.0
        %v2134 = vmax.f32 %v2006, 0.0
        %v2135 = vmax.f32 %v2009, 0.0
        %v2136 = vmax.f32 %v2011, 0.0
        %v2137 = vmax.f32 %v2014, 0.0
        %v2138 = vmax.f32 %v2016, 0.0
        %v2139 = vmax.f32 %v2019, 0.0
        %v2140 = vmax.f32 %v2021, 0.0
        %v2141 = vmax.f32 %v2024, 0.0
        %v2142 = vmax.f32 %v2026, 0.0
        %v2143 = vmax.f32 %v2029, 0.0
        %v2144 = vmax.f32 %v2031, 0.0
        %v2145 = vmax.f32 %v2034, 0.0
        %v2146 = vmax.f32 %v2036, 0.0
        %v2147 = vmax.f32 %v2039, 0.0
        %v2148 = vmax.f32 %v2041, 0.0
        %v2149 = vmax.f32 %v2044, 0.0
        %v2150 = vmax.f32 %v2046, 0.0
        %v2151 = vmax.f32 %v2049, 0.0
        %v2152 = vmax.f32 %v2051, 0.0
        %v2153 = vmax.f32 %v2054, 0.0
        %v2154 = vmax.f32 %v2056, 0.0
        %v2155 = vmax.f32 %v2059, 0.0
        %v2156 = vmax.f32 %v2061, 0.0
        %v2157 = vmax.f32 %v2064, 0.0
        %v2158 = vmax.f32 %v2066, 0.0
        %v2159 = vmax.f32 %v2069, 0.0
        %v2160 = vmax.f32 %v2071, 0.0
        %v2161 = vmax.f32 %v2074, 0.0
        %v2162 = vmax.f32 %v2076, 0.0
        %v2163 = vmax.f32 %v2079, 0.0
        %v2164 = vmax.f32 %v2081, 0.0
        %v2165 = vmax.f32 %v2084, 0.0
        %v2166 = vmax.f32 %v2086, 0.0
        %v2167 = vmax.f32 %v2089, 0.0
        %v2168 = vmax.f32 %v2091, 0.0
        %v2169 = vmax.f32 %v2094, 0.0
        %v2170 = vmax.f32 %v2096, 0.0
        %v2171 = vmax.f32 %v2099, 0.0
        %v2172 = vmax.f32 %v2101, 0.0
        %v2173 = vmax.f32 %v2104, 0.0
        %v2174 = vmax.f32 %v2106, 0.0
        %v2175 = vmax.f32 %v2109, 0.0
        %v2176 = vmax.f32 %v2111, 0.0
        %v2177 = vpack.c.bf16 %v2114, %v2113
        %v2178 = vpack.c.bf16 %v2116, %v2115
        %v2179 = vpack.c.bf16 %v2118, %v2117
        %v2180 = vpack.c.bf16 %v2120, %v2119
        %v2181 = vpack.c.bf16 %v2122, %v2121
        %v2182 = vpack.c.bf16 %v2124, %v2123
        %v2183 = vpack.c.bf16 %v2126, %v2125
        %v2184 = vpack.c.bf16 %v2128, %v2127
        %v2185 = vpack.c.bf16 %v2130, %v2129
        %v2186 = vpack.c.bf16 %v2132, %v2131
        %v2187 = vpack.c.bf16 %v2134, %v2133
        %v2188 = vpack.c.bf16 %v2136, %v2135
        %v2189 = vpack.c.bf16 %v2138, %v2137
        %v2190 = vpack.c.bf16 %v2140, %v2139
        %v2191 = vpack.c.bf16 %v2142, %v2141
        %v2192 = vpack.c.bf16 %v2144, %v2143
        %v2193 = vpack.c.bf16 %v2146, %v2145
        %v2194 = vpack.c.bf16 %v2148, %v2147
        %v2195 = vpack.c.bf16 %v2150, %v2149
        %v2196 = vpack.c.bf16 %v2152, %v2151
        %v2197 = vpack.c.bf16 %v2154, %v2153
        %v2198 = vpack.c.bf16 %v2156, %v2155
        %v2199 = vpack.c.bf16 %v2158, %v2157
        %v2200 = vpack.c.bf16 %v2160, %v2159
        %v2201 = vpack.c.bf16 %v2162, %v2161
        %v2202 = vpack.c.bf16 %v2164, %v2163
        %v2203 = vpack.c.bf16 %v2166, %v2165
        %v2204 = vpack.c.bf16 %v2168, %v2167
        %v2205 = vpack.c.bf16 %v2170, %v2169
        %v2206 = vpack.c.bf16 %v2172, %v2171
        %v2207 = vpack.c.bf16 %v2174, %v2173
        %v2208 = vpack.c.bf16 %v2176, %v2175
        %v2209 = vld [vmem:[%s9] sm:$0xf]
        %v2210 = vld [vmem:[%s9 + $0x4] sm:$0xf]
        %v2211 = vld [vmem:[%s9 + $0x8] sm:$0xf]
        %v2212 = vld [vmem:[%s9 + $0xc] sm:$0xf]
        %v2213 = vld [vmem:[%s9 + $0x10] sm:$0xf]
        %v2214 = vld [vmem:[%s9 + $0x14] sm:$0xf]
        %v2215 = vld [vmem:[%s9 + $0x18] sm:$0xf]
        %v2216 = vld [vmem:[%s9 + $0x1c] sm:$0xf]
        %v2217 = vld [vmem:[%s9 + $0x20] sm:$0xf]
        %v2218 = vld [vmem:[%s9 + $0x24] sm:$0xf]
        %v2219 = vld [vmem:[%s9 + $0x28] sm:$0xf]
        %v2220 = vld [vmem:[%s9 + $0x2c] sm:$0xf]
        %v2221 = vld [vmem:[%s9 + $0x30] sm:$0xf]
        %v2222 = vld [vmem:[%s9 + $0x34] sm:$0xf]
        %v2223 = vld [vmem:[%s9 + $0x38] sm:$0xf]
        %v2224 = vld [vmem:[%s9 + $0x3c] sm:$0xf]
        %v2225 = vld [vmem:[%s10] sm:$0x1]
        %v2227 = vperm.slane %v2225, 0
        %v2245 = vunpack.c.l.b16 %v2209
        %v2246 = vunpack.c.l.b16 %v2210
        %v2247 = vunpack.c.l.b16 %v2211
        %v2248 = vunpack.c.l.b16 %v2212
        %v2249 = vunpack.c.l.b16 %v2213
        %v2250 = vunpack.c.l.b16 %v2214
        %v2251 = vunpack.c.l.b16 %v2215
        %v2252 = vunpack.c.l.b16 %v2216
        %v2253 = vunpack.c.l.b16 %v2217
        %v2254 = vunpack.c.l.b16 %v2218
        %v2255 = vunpack.c.l.b16 %v2219
        %v2256 = vunpack.c.l.b16 %v2220
        %v2257 = vunpack.c.l.b16 %v2221
        %v2258 = vunpack.c.l.b16 %v2222
        %v2259 = vunpack.c.l.b16 %v2223
        %v2260 = vunpack.c.l.b16 %v2224
        %v2261 = vpack.c.b16 %v2246, %v2245
        %v2262 = vpack.c.b16 %v2248, %v2247
        %v2263 = vpack.c.b16 %v2250, %v2249
        %v2264 = vpack.c.b16 %v2252, %v2251
        %v2265 = vpack.c.b16 %v2254, %v2253
        %v2266 = vpack.c.b16 %v2256, %v2255
        %v2267 = vpack.c.b16 %v2258, %v2257
        %v2268 = vpack.c.b16 %v2260, %v2259
        %2277 = vmatpush.bf16.msra.mxu0 %v2268
        %2278 = vmatpush.bf16.msra.mxu0 %v2267
        %2279 = vmatpush.bf16.msra.mxu0 %v2266
        %2280 = vmatpush.bf16.msra.mxu0 %v2265
        %2281 = vmatpush.bf16.msra.mxu0 %v2264
        %2282 = vmatpush.bf16.msra.mxu0 %v2263
        %2283 = vmatpush.bf16.msra.mxu0 %v2262
        %2284 = vmatpush.bf16.msra.mxu0 %v2261
        %2285 = vmatmul.bf16.gmra.mxu0 %v2177
        %v2286 = vpop.f32.mrf.mxu0
        %v2287 = vadd.f32 %v2227, %v2286
        %v2288 = vpop.f32.mrf.mxu0
        %v2289 = vadd.f32 %v2227, %v2288
        %2290 = vmatmul.bf16.gmra.mxu0 %v2178
        %v2291 = vpop.f32.mrf.mxu0
        %v2292 = vadd.f32 %v2227, %v2291
        %v2293 = vpop.f32.mrf.mxu0
        %v2294 = vadd.f32 %v2227, %v2293
        %2295 = vmatmul.bf16.gmra.mxu0 %v2179
        %v2296 = vpop.f32.mrf.mxu0
        %v2297 = vadd.f32 %v2227, %v2296
        %v2298 = vpop.f32.mrf.mxu0
        %v2299 = vadd.f32 %v2227, %v2298
        %2300 = vmatmul.bf16.gmra.mxu0 %v2180
        %v2301 = vpop.f32.mrf.mxu0
        %v2302 = vadd.f32 %v2227, %v2301
        %v2303 = vpop.f32.mrf.mxu0
        %v2304 = vadd.f32 %v2227, %v2303
        %2305 = vmatmul.bf16.gmra.mxu0 %v2181
        %v2306 = vpop.f32.mrf.mxu0
        %v2307 = vadd.f32 %v2227, %v2306
        %v2308 = vpop.f32.mrf.mxu0
        %v2309 = vadd.f32 %v2227, %v2308
        %2310 = vmatmul.bf16.gmra.mxu0 %v2182
        %v2311 = vpop.f32.mrf.mxu0
        %v2312 = vadd.f32 %v2227, %v2311
        %v2313 = vpop.f32.mrf.mxu0
        %v2314 = vadd.f32 %v2227, %v2313
        %2315 = vmatmul.bf16.gmra.mxu0 %v2183
        %v2316 = vpop.f32.mrf.mxu0
        %v2317 = vadd.f32 %v2227, %v2316
        %v2318 = vpop.f32.mrf.mxu0
        %v2319 = vadd.f32 %v2227, %v2318
        %2320 = vmatmul.bf16.gmra.mxu0 %v2184
        %v2321 = vpop.f32.mrf.mxu0
        %v2322 = vadd.f32 %v2227, %v2321
        %v2323 = vpop.f32.mrf.mxu0
        %v2324 = vadd.f32 %v2227, %v2323
        %2325 = vmatmul.bf16.gmra.mxu0 %v2185
        %v2326 = vpop.f32.mrf.mxu0
        %v2327 = vadd.f32 %v2227, %v2326
        %v2328 = vpop.f32.mrf.mxu0
        %v2329 = vadd.f32 %v2227, %v2328
        %2330 = vmatmul.bf16.gmra.mxu0 %v2186
        %v2331 = vpop.f32.mrf.mxu0
        %v2332 = vadd.f32 %v2227, %v2331
        %v2333 = vpop.f32.mrf.mxu0
        %v2334 = vadd.f32 %v2227, %v2333
        %2335 = vmatmul.bf16.gmra.mxu0 %v2187
        %v2336 = vpop.f32.mrf.mxu0
        %v2337 = vadd.f32 %v2227, %v2336
        %v2338 = vpop.f32.mrf.mxu0
        %v2339 = vadd.f32 %v2227, %v2338
        %2340 = vmatmul.bf16.gmra.mxu0 %v2188
        %v2341 = vpop.f32.mrf.mxu0
        %v2342 = vadd.f32 %v2227, %v2341
        %v2343 = vpop.f32.mrf.mxu0
        %v2344 = vadd.f32 %v2227, %v2343
        %2345 = vmatmul.bf16.gmra.mxu0 %v2189
        %v2346 = vpop.f32.mrf.mxu0
        %v2347 = vadd.f32 %v2227, %v2346
        %v2348 = vpop.f32.mrf.mxu0
        %v2349 = vadd.f32 %v2227, %v2348
        %2350 = vmatmul.bf16.gmra.mxu0 %v2190
        %v2351 = vpop.f32.mrf.mxu0
        %v2352 = vadd.f32 %v2227, %v2351
        %v2353 = vpop.f32.mrf.mxu0
        %v2354 = vadd.f32 %v2227, %v2353
        %2355 = vmatmul.bf16.gmra.mxu0 %v2191
        %v2356 = vpop.f32.mrf.mxu0
        %v2357 = vadd.f32 %v2227, %v2356
        %v2358 = vpop.f32.mrf.mxu0
        %v2359 = vadd.f32 %v2227, %v2358
        %2360 = vmatmul.bf16.gmra.mxu0 %v2192
        %v2361 = vpop.f32.mrf.mxu0
        %v2362 = vadd.f32 %v2227, %v2361
        %v2363 = vpop.f32.mrf.mxu0
        %v2364 = vadd.f32 %v2227, %v2363
        %2365 = vmatmul.bf16.gmra.mxu0 %v2193
        %v2366 = vpop.f32.mrf.mxu0
        %v2367 = vadd.f32 %v2227, %v2366
        %v2368 = vpop.f32.mrf.mxu0
        %v2369 = vadd.f32 %v2227, %v2368
        %2370 = vmatmul.bf16.gmra.mxu0 %v2194
        %v2371 = vpop.f32.mrf.mxu0
        %v2372 = vadd.f32 %v2227, %v2371
        %v2373 = vpop.f32.mrf.mxu0
        %v2374 = vadd.f32 %v2227, %v2373
        %2375 = vmatmul.bf16.gmra.mxu0 %v2195
        %v2376 = vpop.f32.mrf.mxu0
        %v2377 = vadd.f32 %v2227, %v2376
        %v2378 = vpop.f32.mrf.mxu0
        %v2379 = vadd.f32 %v2227, %v2378
        %2380 = vmatmul.bf16.gmra.mxu0 %v2196
        %v2381 = vpop.f32.mrf.mxu0
        %v2382 = vadd.f32 %v2227, %v2381
        %v2383 = vpop.f32.mrf.mxu0
        %v2384 = vadd.f32 %v2227, %v2383
        %2385 = vmatmul.bf16.gmra.mxu0 %v2197
        %v2386 = vpop.f32.mrf.mxu0
        %v2387 = vadd.f32 %v2227, %v2386
        %v2388 = vpop.f32.mrf.mxu0
        %v2389 = vadd.f32 %v2227, %v2388
        %2390 = vmatmul.bf16.gmra.mxu0 %v2198
        %v2391 = vpop.f32.mrf.mxu0
        %v2392 = vadd.f32 %v2227, %v2391
        %v2393 = vpop.f32.mrf.mxu0
        %v2394 = vadd.f32 %v2227, %v2393
        %2395 = vmatmul.bf16.gmra.mxu0 %v2199
        %v2396 = vpop.f32.mrf.mxu0
        %v2397 = vadd.f32 %v2227, %v2396
        %v2398 = vpop.f32.mrf.mxu0
        %v2399 = vadd.f32 %v2227, %v2398
        %2400 = vmatmul.bf16.gmra.mxu0 %v2200
        %v2401 = vpop.f32.mrf.mxu0
        %v2402 = vadd.f32 %v2227, %v2401
        %v2403 = vpop.f32.mrf.mxu0
        %v2404 = vadd.f32 %v2227, %v2403
        %2405 = vmatmul.bf16.gmra.mxu0 %v2201
        %v2406 = vpop.f32.mrf.mxu0
        %v2407 = vadd.f32 %v2227, %v2406
        %v2408 = vpop.f32.mrf.mxu0
        %v2409 = vadd.f32 %v2227, %v2408
        %2410 = vmatmul.bf16.gmra.mxu0 %v2202
        %v2411 = vpop.f32.mrf.mxu0
        %v2412 = vadd.f32 %v2227, %v2411
        %v2413 = vpop.f32.mrf.mxu0
        %v2414 = vadd.f32 %v2227, %v2413
        %2415 = vmatmul.bf16.gmra.mxu0 %v2203
        %v2416 = vpop.f32.mrf.mxu0
        %v2417 = vadd.f32 %v2227, %v2416
        %v2418 = vpop.f32.mrf.mxu0
        %v2419 = vadd.f32 %v2227, %v2418
        %2420 = vmatmul.bf16.gmra.mxu0 %v2204
        %v2421 = vpop.f32.mrf.mxu0
        %v2422 = vadd.f32 %v2227, %v2421
        %v2423 = vpop.f32.mrf.mxu0
        %v2424 = vadd.f32 %v2227, %v2423
        %2425 = vmatmul.bf16.gmra.mxu0 %v2205
        %v2426 = vpop.f32.mrf.mxu0
        %v2427 = vadd.f32 %v2227, %v2426
        %v2428 = vpop.f32.mrf.mxu0
        %v2429 = vadd.f32 %v2227, %v2428
        %2430 = vmatmul.bf16.gmra.mxu0 %v2206
        %v2431 = vpop.f32.mrf.mxu0
        %v2432 = vadd.f32 %v2227, %v2431
        %v2433 = vpop.f32.mrf.mxu0
        %v2434 = vadd.f32 %v2227, %v2433
        %2435 = vmatmul.bf16.gmra.mxu0 %v2207
        %v2436 = vpop.f32.mrf.mxu0
        %v2437 = vadd.f32 %v2227, %v2436
        %v2438 = vpop.f32.mrf.mxu0
        %v2439 = vadd.f32 %v2227, %v2438
        %2440 = vmatmul.bf16.gmra.mxu0 %v2208
        %v2441 = vpop.f32.mrf.mxu0
        %v2442 = vadd.f32 %v2227, %v2441
        %v2443 = vpop.f32.mrf.mxu0
        %v2444 = vadd.f32 %v2227, %v2443
        %2445 = vdwg.mxu0
        %v2446 = vmax.f32 %v2287, 0.0
        %v2447 = vmax.f32 %v2289, 0.0
        %v2448 = vmax.f32 %v2292, 0.0
        %v2449 = vmax.f32 %v2294, 0.0
        %v2450 = vmax.f32 %v2297, 0.0
        %v2451 = vmax.f32 %v2299, 0.0
        %v2452 = vmax.f32 %v2302, 0.0
        %v2453 = vmax.f32 %v2304, 0.0
        %v2454 = vmax.f32 %v2307, 0.0
        %v2455 = vmax.f32 %v2309, 0.0
        %v2456 = vmax.f32 %v2312, 0.0
        %v2457 = vmax.f32 %v2314, 0.0
        %v2458 = vmax.f32 %v2317, 0.0
        %v2459 = vmax.f32 %v2319, 0.0
        %v2460 = vmax.f32 %v2322, 0.0
        %v2461 = vmax.f32 %v2324, 0.0
        %v2462 = vmax.f32 %v2327, 0.0
        %v2463 = vmax.f32 %v2329, 0.0
        %v2464 = vmax.f32 %v2332, 0.0
        %v2465 = vmax.f32 %v2334, 0.0
        %v2466 = vmax.f32 %v2337, 0.0
        %v2467 = vmax.f32 %v2339, 0.0
        %v2468 = vmax.f32 %v2342, 0.0
        %v2469 = vmax.f32 %v2344, 0.0
        %v2470 = vmax.f32 %v2347, 0.0
        %v2471 = vmax.f32 %v2349, 0.0
        %v2472 = vmax.f32 %v2352, 0.0
        %v2473 = vmax.f32 %v2354, 0.0
        %v2474 = vmax.f32 %v2357, 0.0
        %v2475 = vmax.f32 %v2359, 0.0
        %v2476 = vmax.f32 %v2362, 0.0
        %v2477 = vmax.f32 %v2364, 0.0
        %v2478 = vmax.f32 %v2367, 0.0
        %v2479 = vmax.f32 %v2369, 0.0
        %v2480 = vmax.f32 %v2372, 0.0
        %v2481 = vmax.f32 %v2374, 0.0
        %v2482 = vmax.f32 %v2377, 0.0
        %v2483 = vmax.f32 %v2379, 0.0
        %v2484 = vmax.f32 %v2382, 0.0
        %v2485 = vmax.f32 %v2384, 0.0
        %v2486 = vmax.f32 %v2387, 0.0
        %v2487 = vmax.f32 %v2389, 0.0
        %v2488 = vmax.f32 %v2392, 0.0
        %v2489 = vmax.f32 %v2394, 0.0
        %v2490 = vmax.f32 %v2397, 0.0
        %v2491 = vmax.f32 %v2399, 0.0
        %v2492 = vmax.f32 %v2402, 0.0
        %v2493 = vmax.f32 %v2404, 0.0
        %v2494 = vmax.f32 %v2407, 0.0
        %v2495 = vmax.f32 %v2409, 0.0
        %v2496 = vmax.f32 %v2412, 0.0
        %v2497 = vmax.f32 %v2414, 0.0
        %v2498 = vmax.f32 %v2417, 0.0
        %v2499 = vmax.f32 %v2419, 0.0
        %v2500 = vmax.f32 %v2422, 0.0
        %v2501 = vmax.f32 %v2424, 0.0
        %v2502 = vmax.f32 %v2427, 0.0
        %v2503 = vmax.f32 %v2429, 0.0
        %v2504 = vmax.f32 %v2432, 0.0
        %v2505 = vmax.f32 %v2434, 0.0
        %v2506 = vmax.f32 %v2437, 0.0
        %v2507 = vmax.f32 %v2439, 0.0
        %v2508 = vmax.f32 %v2442, 0.0
        %v2509 = vmax.f32 %v2444, 0.0
        %v2510 = vpack.c.bf16 %v2447, %v2446
        %v2511 = vpack.c.bf16 %v2449, %v2448
        %v2512 = vpack.c.bf16 %v2451, %v2450
        %v2513 = vpack.c.bf16 %v2453, %v2452
        %v2514 = vpack.c.bf16 %v2455, %v2454
        %v2515 = vpack.c.bf16 %v2457, %v2456
        %v2516 = vpack.c.bf16 %v2459, %v2458
        %v2517 = vpack.c.bf16 %v2461, %v2460
        %v2518 = vpack.c.bf16 %v2463, %v2462
        %v2519 = vpack.c.bf16 %v2465, %v2464
        %v2520 = vpack.c.bf16 %v2467, %v2466
        %v2521 = vpack.c.bf16 %v2469, %v2468
        %v2522 = vpack.c.bf16 %v2471, %v2470
        %v2523 = vpack.c.bf16 %v2473, %v2472
        %v2524 = vpack.c.bf16 %v2475, %v2474
        %v2525 = vpack.c.bf16 %v2477, %v2476
        %v2526 = vpack.c.bf16 %v2479, %v2478
        %v2527 = vpack.c.bf16 %v2481, %v2480
        %v2528 = vpack.c.bf16 %v2483, %v2482
        %v2529 = vpack.c.bf16 %v2485, %v2484
        %v2530 = vpack.c.bf16 %v2487, %v2486
        %v2531 = vpack.c.bf16 %v2489, %v2488
        %v2532 = vpack.c.bf16 %v2491, %v2490
        %v2533 = vpack.c.bf16 %v2493, %v2492
        %v2534 = vpack.c.bf16 %v2495, %v2494
        %v2535 = vpack.c.bf16 %v2497, %v2496
        %v2536 = vpack.c.bf16 %v2499, %v2498
        %v2537 = vpack.c.bf16 %v2501, %v2500
        %v2538 = vpack.c.bf16 %v2503, %v2502
        %v2539 = vpack.c.bf16 %v2505, %v2504
        %v2540 = vpack.c.bf16 %v2507, %v2506
        %v2541 = vpack.c.bf16 %v2509, %v2508
        %v2542 = vld [vmem:[%s11] sm:$0xf]
        %v2543 = vld [vmem:[%s11 + $0x4] sm:$0xf]
        %v2544 = vld [vmem:[%s11 + $0x8] sm:$0xf]
        %v2545 = vld [vmem:[%s11 + $0xc] sm:$0xf]
        %v2546 = vld [vmem:[%s11 + $0x10] sm:$0xf]
        %v2547 = vld [vmem:[%s11 + $0x14] sm:$0xf]
        %v2548 = vld [vmem:[%s11 + $0x18] sm:$0xf]
        %v2549 = vld [vmem:[%s11 + $0x1c] sm:$0xf]
        %v2550 = vld [vmem:[%s11 + $0x20] sm:$0xf]
        %v2551 = vld [vmem:[%s11 + $0x24] sm:$0xf]
        %v2552 = vld [vmem:[%s11 + $0x28] sm:$0xf]
        %v2553 = vld [vmem:[%s11 + $0x2c] sm:$0xf]
        %v2554 = vld [vmem:[%s11 + $0x30] sm:$0xf]
        %v2555 = vld [vmem:[%s11 + $0x34] sm:$0xf]
        %v2556 = vld [vmem:[%s11 + $0x38] sm:$0xf]
        %v2557 = vld [vmem:[%s11 + $0x3c] sm:$0xf]
        %v2574 = vunpack.c.l.b16 %v2542
        %v2575 = vunpack.c.l.b16 %v2543
        %v2576 = vunpack.c.l.b16 %v2544
        %v2577 = vunpack.c.l.b16 %v2545
        %v2578 = vunpack.c.l.b16 %v2546
        %v2579 = vunpack.c.l.b16 %v2547
        %v2580 = vunpack.c.l.b16 %v2548
        %v2581 = vunpack.c.l.b16 %v2549
        %v2582 = vunpack.c.l.b16 %v2550
        %v2583 = vunpack.c.l.b16 %v2551
        %v2584 = vunpack.c.l.b16 %v2552
        %v2585 = vunpack.c.l.b16 %v2553
        %v2586 = vunpack.c.l.b16 %v2554
        %v2587 = vunpack.c.l.b16 %v2555
        %v2588 = vunpack.c.l.b16 %v2556
        %v2589 = vunpack.c.l.b16 %v2557
        %v2590 = vpack.c.b16 %v2575, %v2574
        %v2591 = vpack.c.b16 %v2577, %v2576
        %v2592 = vpack.c.b16 %v2579, %v2578
        %v2593 = vpack.c.b16 %v2581, %v2580
        %v2594 = vpack.c.b16 %v2583, %v2582
        %v2595 = vpack.c.b16 %v2585, %v2584
        %v2596 = vpack.c.b16 %v2587, %v2586
        %v2597 = vpack.c.b16 %v2589, %v2588
        %2606 = vmatpush.bf16.msra.mxu0 %v2597
        %2607 = vmatpush.bf16.msra.mxu0 %v2596
        %2608 = vmatpush.bf16.msra.mxu0 %v2595
        %2609 = vmatpush.bf16.msra.mxu0 %v2594
        %2610 = vmatpush.bf16.msra.mxu0 %v2593
        %2611 = vmatpush.bf16.msra.mxu0 %v2592
        %2612 = vmatpush.bf16.msra.mxu0 %v2591
        %2613 = vmatpush.bf16.msra.mxu0 %v2590
        %2614 = vmatmul.bf16.gmra.mxu0 %v2510
        %v2615 = vpop.f32.mrf.mxu0
        %v2616 = vadd.f32 %v951, %v2615
        %v2617 = vpop.f32.mrf.mxu0
        %v2618 = vadd.f32 %v953, %v2617
        %2619 = vmatmul.bf16.gmra.mxu0 %v2511
        %v2620 = vpop.f32.mrf.mxu0
        %v2621 = vadd.f32 %v956, %v2620
        %v2622 = vpop.f32.mrf.mxu0
        %v2623 = vadd.f32 %v958, %v2622
        %2624 = vmatmul.bf16.gmra.mxu0 %v2512
        %v2625 = vpop.f32.mrf.mxu0
        %v2626 = vadd.f32 %v961, %v2625
        %v2627 = vpop.f32.mrf.mxu0
        %v2628 = vadd.f32 %v963, %v2627
        %2629 = vmatmul.bf16.gmra.mxu0 %v2513
        %v2630 = vpop.f32.mrf.mxu0
        %v2631 = vadd.f32 %v966, %v2630
        %v2632 = vpop.f32.mrf.mxu0
        %v2633 = vadd.f32 %v968, %v2632
        %2634 = vmatmul.bf16.gmra.mxu0 %v2514
        %v2635 = vpop.f32.mrf.mxu0
        %v2636 = vadd.f32 %v971, %v2635
        %v2637 = vpop.f32.mrf.mxu0
        %v2638 = vadd.f32 %v973, %v2637
        %2639 = vmatmul.bf16.gmra.mxu0 %v2515
        %v2640 = vpop.f32.mrf.mxu0
        %v2641 = vadd.f32 %v976, %v2640
        %v2642 = vpop.f32.mrf.mxu0
        %v2643 = vadd.f32 %v978, %v2642
        %2644 = vmatmul.bf16.gmra.mxu0 %v2516
        %v2645 = vpop.f32.mrf.mxu0
        %v2646 = vadd.f32 %v981, %v2645
        %v2647 = vpop.f32.mrf.mxu0
        %v2648 = vadd.f32 %v983, %v2647
        %2649 = vmatmul.bf16.gmra.mxu0 %v2517
        %v2650 = vpop.f32.mrf.mxu0
        %v2651 = vadd.f32 %v986, %v2650
        %v2652 = vpop.f32.mrf.mxu0
        %v2653 = vadd.f32 %v988, %v2652
        %2654 = vmatmul.bf16.gmra.mxu0 %v2518
        %v2655 = vpop.f32.mrf.mxu0
        %v2656 = vadd.f32 %v991, %v2655
        %v2657 = vpop.f32.mrf.mxu0
        %v2658 = vadd.f32 %v993, %v2657
        %2659 = vmatmul.bf16.gmra.mxu0 %v2519
        %v2660 = vpop.f32.mrf.mxu0
        %v2661 = vadd.f32 %v996, %v2660
        %v2662 = vpop.f32.mrf.mxu0
        %v2663 = vadd.f32 %v998, %v2662
        %2664 = vmatmul.bf16.gmra.mxu0 %v2520
        %v2665 = vpop.f32.mrf.mxu0
        %v2666 = vadd.f32 %v1001, %v2665
        %v2667 = vpop.f32.mrf.mxu0
        %v2668 = vadd.f32 %v1003, %v2667
        %2669 = vmatmul.bf16.gmra.mxu0 %v2521
        %v2670 = vpop.f32.mrf.mxu0
        %v2671 = vadd.f32 %v1006, %v2670
        %v2672 = vpop.f32.mrf.mxu0
        %v2673 = vadd.f32 %v1008, %v2672
        %2674 = vmatmul.bf16.gmra.mxu0 %v2522
        %v2675 = vpop.f32.mrf.mxu0
        %v2676 = vadd.f32 %v1011, %v2675
        %v2677 = vpop.f32.mrf.mxu0
        %v2678 = vadd.f32 %v1013, %v2677
        %2679 = vmatmul.bf16.gmra.mxu0 %v2523
        %v2680 = vpop.f32.mrf.mxu0
        %v2681 = vadd.f32 %v1016, %v2680
        %v2682 = vpop.f32.mrf.mxu0
        %v2683 = vadd.f32 %v1018, %v2682
        %2684 = vmatmul.bf16.gmra.mxu0 %v2524
        %v2685 = vpop.f32.mrf.mxu0
        %v2686 = vadd.f32 %v1021, %v2685
        %v2687 = vpop.f32.mrf.mxu0
        %v2688 = vadd.f32 %v1023, %v2687
        %2689 = vmatmul.bf16.gmra.mxu0 %v2525
        %v2690 = vpop.f32.mrf.mxu0
        %v2691 = vadd.f32 %v1026, %v2690
        %v2692 = vpop.f32.mrf.mxu0
        %v2693 = vadd.f32 %v1028, %v2692
        %2694 = vmatmul.bf16.gmra.mxu0 %v2526
        %v2695 = vpop.f32.mrf.mxu0
        %v2696 = vadd.f32 %v1031, %v2695
        %v2697 = vpop.f32.mrf.mxu0
        %v2698 = vadd.f32 %v1033, %v2697
        %2699 = vmatmul.bf16.gmra.mxu0 %v2527
        %v2700 = vpop.f32.mrf.mxu0
        %v2701 = vadd.f32 %v1036, %v2700
        %v2702 = vpop.f32.mrf.mxu0
        %v2703 = vadd.f32 %v1038, %v2702
        %2704 = vmatmul.bf16.gmra.mxu0 %v2528
        %v2705 = vpop.f32.mrf.mxu0
        %v2706 = vadd.f32 %v1041, %v2705
        %v2707 = vpop.f32.mrf.mxu0
        %v2708 = vadd.f32 %v1043, %v2707
        %2709 = vmatmul.bf16.gmra.mxu0 %v2529
        %v2710 = vpop.f32.mrf.mxu0
        %v2711 = vadd.f32 %v1046, %v2710
        %v2712 = vpop.f32.mrf.mxu0
        %v2713 = vadd.f32 %v1048, %v2712
        %2714 = vmatmul.bf16.gmra.mxu0 %v2530
        %v2715 = vpop.f32.mrf.mxu0
        %v2716 = vadd.f32 %v1051, %v2715
        %v2717 = vpop.f32.mrf.mxu0
        %v2718 = vadd.f32 %v1053, %v2717
        %2719 = vmatmul.bf16.gmra.mxu0 %v2531
        %v2720 = vpop.f32.mrf.mxu0
        %v2721 = vadd.f32 %v1056, %v2720
        %v2722 = vpop.f32.mrf.mxu0
        %v2723 = vadd.f32 %v1058, %v2722
        %2724 = vmatmul.bf16.gmra.mxu0 %v2532
        %v2725 = vpop.f32.mrf.mxu0
        %v2726 = vadd.f32 %v1061, %v2725
        %v2727 = vpop.f32.mrf.mxu0
        %v2728 = vadd.f32 %v1063, %v2727
        %2729 = vmatmul.bf16.gmra.mxu0 %v2533
        %v2730 = vpop.f32.mrf.mxu0
        %v2731 = vadd.f32 %v1066, %v2730
        %v2732 = vpop.f32.mrf.mxu0
        %v2733 = vadd.f32 %v1068, %v2732
        %2734 = vmatmul.bf16.gmra.mxu0 %v2534
        %v2735 = vpop.f32.mrf.mxu0
        %v2736 = vadd.f32 %v1071, %v2735
        %v2737 = vpop.f32.mrf.mxu0
        %v2738 = vadd.f32 %v1073, %v2737
        %2739 = vmatmul.bf16.gmra.mxu0 %v2535
        %v2740 = vpop.f32.mrf.mxu0
        %v2741 = vadd.f32 %v1076, %v2740
        %v2742 = vpop.f32.mrf.mxu0
        %v2743 = vadd.f32 %v1078, %v2742
        %2744 = vmatmul.bf16.gmra.mxu0 %v2536
        %v2745 = vpop.f32.mrf.mxu0
        %v2746 = vadd.f32 %v1081, %v2745
        %v2747 = vpop.f32.mrf.mxu0
        %v2748 = vadd.f32 %v1083, %v2747
        %2749 = vmatmul.bf16.gmra.mxu0 %v2537
        %v2750 = vpop.f32.mrf.mxu0
        %v2751 = vadd.f32 %v1086, %v2750
        %v2752 = vpop.f32.mrf.mxu0
        %v2753 = vadd.f32 %v1088, %v2752
        %2754 = vmatmul.bf16.gmra.mxu0 %v2538
        %v2755 = vpop.f32.mrf.mxu0
        %v2756 = vadd.f32 %v1091, %v2755
        %v2757 = vpop.f32.mrf.mxu0
        %v2758 = vadd.f32 %v1093, %v2757
        %2759 = vmatmul.bf16.gmra.mxu0 %v2539
        %v2760 = vpop.f32.mrf.mxu0
        %v2761 = vadd.f32 %v1096, %v2760
        %v2762 = vpop.f32.mrf.mxu0
        %v2763 = vadd.f32 %v1098, %v2762
        %2764 = vmatmul.bf16.gmra.mxu0 %v2540
        %v2765 = vpop.f32.mrf.mxu0
        %v2766 = vadd.f32 %v1101, %v2765
        %v2767 = vpop.f32.mrf.mxu0
        %v2768 = vadd.f32 %v1103, %v2767
        %2769 = vmatmul.bf16.gmra.mxu0 %v2541
        %v2770 = vpop.f32.mrf.mxu0
        %v2771 = vadd.f32 %v1106, %v2770
        %v2772 = vpop.f32.mrf.mxu0
        %v2773 = vadd.f32 %v1108, %v2772
        %2774 = vdwg.mxu0
        %v2775 = vld [vmem:[%s12] sm:$0x1]
        %v2777 = vperm.slane %v2775, 0
        %v2779 = vadd.f32 %v2616, %v2777
        %v2780 = vadd.f32 %v2618, %v2777
        %v2781 = vadd.f32 %v2621, %v2777
        %v2782 = vadd.f32 %v2623, %v2777
        %v2783 = vadd.f32 %v2626, %v2777
        %v2784 = vadd.f32 %v2628, %v2777
        %v2785 = vadd.f32 %v2631, %v2777
        %v2786 = vadd.f32 %v2633, %v2777
        %v2787 = vadd.f32 %v2636, %v2777
        %v2788 = vadd.f32 %v2638, %v2777
        %v2789 = vadd.f32 %v2641, %v2777
        %v2790 = vadd.f32 %v2643, %v2777
        %v2791 = vadd.f32 %v2646, %v2777
        %v2792 = vadd.f32 %v2648, %v2777
        %v2793 = vadd.f32 %v2651, %v2777
        %v2794 = vadd.f32 %v2653, %v2777
        %v2795 = vadd.f32 %v2656, %v2777
        %v2796 = vadd.f32 %v2658, %v2777
        %v2797 = vadd.f32 %v2661, %v2777
        %v2798 = vadd.f32 %v2663, %v2777
        %v2799 = vadd.f32 %v2666, %v2777
        %v2800 = vadd.f32 %v2668, %v2777
        %v2801 = vadd.f32 %v2671, %v2777
        %v2802 = vadd.f32 %v2673, %v2777
        %v2803 = vadd.f32 %v2676, %v2777
        %v2804 = vadd.f32 %v2678, %v2777
        %v2805 = vadd.f32 %v2681, %v2777
        %v2806 = vadd.f32 %v2683, %v2777
        %v2807 = vadd.f32 %v2686, %v2777
        %v2808 = vadd.f32 %v2688, %v2777
        %v2809 = vadd.f32 %v2691, %v2777
        %v2810 = vadd.f32 %v2693, %v2777
        %v2811 = vadd.f32 %v2696, %v2777
        %v2812 = vadd.f32 %v2698, %v2777
        %v2813 = vadd.f32 %v2701, %v2777
        %v2814 = vadd.f32 %v2703, %v2777
        %v2815 = vadd.f32 %v2706, %v2777
        %v2816 = vadd.f32 %v2708, %v2777
        %v2817 = vadd.f32 %v2711, %v2777
        %v2818 = vadd.f32 %v2713, %v2777
        %v2819 = vadd.f32 %v2716, %v2777
        %v2820 = vadd.f32 %v2718, %v2777
        %v2821 = vadd.f32 %v2721, %v2777
        %v2822 = vadd.f32 %v2723, %v2777
        %v2823 = vadd.f32 %v2726, %v2777
        %v2824 = vadd.f32 %v2728, %v2777
        %v2825 = vadd.f32 %v2731, %v2777
        %v2826 = vadd.f32 %v2733, %v2777
        %v2827 = vadd.f32 %v2736, %v2777
        %v2828 = vadd.f32 %v2738, %v2777
        %v2829 = vadd.f32 %v2741, %v2777
        %v2830 = vadd.f32 %v2743, %v2777
        %v2831 = vadd.f32 %v2746, %v2777
        %v2832 = vadd.f32 %v2748, %v2777
        %v2833 = vadd.f32 %v2751, %v2777
        %v2834 = vadd.f32 %v2753, %v2777
        %v2835 = vadd.f32 %v2756, %v2777
        %v2836 = vadd.f32 %v2758, %v2777
        %v2837 = vadd.f32 %v2761, %v2777
        %v2838 = vadd.f32 %v2763, %v2777
        %v2839 = vadd.f32 %v2766, %v2777
        %v2840 = vadd.f32 %v2768, %v2777
        %v2841 = vadd.f32 %v2771, %v2777
        %v2842 = vadd.f32 %v2773, %v2777
        %v2843 = vmax.f32 %v2779, 0.0
        %v2844 = vmax.f32 %v2780, 0.0
        %v2845 = vmax.f32 %v2781, 0.0
        %v2846 = vmax.f32 %v2782, 0.0
        %v2847 = vmax.f32 %v2783, 0.0
        %v2848 = vmax.f32 %v2784, 0.0
        %v2849 = vmax.f32 %v2785, 0.0
        %v2850 = vmax.f32 %v2786, 0.0
        %v2851 = vmax.f32 %v2787, 0.0
        %v2852 = vmax.f32 %v2788, 0.0
        %v2853 = vmax.f32 %v2789, 0.0
        %v2854 = vmax.f32 %v2790, 0.0
        %v2855 = vmax.f32 %v2791, 0.0
        %v2856 = vmax.f32 %v2792, 0.0
        %v2857 = vmax.f32 %v2793, 0.0
        %v2858 = vmax.f32 %v2794, 0.0
        %v2859 = vmax.f32 %v2795, 0.0
        %v2860 = vmax.f32 %v2796, 0.0
        %v2861 = vmax.f32 %v2797, 0.0
        %v2862 = vmax.f32 %v2798, 0.0
        %v2863 = vmax.f32 %v2799, 0.0
        %v2864 = vmax.f32 %v2800, 0.0
        %v2865 = vmax.f32 %v2801, 0.0
        %v2866 = vmax.f32 %v2802, 0.0
        %v2867 = vmax.f32 %v2803, 0.0
        %v2868 = vmax.f32 %v2804, 0.0
        %v2869 = vmax.f32 %v2805, 0.0
        %v2870 = vmax.f32 %v2806, 0.0
        %v2871 = vmax.f32 %v2807, 0.0
        %v2872 = vmax.f32 %v2808, 0.0
        %v2873 = vmax.f32 %v2809, 0.0
        %v2874 = vmax.f32 %v2810, 0.0
        %v2875 = vmax.f32 %v2811, 0.0
        %v2876 = vmax.f32 %v2812, 0.0
        %v2877 = vmax.f32 %v2813, 0.0
        %v2878 = vmax.f32 %v2814, 0.0
        %v2879 = vmax.f32 %v2815, 0.0
        %v2880 = vmax.f32 %v2816, 0.0
        %v2881 = vmax.f32 %v2817, 0.0
        %v2882 = vmax.f32 %v2818, 0.0
        %v2883 = vmax.f32 %v2819, 0.0
        %v2884 = vmax.f32 %v2820, 0.0
        %v2885 = vmax.f32 %v2821, 0.0
        %v2886 = vmax.f32 %v2822, 0.0
        %v2887 = vmax.f32 %v2823, 0.0
        %v2888 = vmax.f32 %v2824, 0.0
        %v2889 = vmax.f32 %v2825, 0.0
        %v2890 = vmax.f32 %v2826, 0.0
        %v2891 = vmax.f32 %v2827, 0.0
        %v2892 = vmax.f32 %v2828, 0.0
        %v2893 = vmax.f32 %v2829, 0.0
        %v2894 = vmax.f32 %v2830, 0.0
        %v2895 = vmax.f32 %v2831, 0.0
        %v2896 = vmax.f32 %v2832, 0.0
        %v2897 = vmax.f32 %v2833, 0.0
        %v2898 = vmax.f32 %v2834, 0.0
        %v2899 = vmax.f32 %v2835, 0.0
        %v2900 = vmax.f32 %v2836, 0.0
        %v2901 = vmax.f32 %v2837, 0.0
        %v2902 = vmax.f32 %v2838, 0.0
        %v2903 = vmax.f32 %v2839, 0.0
        %v2904 = vmax.f32 %v2840, 0.0
        %v2905 = vmax.f32 %v2841, 0.0
        %v2906 = vmax.f32 %v2842, 0.0
        %v2907 = vpack.c.bf16 %v2844, %v2843
        %v2908 = vpack.c.bf16 %v2846, %v2845
        %v2909 = vpack.c.bf16 %v2848, %v2847
        %v2910 = vpack.c.bf16 %v2850, %v2849
        %v2911 = vpack.c.bf16 %v2852, %v2851
        %v2912 = vpack.c.bf16 %v2854, %v2853
        %v2913 = vpack.c.bf16 %v2856, %v2855
        %v2914 = vpack.c.bf16 %v2858, %v2857
        %v2915 = vpack.c.bf16 %v2860, %v2859
        %v2916 = vpack.c.bf16 %v2862, %v2861
        %v2917 = vpack.c.bf16 %v2864, %v2863
        %v2918 = vpack.c.bf16 %v2866, %v2865
        %v2919 = vpack.c.bf16 %v2868, %v2867
        %v2920 = vpack.c.bf16 %v2870, %v2869
        %v2921 = vpack.c.bf16 %v2872, %v2871
        %v2922 = vpack.c.bf16 %v2874, %v2873
        %v2923 = vpack.c.bf16 %v2876, %v2875
        %v2924 = vpack.c.bf16 %v2878, %v2877
        %v2925 = vpack.c.bf16 %v2880, %v2879
        %v2926 = vpack.c.bf16 %v2882, %v2881
        %v2927 = vpack.c.bf16 %v2884, %v2883
        %v2928 = vpack.c.bf16 %v2886, %v2885
        %v2929 = vpack.c.bf16 %v2888, %v2887
        %v2930 = vpack.c.bf16 %v2890, %v2889
        %v2931 = vpack.c.bf16 %v2892, %v2891
        %v2932 = vpack.c.bf16 %v2894, %v2893
        %v2933 = vpack.c.bf16 %v2896, %v2895
        %v2934 = vpack.c.bf16 %v2898, %v2897
        %v2935 = vpack.c.bf16 %v2900, %v2899
        %v2936 = vpack.c.bf16 %v2902, %v2901
        %v2937 = vpack.c.bf16 %v2904, %v2903
        %v2938 = vpack.c.bf16 %v2906, %v2905
        %v2939 = vld [vmem:[%s13] sm:$0x1]
        %v2940 = vld [vmem:[#allocation2] sm:$0x1]
        %2942 = vset.pattern.permute.xlu0 0
        %2943 = vperm.xlu0 %2942, %v2940
        %v2944 = vpop.permute.xlu0 %2943
        %v2946 = vperm.slane %v2944, 0
        %vm2947 = vcmask 523264
        %v2949 = vsel %vm2947, %v2939, 0
        %v2952 = vsel %vm2947, %v2907, 0
        %v2955 = vsel %vm2947, %v2908, 0
        %v2958 = vsel %vm2947, %v2909, 0
        %v2961 = vsel %vm2947, %v2910, 0
        %v2964 = vsel %vm2947, %v2911, 0
        %v2967 = vsel %vm2947, %v2912, 0
        %v2970 = vsel %vm2947, %v2913, 0
        %v2973 = vsel %vm2947, %v2914, 0
        %v2976 = vsel %vm2947, %v2915, 0
        %v2979 = vsel %vm2947, %v2916, 0
        %v2982 = vsel %vm2947, %v2917, 0
        %v2985 = vsel %vm2947, %v2918, 0
        %v2988 = vsel %vm2947, %v2919, 0
        %v2991 = vsel %vm2947, %v2920, 0
        %v2994 = vsel %vm2947, %v2921, 0
        %v2997 = vsel %vm2947, %v2922, 0
        %v3000 = vsel %vm2947, %v2923, 0
        %v3003 = vsel %vm2947, %v2924, 0
        %v3006 = vsel %vm2947, %v2925, 0
        %v3009 = vsel %vm2947, %v2926, 0
        %v3012 = vsel %vm2947, %v2927, 0
        %v3015 = vsel %vm2947, %v2928, 0
        %v3018 = vsel %vm2947, %v2929, 0
        %v3021 = vsel %vm2947, %v2930, 0
        %v3024 = vsel %vm2947, %v2931, 0
        %v3027 = vsel %vm2947, %v2932, 0
        %v3030 = vsel %vm2947, %v2933, 0
        %v3033 = vsel %vm2947, %v2934, 0
        %v3036 = vsel %vm2947, %v2935, 0
        %v3039 = vsel %vm2947, %v2936, 0
        %v3042 = vsel %vm2947, %v2937, 0
        %v3045 = vsel %vm2947, %v2938, 0
        %3047 = vmatpush.bf16.xpose.msra.mxu0 %v2973
        %3048 = vmatpush.bf16.xpose.msra.mxu0 %v2970
        %3049 = vmatpush.bf16.xpose.msra.mxu0 %v2967
        %3050 = vmatpush.bf16.xpose.msra.mxu0 %v2964
        %3051 = vmatpush.bf16.xpose.msra.mxu0 %v2961
        %3052 = vmatpush.bf16.xpose.msra.mxu0 %v2958
        %3053 = vmatpush.bf16.xpose.msra.mxu0 %v2955
        %3054 = vmatpush.bf16.xpose.msra.mxu0 %v2952
        %3055 = vmatmul.bf16.gmra.mxu0 %v2949
        %v3056 = vpop.f32.mrf.mxu0
        %v3057 = vadd.f32 %v2946, %v3056
        %v3058 = vpop.f32.mrf.mxu0
        %3059 = vdwg.mxu0
        %3060 = vmatpush.bf16.xpose.msra.mxu0 %v2997
        %3061 = vmatpush.bf16.xpose.msra.mxu0 %v2994
        %3062 = vmatpush.bf16.xpose.msra.mxu0 %v2991
        %3063 = vmatpush.bf16.xpose.msra.mxu0 %v2988
        %3064 = vmatpush.bf16.xpose.msra.mxu0 %v2985
        %3065 = vmatpush.bf16.xpose.msra.mxu0 %v2982
        %3066 = vmatpush.bf16.xpose.msra.mxu0 %v2979
        %3067 = vmatpush.bf16.xpose.msra.mxu0 %v2976
        %3068 = vmatmul.bf16.gmra.mxu0 %v2949
        %v3069 = vpop.f32.mrf.mxu0
        %v3070 = vadd.f32 %v2946, %v3069
        %v3071 = vpop.f32.mrf.mxu0
        %3072 = vdwg.mxu0
        %3073 = vmatpush.bf16.xpose.msra.mxu0 %v3021
        %3074 = vmatpush.bf16.xpose.msra.mxu0 %v3018
        %3075 = vmatpush.bf16.xpose.msra.mxu0 %v3015
        %3076 = vmatpush.bf16.xpose.msra.mxu0 %v3012
        %3077 = vmatpush.bf16.xpose.msra.mxu0 %v3009
        %3078 = vmatpush.bf16.xpose.msra.mxu0 %v3006
        %3079 = vmatpush.bf16.xpose.msra.mxu0 %v3003
        %3080 = vmatpush.bf16.xpose.msra.mxu0 %v3000
        %3081 = vmatmul.bf16.gmra.mxu0 %v2949
        %v3082 = vpop.f32.mrf.mxu0
        %v3083 = vadd.f32 %v2946, %v3082
        %v3084 = vpop.f32.mrf.mxu0
        %3085 = vdwg.mxu0
        %3086 = vmatpush.bf16.xpose.msra.mxu0 %v3045
        %3087 = vmatpush.bf16.xpose.msra.mxu0 %v3042
        %3088 = vmatpush.bf16.xpose.msra.mxu0 %v3039
        %3089 = vmatpush.bf16.xpose.msra.mxu0 %v3036
        %3090 = vmatpush.bf16.xpose.msra.mxu0 %v3033
        %3091 = vmatpush.bf16.xpose.msra.mxu0 %v3030
        %3092 = vmatpush.bf16.xpose.msra.mxu0 %v3027
        %3093 = vmatpush.bf16.xpose.msra.mxu0 %v3024
        %3094 = vmatmul.bf16.gmra.mxu0 %v2949
        %v3095 = vpop.f32.mrf.mxu0
        %v3096 = vadd.f32 %v2946, %v3095
        %v3097 = vpop.f32.mrf.mxu0
        %3098 = vdwg.mxu0
        %v3099 = vxor.u32 %v3057, 2147483648
        %v3100 = vxor.u32 %v3070, 2147483648
        %v3101 = vxor.u32 %v3083, 2147483648
        %v3102 = vxor.u32 %v3096, 2147483648
        %v3103 = vmul.f32 %v3099, 1.442695
        %v3104 = vpow.pop %v3103
        %v3105 = vmul.f32 %v3100, 1.442695
        %v3106 = vpow.pop %v3105
        %v3107 = vmul.f32 %v3101, 1.442695
        %v3108 = vpow.pop %v3107
        %v3109 = vmul.f32 %v3102, 1.442695
        %v3110 = vpow.pop %v3109
        %v3111 = vadd.f32 %v3104, 1.0
        %v3112 = vadd.f32 %v3106, 1.0
        %v3113 = vadd.f32 %v3108, 1.0
        %v3114 = vadd.f32 %v3110, 1.0
        %v3115 = vrcp.pop %v3111
        %v3116 = vmul.f32 %v3111, %v3115
        %v3117 = vsub.f32 1.0, %v3116
        %v3118 = vmul.f32 %v3115, %v3117
        %v3119 = vadd.f32 %v3115, %v3118
        %vm3120 = vweird.f32 %v3111
        %vm3121 = vweird.f32 %v3115
        %vm3122 = vmor %vm3120, %vm3121
        %v3123 = vsel %vm3122, %v3115, %v3119
        %v3124 = vand.u32 2147483647, %v3111
        %vm3125 = vcmp.eq.f32.partialorder %v3124, 8.507059e+37
        %v3126 = vand.u32 %v3111, 2147483648
        %v3127 = vor.u32 1.1754944e-38, %v3126
        %v3128 = vsel %vm3125, %v3127, %v3123
        %v3129 = vmul.f32 1.0, %v3128
        %v3130 = vrcp.pop %v3112
        %v3131 = vmul.f32 %v3112, %v3130
        %v3132 = vsub.f32 1.0, %v3131
        %v3133 = vmul.f32 %v3130, %v3132
        %v3134 = vadd.f32 %v3130, %v3133
        %vm3135 = vweird.f32 %v3112
        %vm3136 = vweird.f32 %v3130
        %vm3137 = vmor %vm3135, %vm3136
        %v3138 = vsel %vm3137, %v3130, %v3134
        %v3139 = vand.u32 2147483647, %v3112
        %vm3140 = vcmp.eq.f32.partialorder %v3139, 8.507059e+37
        %v3141 = vand.u32 %v3112, 2147483648
        %v3142 = vor.u32 1.1754944e-38, %v3141
        %v3143 = vsel %vm3140, %v3142, %v3138
        %v3144 = vmul.f32 1.0, %v3143
        %v3145 = vrcp.pop %v3113
        %v3146 = vmul.f32 %v3113, %v3145
        %v3147 = vsub.f32 1.0, %v3146
        %v3148 = vmul.f32 %v3145, %v3147
        %v3149 = vadd.f32 %v3145, %v3148
        %vm3150 = vweird.f32 %v3113
        %vm3151 = vweird.f32 %v3145
        %vm3152 = vmor %vm3150, %vm3151
        %v3153 = vsel %vm3152, %v3145, %v3149
        %v3154 = vand.u32 2147483647, %v3113
        %vm3155 = vcmp.eq.f32.partialorder %v3154, 8.507059e+37
        %v3156 = vand.u32 %v3113, 2147483648
        %v3157 = vor.u32 1.1754944e-38, %v3156
        %v3158 = vsel %vm3155, %v3157, %v3153
        %v3159 = vmul.f32 1.0, %v3158
        %v3160 = vrcp.pop %v3114
        %v3161 = vmul.f32 %v3114, %v3160
        %v3162 = vsub.f32 1.0, %v3161
        %v3163 = vmul.f32 %v3160, %v3162
        %v3164 = vadd.f32 %v3160, %v3163
        %vm3165 = vweird.f32 %v3114
        %vm3166 = vweird.f32 %v3160
        %vm3167 = vmor %vm3165, %vm3166
        %v3168 = vsel %vm3167, %v3160, %v3164
        %v3169 = vand.u32 2147483647, %v3114
        %vm3170 = vcmp.eq.f32.partialorder %v3169, 8.507059e+37
        %v3171 = vand.u32 %v3114, 2147483648
        %v3172 = vor.u32 1.1754944e-38, %v3171
        %v3173 = vsel %vm3170, %v3172, %v3168
        %v3174 = vmul.f32 1.0, %v3173
        %v3179 = vrot.slane %v3144, 7
        %v3180 = vrot.slane %v3159, 6
        %v3181 = vrot.slane %v3174, 5
        %vm3182 = vcmask 1040384
        %v3183 = vsel %vm3182, %v3129, %v3179
        %vm3184 = vcmask 1042434
        %v3185 = vsel %vm3184, %v3180, %v3181
        %vm3186 = vcmask 1041408
        %v3187 = vsel %vm3186, %v3183, %v3185
        %v3189 = vlaneseq
        %vm3190 = vcmp.ge.s32.totalorder %v3189, 0
        %vm3191 = vcmp.lt.s32.totalorder %v3189, 512
        %vm3192 = vmand %vm3190, %vm3191
        %3193 = vst.msk [vmem:[%s490] sm:$0xf] %vm3192, %v3187
        %s3194 = sand.u32 %s359, 1
        %s3195 = scalar_lea.sflag [#allocation4], %s3194
        %s3196 = sand.u32 %s359, 1
        %s3197 = smul.addr %s3196, 4
        %s3198 = scalar_lea.vmem [#allocation3], %s3197
        // Predicated region
        $region81: #{tpu_custom_call.1} parent=79 // pred_check
          %p3199 = pneg %p369
        $region82: #{tpu_custom_call.1} parent=79 // pred_check_branch
          %3201 = sbr.rel (%p3199) target = $region84
        $region83: #{tpu_custom_call.1} parent=79 // pred_region
          %s3202 = smul.u32 4, %s31
          %3204 = vsyncadd %s3195, 0
          %s3205 = scalar_lea.hbm %s15, %s3202
          %s3207 = sshll.u32 %s3198, 4
          %s3208 = int_to_ptr.vmem [resolvable:$true] %s3207
          %s3209 = sshll.u32 %s3205, 4
          %s3210 = int_to_ptr.hbm [resolvable:$true] %s3209
          %3212 = dma.vmem_to_hbm [thread:$0]  %s3208, 64, %s3210, %s3195
        $region84: #{tpu_custom_call.1} parent=79 // pred_fallthru
          _
      $region80: #{tpu_custom_call.1} parent=5 // pred_fallthru
        _
      %p3213 = scmp.le.s32.totalorder 2, %s26
      // Predicated region
      $region85: #{tpu_custom_call.1} parent=5 // pred_check
        %p3214 = pneg %p3213
      $region86: #{tpu_custom_call.1} parent=5 // pred_check_branch
        %3216 = sbr.rel (%p3214) target = $region88
      $region87: #{tpu_custom_call.1} parent=5 // pred_region
        %s3217 = ssub.s32 %s26, 2
        // Predicated region
        $region89: #{tpu_custom_call.1} parent=87 // pred_check
          %p3218 = pneg %p375
        $region90: #{tpu_custom_call.1} parent=87 // pred_check_branch
          %3220 = sbr.rel (%p3218) target = $region92
        $region91: #{tpu_custom_call.1} parent=87 // pred_region
          %s3221 = sand.u32 %s360, 1
          %s3222 = scalar_lea.sflag [#allocation4], %s3221
          %s3223 = sand.u32 %s360, 1
          %s3224 = smul.addr %s3223, 4
          %s3225 = scalar_lea.vmem [#allocation3], %s3224
          %3227 = dma.done %s3222, 64
        $region92: #{tpu_custom_call.1} parent=87 // pred_fallthru
          _
      $region88: #{tpu_custom_call.1} parent=5 // pred_fallthru
        _
    $region6: #{tpu_custom_call.1} parent=1 // loop_footer
      %s30 = sadd.s32 1, %s26
    $region7: #{tpu_custom_call.1} parent=1 // loop_footer_branch
      %25 = sbr.rel target = $region3
    $region8: #{tpu_custom_call.1} parent=1 // loop_exit
      _
    %3228 = vsyncpa [#allocation4], 1
    %s3229 = scalar_lea.sflag [#allocation4], 1
    %3230 = vsyncpa %s3229, 1

</llo_original>
